<compile_context>
chip_gen: v5e
topology: v5e:2x2
jax: 0.10.0
libtpu: 0.0.40
codegen_flags: <defaults>
</compile_context>

<pallas_src>
import functools

import jax
import jax.numpy as jnp
from jax.experimental import pallas as pl
from jax.experimental.pallas import tpu as pltpu

_LANE = 128
_VMEM_LIMIT = 48 * 1024 * 1024      # generation-safe scoped budget (v7x has 64 MiB)
_M_TILE = 1024                      # max rows per grid step
_M_SINGLE = 256                     # at/below this: one block over rows


# ----------------------------------------------------------------------------
# Pallas kernels
# ----------------------------------------------------------------------------
def _matmul_bias_kernel(x_ref, w_ref, b_ref, o_ref, *, relu):
    """o = relu?(x @ w + b); bf16 MXU inputs, f32 accumulation."""
    acc = jnp.dot(x_ref[...], w_ref[...], preferred_element_type=jnp.float32)
    acc = acc + b_ref[...]
    if relu:
        acc = jnp.maximum(acc, 0.0)
    o_ref[...] = acc.astype(o_ref.dtype)


def _dueling_head_kernel(x_ref, w1_ref, b1_ref, w2_ref, b2_ref, q_ref, *,
                         num_actions):
    """Fused dueling head.

    w1 = [val1 | adv1] rows pre-permuted to the NHWC/padded flatten  (F, 1024)
    w2 = block-diag([val2, adv2])  (1024, 128): lane 0 = V, lanes 1..A = adv.
    Output holds V + (A - mean_a A) in lanes 1..A (other lanes junk).
    """
    h = jnp.dot(x_ref[...], w1_ref[...], preferred_element_type=jnp.float32)
    h = jnp.maximum(h + b1_ref[...], 0.0)
    h2 = jnp.dot(h.astype(w2_ref.dtype), w2_ref[...],
                 preferred_element_type=jnp.float32)
    h2 = h2 + b2_ref[...]
    v = h2[:, 0:1]
    lane = jax.lax.broadcasted_iota(jnp.int32, h2.shape, dimension=1)
    adv_mask = jnp.logical_and(lane >= 1, lane <= num_actions)
    mean_adv = jnp.sum(jnp.where(adv_mask, h2, 0.0), axis=1,
                       keepdims=True) * (1.0 / num_actions)
    q_ref[...] = v + (h2 - mean_adv)


# ----------------------------------------------------------------------------
# Tiling / padding helpers
# ----------------------------------------------------------------------------
def _round_up(x, m):
    return (x + m - 1) // m * m


def _cdiv(a, b):
    return -(-a // b)


def _pick_m_tiling(m):
    """Rows padded to 16 (bf16 sublane packing). For larger M, guarantee >= 2
    grid steps (v7x megacore sharding) and split M evenly so padding waste is
    bounded (never a blind round-up to _M_TILE)."""
    m16 = _round_up(max(m, 1), 16)
    if m16 <= _M_SINGLE:
        return m16, m16
    n_tiles = max(2, _cdiv(m16, _M_TILE))
    tm = _round_up(_cdiv(m16, n_tiles), 16)
    return n_tiles * tm, tm


def _pad_rows(x, m_pad):
    if x.shape[0] == m_pad:
        return x
    return jnp.pad(x, ((0, m_pad - x.shape[0]), (0, 0)))


def _compiler_params():
    return pltpu.CompilerParams(
        dimension_semantics=("parallel",),
        vmem_limit_bytes=_VMEM_LIMIT,
    )


# ----------------------------------------------------------------------------
# pallas_call wrappers
# ----------------------------------------------------------------------------
def pallas_matmul_bias_relu(x, w, b_row, *, relu, out_dtype):
    """y = relu?(x @ w + b). x:(M,K) bf16, w:(K,N) bf16 with N % 128 == 0."""
    M, K = x.shape
    N = w.shape[1]
    m_pad, tm = _pick_m_tiling(M)
    xp = _pad_rows(x, m_pad)
    out_bytes = 2 if out_dtype == jnp.bfloat16 else 4
    cost = pl.CostEstimate(
        flops=2 * m_pad * K * N,
        transcendentals=0,
        bytes_accessed=m_pad * K * 2 + K * N * 2 + N * 4 + m_pad * N * out_bytes)
    out = pl.pallas_call(
        functools.partial(_matmul_bias_kernel, relu=relu),
        out_shape=jax.ShapeDtypeStruct((m_pad, N), out_dtype),
        grid=(m_pad // tm,),
        in_specs=[
            pl.BlockSpec((tm, K), lambda i: (i, 0)),
            pl.BlockSpec((K, N), lambda i: (0, 0)),   # weights stay resident
            pl.BlockSpec((1, N), lambda i: (0, 0)),
        ],
        out_specs=pl.BlockSpec((tm, N), lambda i: (i, 0)),
        compiler_params=_compiler_params(),
        cost_estimate=cost,
    )(xp, w, b_row)
    return out[:M] if m_pad != M else out


def pallas_dueling_head(flat, prep, num_actions):
    """Fused value/advantage heads + dueling combine in a single kernel."""
    M, F = flat.shape
    m_pad, tm = _pick_m_tiling(M)
    xp = _pad_rows(flat, m_pad)
    H2 = prep["head_w1"].shape[1]     # 1024
    NO = prep["head_w2"].shape[1]     # 128 (padded output lanes)
    cost = pl.CostEstimate(
        flops=2 * m_pad * F * H2 + 2 * m_pad * H2 * NO,
        transcendentals=0,
        bytes_accessed=(m_pad * F * 2 + F * H2 * 2 + H2 * 4
                        + H2 * NO * 2 + NO * 4 + m_pad * NO * 4))
    out = pl.pallas_call(
        functools.partial(_dueling_head_kernel, num_actions=num_actions),
        out_shape=jax.ShapeDtypeStruct((m_pad, NO), jnp.float32),
        grid=(m_pad // tm,),
        in_specs=[
            pl.BlockSpec((tm, F), lambda i: (i, 0)),
            pl.BlockSpec((F, H2), lambda i: (0, 0)),
            pl.BlockSpec((1, H2), lambda i: (0, 0)),
            pl.BlockSpec((H2, NO), lambda i: (0, 0)),
            pl.BlockSpec((1, NO), lambda i: (0, 0)),
        ],
        out_specs=pl.BlockSpec((tm, NO), lambda i: (i, 0)),
        compiler_params=_compiler_params(),
        cost_estimate=cost,
    )(xp, prep["head_w1"], prep["head_b1"], prep["head_w2"], prep["head_b2"])
    return out[:M, 1:1 + num_actions]


# ----------------------------------------------------------------------------
# Conv layer = single-op im2col (XLA glue) + Pallas MXU matmul.
# Output stays 128-lane zero-padded (no channel slice between layers).
# ----------------------------------------------------------------------------
def conv2d_pallas(x, w_mat, b_row, *, kh, kw, stride, in_layout):
    patches = jax.lax.conv_general_dilated_patches(
        x, (kh, kw), (stride, stride), "VALID",
        dimension_numbers=(in_layout, "HWIO", "NHWC"))
    B, oh, ow, K = patches.shape
    cols = patches.reshape(B * oh * ow, K)
    y = pallas_matmul_bias_relu(cols, w_mat, b_row, relu=True,
                                out_dtype=jnp.bfloat16)
    return y.reshape(B, oh, ow, -1)


# ----------------------------------------------------------------------------
# Parameters (PyTorch layout) and one-time kernel-ready preparation
# ----------------------------------------------------------------------------
def init_params(key, input_shape, num_actions):
    c, h, w = input_shape
    keys = jax.random.split(key, 7)

    def conv_p(k, oc, ic, kh, kw):
        return (jax.random.normal(k, (oc, ic, kh, kw), jnp.float32) * 0.05,
                jnp.zeros((oc,), jnp.float32))

    def fc_p(k, fin, fout):
        return (jax.random.normal(k, (fin, fout), jnp.float32) * 0.05,
                jnp.zeros((fout,), jnp.float32))

    h1, w1 = (h - 8) // 4 + 1, (w - 8) // 4 + 1
    h2, w2 = (h1 - 4) // 2 + 1, (w1 - 4) // 2 + 1
    h3, w3 = h2 - 3 + 1, w2 - 3 + 1
    flat = 64 * h3 * w3

    return {
        "conv1": conv_p(keys[0], 32, c, 8, 8),
        "conv2": conv_p(keys[1], 64, 32, 4, 4),
        "conv3": conv_p(keys[2], 64, 64, 3, 3),
        "val1": fc_p(keys[3], flat, 512),
        "val2": fc_p(keys[4], 512, 1),
        "adv1": fc_p(keys[5], flat, 512),
        "adv2": fc_p(keys[6], 512, num_actions),
    }


def prepare_params(params, input_shape, num_actions):
    """One-time conversion: bf16 weights, 128-lane padding on both the in- and
    out-channel sides, head w1 rows permuted for the NHWC/padded flatten, and
    the two heads concatenated / block-diagonalized. Arrays only (jit-safe)."""
    assert 1 + num_actions <= _LANE
    c, h, w = input_shape

    def conv_prep(w_oihw, b, in_c_pad):
        oc, ic, kh, kw = w_oihw.shape
        w_ihwo = jnp.transpose(w_oihw, (1, 2, 3, 0))            # (ic, kh, kw, oc)
        if in_c_pad > ic:                                       # zero rows for the
            w_ihwo = jnp.pad(w_ihwo,                            # padded channels
                             ((0, in_c_pad - ic), (0, 0), (0, 0), (0, 0)))
        w_mat = w_ihwo.reshape(in_c_pad * kh * kw, oc)          # (c,kh,kw) order
        oc_pad = _round_up(oc, _LANE)
        w_mat = jnp.pad(w_mat, ((0, 0), (0, oc_pad - oc))).astype(jnp.bfloat16)
        b_row = jnp.pad(b, (0, oc_pad - oc)).astype(jnp.float32).reshape(1, oc_pad)
        return w_mat, b_row

    c1w, c1b = conv_prep(*params["conv1"], in_c_pad=c)       # conv1 sees raw input
    c2w, c2b = conv_prep(*params["conv2"], in_c_pad=_LANE)   # padded activations
    c3w, c3b = conv_prep(*params["conv3"], in_c_pad=_LANE)

    # Spatial sizes of the conv3 output (needed to permute head w1 rows).
    h1, w1s = (h - 8) // 4 + 1, (w - 8) // 4 + 1
    h2s, w2s = (h1 - 4) // 2 + 1, (w1s - 4) // 2 + 1
    h3, w3s = h2s - 3 + 1, w2s - 3 + 1
    oc3 = params["conv3"][0].shape[0]                         # 64

    v1w, v1b = params["val1"]
    a1w, a1b = params["adv1"]
    v2w, v2b = params["val2"]
    a2w, a2b = params["adv2"]
    hdim = v1w.shape[1]                                       # 512

    # [val1 | adv1], rows re-ordered from PyTorch (C,H,W) flatten to our
    # (H,W,C_pad=128) flatten, with zero rows for the padded channels.
    w1cat = jnp.concatenate([v1w, a1w], axis=1)               # (oc3*h3*w3, 1024)
    w1cat = w1cat.reshape(oc3, h3, w3s, 2 * hdim)
    w1cat = jnp.transpose(w1cat, (1, 2, 0, 3))                # (h3, w3, oc3, 1024)
    w1cat = jnp.pad(w1cat, ((0, 0), (0, 0), (0, _LANE - oc3), (0, 0)))
    head_w1 = w1cat.reshape(h3 * w3s * _LANE, 2 * hdim).astype(jnp.bfloat16)
    head_b1 = jnp.concatenate([v1b, a1b]).reshape(1, -1).astype(jnp.float32)

    head_w2 = jnp.zeros((2 * hdim, _LANE), jnp.float32)
    head_w2 = head_w2.at[:hdim, 0].set(v2w[:, 0])             # value column
    head_w2 = head_w2.at[hdim:, 1:1 + num_actions].set(a2w)   # advantage columns
    head_b2 = jnp.zeros((1, _LANE), jnp.float32)
    head_b2 = head_b2.at[0, 0].set(v2b[0])
    head_b2 = head_b2.at[0, 1:1 + num_actions].set(a2b)

    return dict(conv1_w=c1w, conv1_b=c1b,
                conv2_w=c2w, conv2_b=c2b,
                conv3_w=c3w, conv3_b=c3b,
                head_w1=head_w1, head_b1=head_b1,
                head_w2=head_w2.astype(jnp.bfloat16), head_b2=head_b2)


# ----------------------------------------------------------------------------
# Forward pass (Pallas path): 4 pallas_calls total, no activation transposes.
# ----------------------------------------------------------------------------
def dueling_dqn_forward(prep, x_nchw, *, num_actions):
    x = x_nchw.astype(jnp.bfloat16)
    f = conv2d_pallas(x, prep["conv1_w"], prep["conv1_b"],
                      kh=8, kw=8, stride=4, in_layout="NCHW")
    f = conv2d_pallas(f, prep["conv2_w"], prep["conv2_b"],
                      kh=4, kw=4, stride=2, in_layout="NHWC")
    f = conv2d_pallas(f, prep["conv3_w"], prep["conv3_b"],
                      kh=3, kw=3, stride=1, in_layout="NHWC")
    # Natural NHWC/128-padded flatten; head w1 rows were pre-permuted to match.
    flat = f.reshape(f.shape[0], -1)
    return pallas_dueling_head(flat, prep, num_actions)


# ----------------------------------------------------------------------------
# Pure-JAX f32 reference (correctness check only)
# ----------------------------------------------------------------------------
def reference_forward(params, x_nchw):
    def conv(x, w, b, stride):
        y = jax.lax.conv_general_dilated(
            x, w, (stride, stride), "VALID",
            dimension_numbers=("NCHW", "OIHW", "NCHW"))
        return jax.nn.relu(y + b[None, :, None, None])

    f = conv(x_nchw, *params["conv1"], 4)
    f = conv(f, *params["conv2"], 2)
    f = conv(f, *params["conv3"], 1)
    flat = f.reshape(f.shape[0], -1)
    vh = jax.nn.relu(flat @ params["val1"][0] + params["val1"][1])
    v = vh @ params["val2"][0] + params["val2"][1]
    ah = jax.nn.relu(flat @ params["adv1"][0] + params["adv1"][1])
    a = ah @ params["adv2"][0] + params["adv2"][1]
    return v + (a - a.mean(axis=1, keepdims=True))


if __name__ == "__main__":
    key = jax.random.PRNGKey(0)
    fwd = jax.jit(dueling_dqn_forward, static_argnames="num_actions")

    # Case 1: conv stack collapses to 1x1x64 features (batch=2).
    # Case 2: 3x3x64 features + larger batch -> exercises flatten order & multi-tile grid.
    cases = [((4, 36, 36), 6, 2), ((4, 52, 52), 5, 4)]
    for input_shape, num_actions, batch in cases:
        kp, kx = jax.random.split(jax.random.fold_in(key, batch))
        params = init_params(kp, input_shape, num_actions)
        prep = prepare_params(params, input_shape, num_actions)
        x = jax.random.normal(kx, (batch,) + input_shape, jnp.float32)

        q = fwd(prep, x, num_actions=num_actions)
        q = jax.block_until_ready(q)
        q_ref = reference_forward(params, x)

        assert q.shape == (batch, num_actions), q.shape
        # bf16 MXU inputs with f32 accumulation -> loose tolerance vs f32 ref.
        assert jnp.allclose(q, q_ref, atol=5e-2, rtol=5e-2), (
            float(jnp.max(jnp.abs(q - q_ref))), q, q_ref)

    print("KERNEL_OK")
</pallas_src>

<mosaic_0001>
module attributes {stable_mosaic.version = 11 : i64} {
  func.func @_matmul_bias_kernel(%arg0: i32, %arg1: memref<128x256xbf16, #tpu.memory_space<vmem>>, %arg2: memref<256x128xbf16, #tpu.memory_space<vmem>>, %arg3: memref<1x128xf32, #tpu.memory_space<vmem>>, %arg4: memref<128x128xbf16, #tpu.memory_space<vmem>>) attributes {dimension_semantics = [#tpu.dimension_semantics<parallel>], iteration_bounds = array<i64: 1>, scalar_prefetch = 0 : i64, scratch_operands = 0 : i64, tpu.core_type = #tpu.core_type<tc>, window_params = [{transform_indices = @transform_0, window_bounds = array<i64: 128, 256>}, {pipeline_mode = #tpu.pipeline_mode<synchronous>, transform_indices = @transform_1, window_bounds = array<i64: 256, 128>}, {pipeline_mode = #tpu.pipeline_mode<synchronous>, transform_indices = @transform_2, window_bounds = array<i64: 1, 128>}, {transform_indices = @transform_3, window_bounds = array<i64: 128, 128>}]} {
    %c0 = arith.constant 0 : index
    %c0_0 = arith.constant 0 : index
    %0 = vector.load %arg1[%c0, %c0_0] : memref<128x256xbf16, #tpu.memory_space<vmem>>, vector<128x256xbf16>
    %c0_1 = arith.constant 0 : index
    %c0_2 = arith.constant 0 : index
    %1 = vector.load %arg2[%c0_1, %c0_2] : memref<256x128xbf16, #tpu.memory_space<vmem>>, vector<256x128xbf16>
    %cst = arith.constant dense<0.000000e+00> : vector<128x128xf32>
    %2 = tpu.matmul %0, %1, %cst {dimension_numbers = #tpu.dot_dimension_numbers<[1], [0], [0], [1], [0, 0, 1, 1], [], []>} : vector<128x256xbf16>, vector<256x128xbf16>, vector<128x128xf32> -> vector<128x128xf32>
    %c0_3 = arith.constant 0 : index
    %c0_4 = arith.constant 0 : index
    %3 = vector.load %arg3[%c0_3, %c0_4] : memref<1x128xf32, #tpu.memory_space<vmem>>, vector<1x128xf32>
    %4 = vector.broadcast %3 : vector<1x128xf32> to vector<128x128xf32>
    %5 = arith.addf %2, %4 : vector<128x128xf32>
    %cst_5 = arith.constant 0.000000e+00 : f32
    %6 = vector.broadcast %cst_5 : f32 to vector<128x128xf32>
    %7 = arith.maximumf %5, %6 : vector<128x128xf32>
    %8 = arith.truncf %7 : vector<128x128xf32> to vector<128x128xbf16>
    %c0_6 = arith.constant 0 : index
    %c0_7 = arith.constant 0 : index
    %9 = vector.load %arg4[%c0_6, %c0_7] : memref<128x128xbf16, #tpu.memory_space<vmem>>, vector<128x128xbf16>
    tpu.vector_store %arg4[%c0_6, %c0_7], %8 {strides = array<i32>} : memref<128x128xbf16, #tpu.memory_space<vmem>>, vector<128x128xbf16>,
    return
  }
  func.func @transform_0(%arg0: i32) -> (i32, i32) {
    %c0_i32 = arith.constant 0 : i32
    %c0_i32_0 = arith.constant 0 : i32
    return %arg0, %c0_i32 : i32, i32
  }
  func.func @transform_1(%arg0: i32) -> (i32, i32) {
    %c0_i32 = arith.constant 0 : i32
    %c0_i32_0 = arith.constant 0 : i32
    %c0_i32_1 = arith.constant 0 : i32
    return %c0_i32, %c0_i32_0 : i32, i32
  }
  func.func @transform_2(%arg0: i32) -> (i32, i32) {
    %c0_i32 = arith.constant 0 : i32
    %c0_i32_0 = arith.constant 0 : i32
    %c0_i32_1 = arith.constant 0 : i32
    return %c0_i32, %c0_i32_0 : i32, i32
  }
  func.func @transform_3(%arg0: i32) -> (i32, i32) {
    %c0_i32 = arith.constant 0 : i32
    %c0_i32_0 = arith.constant 0 : i32
    return %arg0, %c0_i32 : i32, i32
  }
}

module attributes {stable_mosaic.version = 11 : i64} {
  func.func @_matmul_bias_kernel(%arg0: i32, %arg1: memref<32x2048xbf16, #tpu.memory_space<vmem>>, %arg2: memref<2048x128xbf16, #tpu.memory_space<vmem>>, %arg3: memref<1x128xf32, #tpu.memory_space<vmem>>, %arg4: memref<32x128xbf16, #tpu.memory_space<vmem>>) attributes {dimension_semantics = [#tpu.dimension_semantics<parallel>], iteration_bounds = array<i64: 1>, scalar_prefetch = 0 : i64, scratch_operands = 0 : i64, tpu.core_type = #tpu.core_type<tc>, window_params = [{transform_indices = @transform_0, window_bounds = array<i64: 32, 2048>}, {pipeline_mode = #tpu.pipeline_mode<synchronous>, transform_indices = @transform_1, window_bounds = array<i64: 2048, 128>}, {pipeline_mode = #tpu.pipeline_mode<synchronous>, transform_indices = @transform_2, window_bounds = array<i64: 1, 128>}, {transform_indices = @transform_3, window_bounds = array<i64: 32, 128>}]} {
    %c0 = arith.constant 0 : index
    %c0_0 = arith.constant 0 : index
    %0 = vector.load %arg1[%c0, %c0_0] : memref<32x2048xbf16, #tpu.memory_space<vmem>>, vector<32x2048xbf16>
    %c0_1 = arith.constant 0 : index
    %c0_2 = arith.constant 0 : index
    %1 = vector.load %arg2[%c0_1, %c0_2] : memref<2048x128xbf16, #tpu.memory_space<vmem>>, vector<2048x128xbf16>
    %cst = arith.constant dense<0.000000e+00> : vector<32x128xf32>
    %2 = tpu.matmul %0, %1, %cst {dimension_numbers = #tpu.dot_dimension_numbers<[1], [0], [0], [1], [0, 0, 1, 1], [], []>} : vector<32x2048xbf16>, vector<2048x128xbf16>, vector<32x128xf32> -> vector<32x128xf32>
    %c0_3 = arith.constant 0 : index
    %c0_4 = arith.constant 0 : index
    %3 = vector.load %arg3[%c0_3, %c0_4] : memref<1x128xf32, #tpu.memory_space<vmem>>, vector<1x128xf32>
    %4 = vector.broadcast %3 : vector<1x128xf32> to vector<32x128xf32>
    %5 = arith.addf %2, %4 : vector<32x128xf32>
    %cst_5 = arith.constant 0.000000e+00 : f32
    %6 = vector.broadcast %cst_5 : f32 to vector<32x128xf32>
    %7 = arith.maximumf %5, %6 : vector<32x128xf32>
    %8 = arith.truncf %7 : vector<32x128xf32> to vector<32x128xbf16>
    %c0_6 = arith.constant 0 : index
    %c0_7 = arith.constant 0 : index
    %9 = vector.load %arg4[%c0_6, %c0_7] : memref<32x128xbf16, #tpu.memory_space<vmem>>, vector<32x128xbf16>
    tpu.vector_store %arg4[%c0_6, %c0_7], %8 {strides = array<i32>} : memref<32x128xbf16, #tpu.memory_space<vmem>>, vector<32x128xbf16>,
    return
  }
  func.func @transform_0(%arg0: i32) -> (i32, i32) {
    %c0_i32 = arith.constant 0 : i32
    %c0_i32_0 = arith.constant 0 : i32
    return %arg0, %c0_i32 : i32, i32
  }
  func.func @transform_1(%arg0: i32) -> (i32, i32) {
    %c0_i32 = arith.constant 0 : i32
    %c0_i32_0 = arith.constant 0 : i32
    %c0_i32_1 = arith.constant 0 : i32
    return %c0_i32, %c0_i32_0 : i32, i32
  }
  func.func @transform_2(%arg0: i32) -> (i32, i32) {
    %c0_i32 = arith.constant 0 : i32
    %c0_i32_0 = arith.constant 0 : i32
    %c0_i32_1 = arith.constant 0 : i32
    return %c0_i32, %c0_i32_0 : i32, i32
  }
  func.func @transform_3(%arg0: i32) -> (i32, i32) {
    %c0_i32 = arith.constant 0 : i32
    %c0_i32_0 = arith.constant 0 : i32
    return %arg0, %c0_i32 : i32, i32
  }
}

module attributes {stable_mosaic.version = 11 : i64} {
  func.func @_matmul_bias_kernel(%arg0: i32, %arg1: memref<16x1152xbf16, #tpu.memory_space<vmem>>, %arg2: memref<1152x128xbf16, #tpu.memory_space<vmem>>, %arg3: memref<1x128xf32, #tpu.memory_space<vmem>>, %arg4: memref<16x128xbf16, #tpu.memory_space<vmem>>) attributes {dimension_semantics = [#tpu.dimension_semantics<parallel>], iteration_bounds = array<i64: 1>, scalar_prefetch = 0 : i64, scratch_operands = 0 : i64, tpu.core_type = #tpu.core_type<tc>, window_params = [{transform_indices = @transform_0, window_bounds = array<i64: 16, 1152>}, {pipeline_mode = #tpu.pipeline_mode<synchronous>, transform_indices = @transform_1, window_bounds = array<i64: 1152, 128>}, {pipeline_mode = #tpu.pipeline_mode<synchronous>, transform_indices = @transform_2, window_bounds = array<i64: 1, 128>}, {transform_indices = @transform_3, window_bounds = array<i64: 16, 128>}]} {
    %c0 = arith.constant 0 : index
    %c0_0 = arith.constant 0 : index
    %0 = vector.load %arg1[%c0, %c0_0] : memref<16x1152xbf16, #tpu.memory_space<vmem>>, vector<16x1152xbf16>
    %c0_1 = arith.constant 0 : index
    %c0_2 = arith.constant 0 : index
    %1 = vector.load %arg2[%c0_1, %c0_2] : memref<1152x128xbf16, #tpu.memory_space<vmem>>, vector<1152x128xbf16>
    %cst = arith.constant dense<0.000000e+00> : vector<16x128xf32>
    %2 = tpu.matmul %0, %1, %cst {dimension_numbers = #tpu.dot_dimension_numbers<[1], [0], [0], [1], [0, 0, 1, 1], [], []>} : vector<16x1152xbf16>, vector<1152x128xbf16>, vector<16x128xf32> -> vector<16x128xf32>
    %c0_3 = arith.constant 0 : index
    %c0_4 = arith.constant 0 : index
    %3 = vector.load %arg3[%c0_3, %c0_4] : memref<1x128xf32, #tpu.memory_space<vmem>>, vector<1x128xf32>
    %4 = vector.broadcast %3 : vector<1x128xf32> to vector<16x128xf32>
    %5 = arith.addf %2, %4 : vector<16x128xf32>
    %cst_5 = arith.constant 0.000000e+00 : f32
    %6 = vector.broadcast %cst_5 : f32 to vector<16x128xf32>
    %7 = arith.maximumf %5, %6 : vector<16x128xf32>
    %8 = arith.truncf %7 : vector<16x128xf32> to vector<16x128xbf16>
    %c0_6 = arith.constant 0 : index
    %c0_7 = arith.constant 0 : index
    %9 = vector.load %arg4[%c0_6, %c0_7] : memref<16x128xbf16, #tpu.memory_space<vmem>>, vector<16x128xbf16>
    tpu.vector_store %arg4[%c0_6, %c0_7], %8 {strides = array<i32>} : memref<16x128xbf16, #tpu.memory_space<vmem>>, vector<16x128xbf16>,
    return
  }
  func.func @transform_0(%arg0: i32) -> (i32, i32) {
    %c0_i32 = arith.constant 0 : i32
    %c0_i32_0 = arith.constant 0 : i32
    return %arg0, %c0_i32 : i32, i32
  }
  func.func @transform_1(%arg0: i32) -> (i32, i32) {
    %c0_i32 = arith.constant 0 : i32
    %c0_i32_0 = arith.constant 0 : i32
    %c0_i32_1 = arith.constant 0 : i32
    return %c0_i32, %c0_i32_0 : i32, i32
  }
  func.func @transform_2(%arg0: i32) -> (i32, i32) {
    %c0_i32 = arith.constant 0 : i32
    %c0_i32_0 = arith.constant 0 : i32
    %c0_i32_1 = arith.constant 0 : i32
    return %c0_i32, %c0_i32_0 : i32, i32
  }
  func.func @transform_3(%arg0: i32) -> (i32, i32) {
    %c0_i32 = arith.constant 0 : i32
    %c0_i32_0 = arith.constant 0 : i32
    return %arg0, %c0_i32 : i32, i32
  }
}

module attributes {stable_mosaic.version = 11 : i64} {
  func.func @_dueling_head_kernel(%arg0: i32, %arg1: memref<16x128xbf16, #tpu.memory_space<vmem>>, %arg2: memref<128x1024xbf16, #tpu.memory_space<vmem>>, %arg3: memref<1x1024xf32, #tpu.memory_space<vmem>>, %arg4: memref<1024x128xbf16, #tpu.memory_space<vmem>>, %arg5: memref<1x128xf32, #tpu.memory_space<vmem>>, %arg6: memref<16x128xf32, #tpu.memory_space<vmem>>) attributes {dimension_semantics = [#tpu.dimension_semantics<parallel>], iteration_bounds = array<i64: 1>, scalar_prefetch = 0 : i64, scratch_operands = 0 : i64, tpu.core_type = #tpu.core_type<tc>, window_params = [{transform_indices = @transform_0, window_bounds = array<i64: 16, 128>}, {pipeline_mode = #tpu.pipeline_mode<synchronous>, transform_indices = @transform_1, window_bounds = array<i64: 128, 1024>}, {pipeline_mode = #tpu.pipeline_mode<synchronous>, transform_indices = @transform_2, window_bounds = array<i64: 1, 1024>}, {pipeline_mode = #tpu.pipeline_mode<synchronous>, transform_indices = @transform_3, window_bounds = array<i64: 1024, 128>}, {pipeline_mode = #tpu.pipeline_mode<synchronous>, transform_indices = @transform_4, window_bounds = array<i64: 1, 128>}, {transform_indices = @transform_5, window_bounds = array<i64: 16, 128>}]} {
    %c0 = arith.constant 0 : index
    %c0_0 = arith.constant 0 : index
    %0 = vector.load %arg1[%c0, %c0_0] : memref<16x128xbf16, #tpu.memory_space<vmem>>, vector<16x128xbf16>
    %c0_1 = arith.constant 0 : index
    %c0_2 = arith.constant 0 : index
    %1 = vector.load %arg2[%c0_1, %c0_2] : memref<128x1024xbf16, #tpu.memory_space<vmem>>, vector<128x1024xbf16>
    %cst = arith.constant dense<0.000000e+00> : vector<16x1024xf32>
    %2 = tpu.matmul %0, %1, %cst {dimension_numbers = #tpu.dot_dimension_numbers<[1], [0], [0], [1], [0, 0, 1, 1], [], []>} : vector<16x128xbf16>, vector<128x1024xbf16>, vector<16x1024xf32> -> vector<16x1024xf32>
    %c0_3 = arith.constant 0 : index
    %c0_4 = arith.constant 0 : index
    %3 = vector.load %arg3[%c0_3, %c0_4] : memref<1x1024xf32, #tpu.memory_space<vmem>>, vector<1x1024xf32>
    %4 = vector.broadcast %3 : vector<1x1024xf32> to vector<16x1024xf32>
    %5 = arith.addf %2, %4 : vector<16x1024xf32>
    %cst_5 = arith.constant 0.000000e+00 : f32
    %6 = vector.broadcast %cst_5 : f32 to vector<16x1024xf32>
    %7 = arith.maximumf %5, %6 : vector<16x1024xf32>
    %8 = arith.truncf %7 : vector<16x1024xf32> to vector<16x1024xbf16>
    %c0_6 = arith.constant 0 : index
    %c0_7 = arith.constant 0 : index
    %9 = vector.load %arg4[%c0_6, %c0_7] : memref<1024x128xbf16, #tpu.memory_space<vmem>>, vector<1024x128xbf16>
    %cst_8 = arith.constant dense<0.000000e+00> : vector<16x128xf32>
    %10 = tpu.matmul %8, %9, %cst_8 {dimension_numbers = #tpu.dot_dimension_numbers<[1], [0], [0], [1], [0, 0, 1, 1], [], []>} : vector<16x1024xbf16>, vector<1024x128xbf16>, vector<16x128xf32> -> vector<16x128xf32>
    %c0_9 = arith.constant 0 : index
    %c0_10 = arith.constant 0 : index
    %11 = vector.load %arg5[%c0_9, %c0_10] : memref<1x128xf32, #tpu.memory_space<vmem>>, vector<1x128xf32>
    %12 = vector.broadcast %11 : vector<1x128xf32> to vector<16x128xf32>
    %13 = arith.addf %10, %12 : vector<16x128xf32>
    %14 = vector.extract_strided_slice %13 {offsets = [0, 0], sizes = [16, 1], strides = [1, 1]} : vector<16x128xf32> to vector<16x1xf32>
    %15 = tpu.iota {dimensions = array<i32: 1>} : vector<16x128xi32>
    %c1_i32 = arith.constant 1 : i32
    %16 = vector.broadcast %c1_i32 : i32 to vector<16x128xi32>
    %17 = arith.cmpi sge, %15, %16 : vector<16x128xi32>
    %c6_i32 = arith.constant 6 : i32
    %18 = vector.broadcast %c6_i32 : i32 to vector<16x128xi32>
    %19 = arith.cmpi sle, %15, %18 : vector<16x128xi32>
    %20 = arith.andi %17, %19 : vector<16x128xi1>
    %cst_11 = arith.constant 0.000000e+00 : f32
    %21 = vector.broadcast %cst_11 : f32 to vector<16x128xf32>
    %22 = arith.select %20, %13, %21 : vector<16x128xi1>, vector<16x128xf32>
    %cst_12 = arith.constant dense<0.000000e+00> : vector<16xf32>
    %23 = vector.multi_reduction <add>, %22, %cst_12 [1] : vector<16x128xf32> to vector<16xf32>
    %24 = vector.shape_cast %23 : vector<16xf32> to vector<16x1xf32>
    %cst_13 = arith.constant 0.166666672 : f32
    %25 = vector.broadcast %cst_13 : f32 to vector<16x1xf32>
    %26 = arith.mulf %24, %25 : vector<16x1xf32>
    %27 = vector.broadcast %26 : vector<16x1xf32> to vector<16x128xf32>
    %28 = arith.subf %13, %27 : vector<16x128xf32>
    %29 = vector.broadcast %14 : vector<16x1xf32> to vector<16x128xf32>
    %30 = arith.addf %29, %28 : vector<16x128xf32>
    %c0_14 = arith.constant 0 : index
    %c0_15 = arith.constant 0 : index
    %31 = vector.load %arg6[%c0_14, %c0_15] : memref<16x128xf32, #tpu.memory_space<vmem>>, vector<16x128xf32>
    tpu.vector_store %arg6[%c0_14, %c0_15], %30 {strides = array<i32>} : memref<16x128xf32, #tpu.memory_space<vmem>>, vector<16x128xf32>,
    return
  }
  func.func @transform_0(%arg0: i32) -> (i32, i32) {
    %c0_i32 = arith.constant 0 : i32
    %c0_i32_0 = arith.constant 0 : i32
    return %arg0, %c0_i32 : i32, i32
  }
  func.func @transform_1(%arg0: i32) -> (i32, i32) {
    %c0_i32 = arith.constant 0 : i32
    %c0_i32_0 = arith.constant 0 : i32
    %c0_i32_1 = arith.constant 0 : i32
    return %c0_i32, %c0_i32_0 : i32, i32
  }
  func.func @transform_2(%arg0: i32) -> (i32, i32) {
    %c0_i32 = arith.constant 0 : i32
    %c0_i32_0 = arith.constant 0 : i32
    %c0_i32_1 = arith.constant 0 : i32
    return %c0_i32, %c0_i32_0 : i32, i32
  }
  func.func @transform_3(%arg0: i32) -> (i32, i32) {
    %c0_i32 = arith.constant 0 : i32
    %c0_i32_0 = arith.constant 0 : i32
    %c0_i32_1 = arith.constant 0 : i32
    return %c0_i32, %c0_i32_0 : i32, i32
  }
  func.func @transform_4(%arg0: i32) -> (i32, i32) {
    %c0_i32 = arith.constant 0 : i32
    %c0_i32_0 = arith.constant 0 : i32
    %c0_i32_1 = arith.constant 0 : i32
    return %c0_i32, %c0_i32_0 : i32, i32
  }
  func.func @transform_5(%arg0: i32) -> (i32, i32) {
    %c0_i32 = arith.constant 0 : i32
    %c0_i32_0 = arith.constant 0 : i32
    return %arg0, %c0_i32 : i32, i32
  }
}

</mosaic_0001>

<llo_original>
// kernel: dueling_dqn_forward.4
$region0: #{dueling_dqn_forward.4}
  #allocation0 [shape = 'u32[]', space=smem, size = 0x4, offset = 0x4, fixed_abs, tag = 'smem constant byte address 0x4 - core index']
  #allocation1 [shape = 'u32[72,128]{1,0:T(1,128)}', space=vmem, size = 0x9000, scoped, tag = 'internal scratch']
  %s0 = inlined_call_operand.vmem [shape: bf16[128,256], index: 0, kind: input, shape index: {}]
  %s1 = inlined_call_operand.vmem [shape: bf16[256,128], index: 1, kind: input, shape index: {}]
  %s2 = inlined_call_operand.vmem [shape: f32[1,128], index: 2, kind: input, shape index: {}]
  %s3 = inlined_call_operand.vmem [shape: bf16[128,128], index: 3, kind: output, shape index: {}]
  %s4 = sld [smem:[#allocation0]]
  $region22: #{dueling_dqn_forward.4} parent=0
    _
  %s6 = ssub.s32 1, %s4
  %s7 = scalar_select 0, %s6, %s4
  // Predicated region
  $region2: #{dueling_dqn_forward.4} parent=0 // pred_check
    _
  $region3: #{dueling_dqn_forward.4} parent=0 // pred_check_branch
    %9 = sbr.rel (0) target = $region5
  $region4: #{dueling_dqn_forward.4} parent=0 // pred_region
    _
  $region5: #{dueling_dqn_forward.4} parent=0 // pred_fallthru
    _
  // Predicated region
  $region6: #{dueling_dqn_forward.4} parent=0 // pred_check
    _
  $region7: #{dueling_dqn_forward.4} parent=0 // pred_check_branch
    %11 = sbr.rel (0) target = $region9
  $region8: #{dueling_dqn_forward.4} parent=0 // pred_region
    _
  $region9: #{dueling_dqn_forward.4} parent=0 // pred_fallthru
    _
  // Predicated region
  $region10: #{dueling_dqn_forward.4} parent=0 // pred_check
    _
  $region11: #{dueling_dqn_forward.4} parent=0 // pred_check_branch
    %13 = sbr.rel (0) target = $region13
  $region12: #{dueling_dqn_forward.4} parent=0 // pred_region
    _
  $region13: #{dueling_dqn_forward.4} parent=0 // pred_fallthru
    _
  %v14 = vld [vmem:[%s0] sm:$0xff]
  %v15 = vld [vmem:[%s0 + $0x8] sm:$0xff]
  %v16 = vld [vmem:[%s0 + $0x10] sm:$0xff]
  %v17 = vld [vmem:[%s0 + $0x18] sm:$0xff]
  %v18 = vld [vmem:[%s0 + $0x20] sm:$0xff]
  %v19 = vld [vmem:[%s0 + $0x28] sm:$0xff]
  %v20 = vld [vmem:[%s0 + $0x30] sm:$0xff]
  %v21 = vld [vmem:[%s0 + $0x38] sm:$0xff]
  %v22 = vld [vmem:[%s0 + $0x40] sm:$0xff]
  %v23 = vld [vmem:[%s0 + $0x48] sm:$0xff]
  %v24 = vld [vmem:[%s0 + $0x50] sm:$0xff]
  %v25 = vld [vmem:[%s0 + $0x58] sm:$0xff]
  %v26 = vld [vmem:[%s0 + $0x60] sm:$0xff]
  %v27 = vld [vmem:[%s0 + $0x68] sm:$0xff]
  %v28 = vld [vmem:[%s0 + $0x70] sm:$0xff]
  %v29 = vld [vmem:[%s0 + $0x78] sm:$0xff]
  %v30 = vld [vmem:[%s1] sm:$0xf]
  %v31 = vld [vmem:[%s1 + $0x4] sm:$0xf]
  %v32 = vld [vmem:[%s1 + $0x8] sm:$0xf]
  %v33 = vld [vmem:[%s1 + $0xc] sm:$0xf]
  %v34 = vld [vmem:[%s1 + $0x10] sm:$0xf]
  %v35 = vld [vmem:[%s1 + $0x14] sm:$0xf]
  %v36 = vld [vmem:[%s1 + $0x18] sm:$0xf]
  %v37 = vld [vmem:[%s1 + $0x1c] sm:$0xf]
  %v38 = vld [vmem:[%s1 + $0x20] sm:$0xf]
  %v39 = vld [vmem:[%s1 + $0x24] sm:$0xf]
  %v40 = vld [vmem:[%s1 + $0x28] sm:$0xf]
  %v41 = vld [vmem:[%s1 + $0x2c] sm:$0xf]
  %v42 = vld [vmem:[%s1 + $0x30] sm:$0xf]
  %v43 = vld [vmem:[%s1 + $0x34] sm:$0xf]
  %v44 = vld [vmem:[%s1 + $0x38] sm:$0xf]
  %v45 = vld [vmem:[%s1 + $0x3c] sm:$0xf]
  %v46 = vld [vmem:[%s1 + $0x40] sm:$0xf]
  %v47 = vld [vmem:[%s1 + $0x44] sm:$0xf]
  %v48 = vld [vmem:[%s1 + $0x48] sm:$0xf]
  %v49 = vld [vmem:[%s1 + $0x4c] sm:$0xf]
  %v50 = vld [vmem:[%s1 + $0x50] sm:$0xf]
  %v51 = vld [vmem:[%s1 + $0x54] sm:$0xf]
  %v52 = vld [vmem:[%s1 + $0x58] sm:$0xf]
  %v53 = vld [vmem:[%s1 + $0x5c] sm:$0xf]
  %v54 = vld [vmem:[%s1 + $0x60] sm:$0xf]
  %v55 = vld [vmem:[%s1 + $0x64] sm:$0xf]
  %v56 = vld [vmem:[%s1 + $0x68] sm:$0xf]
  %v57 = vld [vmem:[%s1 + $0x6c] sm:$0xf]
  %v58 = vld [vmem:[%s1 + $0x70] sm:$0xf]
  %v59 = vld [vmem:[%s1 + $0x74] sm:$0xf]
  %v60 = vld [vmem:[%s1 + $0x78] sm:$0xf]
  %v61 = vld [vmem:[%s1 + $0x7c] sm:$0xf]
  %v62 = vld [vmem:[%s2] sm:$0x1]
  %v64 = vperm.slane %v62, 0
  %v82 = vunpack.c.l.b16 %v14
  %v83 = vunpack.c.h.b16 %v14
  %v84 = vunpack.c.l.b16 %v15
  %v85 = vunpack.c.h.b16 %v15
  %v86 = vunpack.c.l.b16 %v16
  %v87 = vunpack.c.h.b16 %v16
  %v88 = vunpack.c.l.b16 %v17
  %v89 = vunpack.c.h.b16 %v17
  %v90 = vunpack.c.l.b16 %v18
  %v91 = vunpack.c.h.b16 %v18
  %v92 = vunpack.c.l.b16 %v19
  %v93 = vunpack.c.h.b16 %v19
  %v94 = vunpack.c.l.b16 %v20
  %v95 = vunpack.c.h.b16 %v20
  %v96 = vunpack.c.l.b16 %v21
  %v97 = vunpack.c.h.b16 %v21
  %v98 = vunpack.c.l.b16 %v22
  %v99 = vunpack.c.h.b16 %v22
  %v100 = vunpack.c.l.b16 %v23
  %v101 = vunpack.c.h.b16 %v23
  %v102 = vunpack.c.l.b16 %v24
  %v103 = vunpack.c.h.b16 %v24
  %v104 = vunpack.c.l.b16 %v25
  %v105 = vunpack.c.h.b16 %v25
  %v106 = vunpack.c.l.b16 %v26
  %v107 = vunpack.c.h.b16 %v26
  %v108 = vunpack.c.l.b16 %v27
  %v109 = vunpack.c.h.b16 %v27
  %v110 = vunpack.c.l.b16 %v28
  %v111 = vunpack.c.h.b16 %v28
  %v112 = vunpack.c.l.b16 %v29
  %v113 = vunpack.c.h.b16 %v29
  %v114 = vpack.c.b16 %v84, %v82
  %v115 = vpack.c.b16 %v85, %v83
  %v116 = vpack.c.b16 %v88, %v86
  %v117 = vpack.c.b16 %v89, %v87
  %v118 = vpack.c.b16 %v92, %v90
  %v119 = vpack.c.b16 %v93, %v91
  %v120 = vpack.c.b16 %v96, %v94
  %v121 = vpack.c.b16 %v97, %v95
  %v122 = vpack.c.b16 %v100, %v98
  %v123 = vpack.c.b16 %v101, %v99
  %v124 = vpack.c.b16 %v104, %v102
  %v125 = vpack.c.b16 %v105, %v103
  %v126 = vpack.c.b16 %v108, %v106
  %v127 = vpack.c.b16 %v109, %v107
  %v128 = vpack.c.b16 %v112, %v110
  %v129 = vpack.c.b16 %v113, %v111
  %v178 = vunpack.c.l.b16 %v30
  %v179 = vunpack.c.l.b16 %v31
  %v180 = vunpack.c.l.b16 %v32
  %v181 = vunpack.c.l.b16 %v33
  %v182 = vunpack.c.l.b16 %v34
  %v183 = vunpack.c.l.b16 %v35
  %v184 = vunpack.c.l.b16 %v36
  %v185 = vunpack.c.l.b16 %v37
  %v186 = vunpack.c.l.b16 %v38
  %v187 = vunpack.c.l.b16 %v39
  %v188 = vunpack.c.l.b16 %v40
  %v189 = vunpack.c.l.b16 %v41
  %v190 = vunpack.c.l.b16 %v42
  %v191 = vunpack.c.l.b16 %v43
  %v192 = vunpack.c.l.b16 %v44
  %v193 = vunpack.c.l.b16 %v45
  %v194 = vunpack.c.l.b16 %v46
  %v195 = vunpack.c.l.b16 %v47
  %v196 = vunpack.c.l.b16 %v48
  %v197 = vunpack.c.l.b16 %v49
  %v198 = vunpack.c.l.b16 %v50
  %v199 = vunpack.c.l.b16 %v51
  %v200 = vunpack.c.l.b16 %v52
  %v201 = vunpack.c.l.b16 %v53
  %v202 = vunpack.c.l.b16 %v54
  %v203 = vunpack.c.l.b16 %v55
  %v204 = vunpack.c.l.b16 %v56
  %v205 = vunpack.c.l.b16 %v57
  %v206 = vunpack.c.l.b16 %v58
  %v207 = vunpack.c.l.b16 %v59
  %v208 = vunpack.c.l.b16 %v60
  %v209 = vunpack.c.l.b16 %v61
  %v210 = vpack.c.b16 %v179, %v178
  %v211 = vpack.c.b16 %v181, %v180
  %v212 = vpack.c.b16 %v183, %v182
  %v213 = vpack.c.b16 %v185, %v184
  %v214 = vpack.c.b16 %v187, %v186
  %v215 = vpack.c.b16 %v189, %v188
  %v216 = vpack.c.b16 %v191, %v190
  %v217 = vpack.c.b16 %v193, %v192
  %v218 = vpack.c.b16 %v195, %v194
  %v219 = vpack.c.b16 %v197, %v196
  %v220 = vpack.c.b16 %v199, %v198
  %v221 = vpack.c.b16 %v201, %v200
  %v222 = vpack.c.b16 %v203, %v202
  %v223 = vpack.c.b16 %v205, %v204
  %v224 = vpack.c.b16 %v207, %v206
  %v225 = vpack.c.b16 %v209, %v208
  %242 = vmatpush.bf16.msra.mxu0 %v217
  %243 = vmatpush.bf16.msra.mxu0 %v216
  %244 = vmatpush.bf16.msra.mxu0 %v215
  %245 = vmatpush.bf16.msra.mxu0 %v214
  %246 = vmatpush.bf16.msra.mxu0 %v213
  %247 = vmatpush.bf16.msra.mxu0 %v212
  %248 = vmatpush.bf16.msra.mxu0 %v211
  %249 = vmatpush.bf16.msra.mxu0 %v210
  %250 = vmatmul.bf16.gmra.mxu0 %v114
  %v251 = vpop.f32.mrf.mxu0
  %v252 = vadd.f32 %v64, %v251
  %v253 = vpop.f32.mrf.mxu0
  %v254 = vadd.f32 %v64, %v253
  %255 = vmatmul.bf16.gmra.mxu0 %v116
  %v256 = vpop.f32.mrf.mxu0
  %v257 = vadd.f32 %v64, %v256
  %v258 = vpop.f32.mrf.mxu0
  %v259 = vadd.f32 %v64, %v258
  %260 = vmatmul.bf16.gmra.mxu0 %v118
  %v261 = vpop.f32.mrf.mxu0
  %v262 = vadd.f32 %v64, %v261
  %v263 = vpop.f32.mrf.mxu0
  %v264 = vadd.f32 %v64, %v263
  %265 = vmatmul.bf16.gmra.mxu0 %v120
  %v266 = vpop.f32.mrf.mxu0
  %v267 = vadd.f32 %v64, %v266
  %v268 = vpop.f32.mrf.mxu0
  %v269 = vadd.f32 %v64, %v268
  %270 = vmatmul.bf16.gmra.mxu0 %v122
  %v271 = vpop.f32.mrf.mxu0
  %v272 = vadd.f32 %v64, %v271
  %v273 = vpop.f32.mrf.mxu0
  %v274 = vadd.f32 %v64, %v273
  %275 = vmatmul.bf16.gmra.mxu0 %v124
  %v276 = vpop.f32.mrf.mxu0
  %v277 = vadd.f32 %v64, %v276
  %v278 = vpop.f32.mrf.mxu0
  %v279 = vadd.f32 %v64, %v278
  %280 = vmatmul.bf16.gmra.mxu0 %v126
  %v281 = vpop.f32.mrf.mxu0
  %v282 = vadd.f32 %v64, %v281
  %v283 = vpop.f32.mrf.mxu0
  %v284 = vadd.f32 %v64, %v283
  %285 = vmatmul.bf16.gmra.mxu0 %v128
  %v286 = vpop.f32.mrf.mxu0
  %v287 = vadd.f32 %v64, %v286
  %v288 = vpop.f32.mrf.mxu0
  %v289 = vadd.f32 %v64, %v288
  %290 = vdwg.mxu0
  %291 = vmatpush.bf16.msra.mxu0 %v225
  %292 = vmatpush.bf16.msra.mxu0 %v224
  %293 = vmatpush.bf16.msra.mxu0 %v223
  %294 = vmatpush.bf16.msra.mxu0 %v222
  %295 = vmatpush.bf16.msra.mxu0 %v221
  %296 = vmatpush.bf16.msra.mxu0 %v220
  %297 = vmatpush.bf16.msra.mxu0 %v219
  %298 = vmatpush.bf16.msra.mxu0 %v218
  %299 = vmatmul.bf16.gmra.mxu0 %v115
  %v300 = vpop.f32.mrf.mxu0
  %v301 = vadd.f32 %v252, %v300
  %v302 = vpop.f32.mrf.mxu0
  %v303 = vadd.f32 %v254, %v302
  %304 = vmatmul.bf16.gmra.mxu0 %v117
  %v305 = vpop.f32.mrf.mxu0
  %v306 = vadd.f32 %v257, %v305
  %v307 = vpop.f32.mrf.mxu0
  %v308 = vadd.f32 %v259, %v307
  %309 = vmatmul.bf16.gmra.mxu0 %v119
  %v310 = vpop.f32.mrf.mxu0
  %v311 = vadd.f32 %v262, %v310
  %v312 = vpop.f32.mrf.mxu0
  %v313 = vadd.f32 %v264, %v312
  %314 = vmatmul.bf16.gmra.mxu0 %v121
  %v315 = vpop.f32.mrf.mxu0
  %v316 = vadd.f32 %v267, %v315
  %v317 = vpop.f32.mrf.mxu0
  %v318 = vadd.f32 %v269, %v317
  %319 = vmatmul.bf16.gmra.mxu0 %v123
  %v320 = vpop.f32.mrf.mxu0
  %v321 = vadd.f32 %v272, %v320
  %v322 = vpop.f32.mrf.mxu0
  %v323 = vadd.f32 %v274, %v322
  %324 = vmatmul.bf16.gmra.mxu0 %v125
  %v325 = vpop.f32.mrf.mxu0
  %v326 = vadd.f32 %v277, %v325
  %v327 = vpop.f32.mrf.mxu0
  %v328 = vadd.f32 %v279, %v327
  %329 = vmatmul.bf16.gmra.mxu0 %v127
  %v330 = vpop.f32.mrf.mxu0
  %v331 = vadd.f32 %v282, %v330
  %v332 = vpop.f32.mrf.mxu0
  %v333 = vadd.f32 %v284, %v332
  %334 = vmatmul.bf16.gmra.mxu0 %v129
  %v335 = vpop.f32.mrf.mxu0
  %v336 = vadd.f32 %v287, %v335
  %v337 = vpop.f32.mrf.mxu0
  %v338 = vadd.f32 %v289, %v337
  %339 = vdwg.mxu0
  %v340 = vmax.f32 %v301, 0.0
  %v341 = vmax.f32 %v303, 0.0
  %v342 = vmax.f32 %v306, 0.0
  %v343 = vmax.f32 %v308, 0.0
  %v344 = vmax.f32 %v311, 0.0
  %v345 = vmax.f32 %v313, 0.0
  %v346 = vmax.f32 %v316, 0.0
  %v347 = vmax.f32 %v318, 0.0
  %v348 = vmax.f32 %v321, 0.0
  %v349 = vmax.f32 %v323, 0.0
  %v350 = vmax.f32 %v326, 0.0
  %v351 = vmax.f32 %v328, 0.0
  %v352 = vmax.f32 %v331, 0.0
  %v353 = vmax.f32 %v333, 0.0
  %v354 = vmax.f32 %v336, 0.0
  %v355 = vmax.f32 %v338, 0.0
  %v356 = vpack.c.bf16 %v340, %v340
  %v357 = vpack.c.bf16 %v341, %v341
  %v358 = vpack.c.bf16 %v342, %v342
  %v359 = vpack.c.bf16 %v343, %v343
  %v360 = vpack.c.bf16 %v344, %v344
  %v361 = vpack.c.bf16 %v345, %v345
  %v362 = vpack.c.bf16 %v346, %v346
  %v363 = vpack.c.bf16 %v347, %v347
  %v364 = vpack.c.bf16 %v348, %v348
  %v365 = vpack.c.bf16 %v349, %v349
  %v366 = vpack.c.bf16 %v350, %v350
  %v367 = vpack.c.bf16 %v351, %v351
  %v368 = vpack.c.bf16 %v352, %v352
  %v369 = vpack.c.bf16 %v353, %v353
  %v370 = vpack.c.bf16 %v354, %v354
  %v371 = vpack.c.bf16 %v355, %v355
  %372 = vst [vmem:[%s3] sm:$0xf] %v356
  %373 = vst [vmem:[%s3 + $0x4] sm:$0xf] %v357
  %374 = vst [vmem:[%s3 + $0x8] sm:$0xf] %v358
  %375 = vst [vmem:[%s3 + $0xc] sm:$0xf] %v359
  %376 = vst [vmem:[%s3 + $0x10] sm:$0xf] %v360
  %377 = vst [vmem:[%s3 + $0x14] sm:$0xf] %v361
  %378 = vst [vmem:[%s3 + $0x18] sm:$0xf] %v362
  %379 = vst [vmem:[%s3 + $0x1c] sm:$0xf] %v363
  %380 = vst [vmem:[%s3 + $0x20] sm:$0xf] %v364
  %381 = vst [vmem:[%s3 + $0x24] sm:$0xf] %v365
  %382 = vst [vmem:[%s3 + $0x28] sm:$0xf] %v366
  %383 = vst [vmem:[%s3 + $0x2c] sm:$0xf] %v367
  %384 = vst [vmem:[%s3 + $0x30] sm:$0xf] %v368
  %385 = vst [vmem:[%s3 + $0x34] sm:$0xf] %v369
  %386 = vst [vmem:[%s3 + $0x38] sm:$0xf] %v370
  %387 = vst [vmem:[%s3 + $0x3c] sm:$0xf] %v371
  // Predicated region
  $region14: #{dueling_dqn_forward.4} parent=0 // pred_check
    _
  $region15: #{dueling_dqn_forward.4} parent=0 // pred_check_branch
    %389 = sbr.rel (0) target = $region17
  $region16: #{dueling_dqn_forward.4} parent=0 // pred_region
    _
  $region17: #{dueling_dqn_forward.4} parent=0 // pred_fallthru
    _
  // Predicated region
  $region18: #{dueling_dqn_forward.4} parent=0 // pred_check
    _
  $region19: #{dueling_dqn_forward.4} parent=0 // pred_check_branch
    %391 = sbr.rel (0) target = $region21
  $region20: #{dueling_dqn_forward.4} parent=0 // pred_region
    _
  $region21: #{dueling_dqn_forward.4} parent=0 // pred_fallthru
    _

// kernel: dueling_dqn_forward.5
$region0: #{dueling_dqn_forward.5}
  #allocation0 [shape = 'u32[]', space=smem, size = 0x4, offset = 0x4, fixed_abs, tag = 'smem constant byte address 0x4 - core index']
  #allocation1 [shape = 'u32[72,128]{1,0:T(1,128)}', space=vmem, size = 0x9000, scoped, tag = 'internal scratch']
  %s0 = inlined_call_operand.vmem [shape: bf16[32,2048], index: 0, kind: input, shape index: {}]
  %s1 = inlined_call_operand.vmem [shape: bf16[2048,128], index: 1, kind: input, shape index: {}]
  %s2 = inlined_call_operand.vmem [shape: f32[1,128], index: 2, kind: input, shape index: {}]
  %s3 = inlined_call_operand.vmem [shape: bf16[32,128], index: 3, kind: output, shape index: {}]
  %s4 = sld [smem:[#allocation0]]
  $region22: #{dueling_dqn_forward.5} parent=0
    _
  %s6 = ssub.s32 1, %s4
  %s7 = scalar_select 0, %s6, %s4
  // Predicated region
  $region2: #{dueling_dqn_forward.5} parent=0 // pred_check
    _
  $region3: #{dueling_dqn_forward.5} parent=0 // pred_check_branch
    %9 = sbr.rel (0) target = $region5
  $region4: #{dueling_dqn_forward.5} parent=0 // pred_region
    _
  $region5: #{dueling_dqn_forward.5} parent=0 // pred_fallthru
    _
  // Predicated region
  $region6: #{dueling_dqn_forward.5} parent=0 // pred_check
    _
  $region7: #{dueling_dqn_forward.5} parent=0 // pred_check_branch
    %11 = sbr.rel (0) target = $region9
  $region8: #{dueling_dqn_forward.5} parent=0 // pred_region
    _
  $region9: #{dueling_dqn_forward.5} parent=0 // pred_fallthru
    _
  // Predicated region
  $region10: #{dueling_dqn_forward.5} parent=0 // pred_check
    _
  $region11: #{dueling_dqn_forward.5} parent=0 // pred_check_branch
    %13 = sbr.rel (0) target = $region13
  $region12: #{dueling_dqn_forward.5} parent=0 // pred_region
    _
  $region13: #{dueling_dqn_forward.5} parent=0 // pred_fallthru
    _
  %v14 = vld [vmem:[%s0] sm:$0xff]
  %v15 = vld [vmem:[%s0 + $0x8] sm:$0xff]
  %v16 = vld [vmem:[%s0 + $0x10] sm:$0xff]
  %v17 = vld [vmem:[%s0 + $0x18] sm:$0xff]
  %v18 = vld [vmem:[%s0 + $0x20] sm:$0xff]
  %v19 = vld [vmem:[%s0 + $0x28] sm:$0xff]
  %v20 = vld [vmem:[%s0 + $0x30] sm:$0xff]
  %v21 = vld [vmem:[%s0 + $0x38] sm:$0xff]
  %v22 = vld [vmem:[%s0 + $0x40] sm:$0xff]
  %v23 = vld [vmem:[%s0 + $0x48] sm:$0xff]
  %v24 = vld [vmem:[%s0 + $0x50] sm:$0xff]
  %v25 = vld [vmem:[%s0 + $0x58] sm:$0xff]
  %v26 = vld [vmem:[%s0 + $0x60] sm:$0xff]
  %v27 = vld [vmem:[%s0 + $0x68] sm:$0xff]
  %v28 = vld [vmem:[%s0 + $0x70] sm:$0xff]
  %v29 = vld [vmem:[%s0 + $0x78] sm:$0xff]
  %v30 = vld [vmem:[%s0 + $0x80] sm:$0xff]
  %v31 = vld [vmem:[%s0 + $0x88] sm:$0xff]
  %v32 = vld [vmem:[%s0 + $0x90] sm:$0xff]
  %v33 = vld [vmem:[%s0 + $0x98] sm:$0xff]
  %v34 = vld [vmem:[%s0 + $0xa0] sm:$0xff]
  %v35 = vld [vmem:[%s0 + $0xa8] sm:$0xff]
  %v36 = vld [vmem:[%s0 + $0xb0] sm:$0xff]
  %v37 = vld [vmem:[%s0 + $0xb8] sm:$0xff]
  %v38 = vld [vmem:[%s0 + $0xc0] sm:$0xff]
  %v39 = vld [vmem:[%s0 + $0xc8] sm:$0xff]
  %v40 = vld [vmem:[%s0 + $0xd0] sm:$0xff]
  %v41 = vld [vmem:[%s0 + $0xd8] sm:$0xff]
  %v42 = vld [vmem:[%s0 + $0xe0] sm:$0xff]
  %v43 = vld [vmem:[%s0 + $0xe8] sm:$0xff]
  %v44 = vld [vmem:[%s0 + $0xf0] sm:$0xff]
  %v45 = vld [vmem:[%s0 + $0xf8] sm:$0xff]
  %v46 = vld [vmem:[%s1] sm:$0xf]
  %v47 = vld [vmem:[%s1 + $0x4] sm:$0xf]
  %v48 = vld [vmem:[%s1 + $0x8] sm:$0xf]
  %v49 = vld [vmem:[%s1 + $0xc] sm:$0xf]
  %v50 = vld [vmem:[%s1 + $0x10] sm:$0xf]
  %v51 = vld [vmem:[%s1 + $0x14] sm:$0xf]
  %v52 = vld [vmem:[%s1 + $0x18] sm:$0xf]
  %v53 = vld [vmem:[%s1 + $0x1c] sm:$0xf]
  %v54 = vld [vmem:[%s1 + $0x20] sm:$0xf]
  %v55 = vld [vmem:[%s1 + $0x24] sm:$0xf]
  %v56 = vld [vmem:[%s1 + $0x28] sm:$0xf]
  %v57 = vld [vmem:[%s1 + $0x2c] sm:$0xf]
  %v58 = vld [vmem:[%s1 + $0x30] sm:$0xf]
  %v59 = vld [vmem:[%s1 + $0x34] sm:$0xf]
  %v60 = vld [vmem:[%s1 + $0x38] sm:$0xf]
  %v61 = vld [vmem:[%s1 + $0x3c] sm:$0xf]
  %v62 = vld [vmem:[%s1 + $0x40] sm:$0xf]
  %v63 = vld [vmem:[%s1 + $0x44] sm:$0xf]
  %v64 = vld [vmem:[%s1 + $0x48] sm:$0xf]
  %v65 = vld [vmem:[%s1 + $0x4c] sm:$0xf]
  %v66 = vld [vmem:[%s1 + $0x50] sm:$0xf]
  %v67 = vld [vmem:[%s1 + $0x54] sm:$0xf]
  %v68 = vld [vmem:[%s1 + $0x58] sm:$0xf]
  %v69 = vld [vmem:[%s1 + $0x5c] sm:$0xf]
  %v70 = vld [vmem:[%s1 + $0x60] sm:$0xf]
  %v71 = vld [vmem:[%s1 + $0x64] sm:$0xf]
  %v72 = vld [vmem:[%s1 + $0x68] sm:$0xf]
  %v73 = vld [vmem:[%s1 + $0x6c] sm:$0xf]
  %v74 = vld [vmem:[%s1 + $0x70] sm:$0xf]
  %v75 = vld [vmem:[%s1 + $0x74] sm:$0xf]
  %v76 = vld [vmem:[%s1 + $0x78] sm:$0xf]
  %v77 = vld [vmem:[%s1 + $0x7c] sm:$0xf]
  %v78 = vld [vmem:[%s1 + $0x80] sm:$0xf]
  %v79 = vld [vmem:[%s1 + $0x84] sm:$0xf]
  %v80 = vld [vmem:[%s1 + $0x88] sm:$0xf]
  %v81 = vld [vmem:[%s1 + $0x8c] sm:$0xf]
  %v82 = vld [vmem:[%s1 + $0x90] sm:$0xf]
  %v83 = vld [vmem:[%s1 + $0x94] sm:$0xf]
  %v84 = vld [vmem:[%s1 + $0x98] sm:$0xf]
  %v85 = vld [vmem:[%s1 + $0x9c] sm:$0xf]
  %v86 = vld [vmem:[%s1 + $0xa0] sm:$0xf]
  %v87 = vld [vmem:[%s1 + $0xa4] sm:$0xf]
  %v88 = vld [vmem:[%s1 + $0xa8] sm:$0xf]
  %v89 = vld [vmem:[%s1 + $0xac] sm:$0xf]
  %v90 = vld [vmem:[%s1 + $0xb0] sm:$0xf]
  %v91 = vld [vmem:[%s1 + $0xb4] sm:$0xf]
  %v92 = vld [vmem:[%s1 + $0xb8] sm:$0xf]
  %v93 = vld [vmem:[%s1 + $0xbc] sm:$0xf]
  %v94 = vld [vmem:[%s1 + $0xc0] sm:$0xf]
  %v95 = vld [vmem:[%s1 + $0xc4] sm:$0xf]
  %v96 = vld [vmem:[%s1 + $0xc8] sm:$0xf]
  %v97 = vld [vmem:[%s1 + $0xcc] sm:$0xf]
  %v98 = vld [vmem:[%s1 + $0xd0] sm:$0xf]
  %v99 = vld [vmem:[%s1 + $0xd4] sm:$0xf]
  %v100 = vld [vmem:[%s1 + $0xd8] sm:$0xf]
  %v101 = vld [vmem:[%s1 + $0xdc] sm:$0xf]
  %v102 = vld [vmem:[%s1 + $0xe0] sm:$0xf]
  %v103 = vld [vmem:[%s1 + $0xe4] sm:$0xf]
  %v104 = vld [vmem:[%s1 + $0xe8] sm:$0xf]
  %v105 = vld [vmem:[%s1 + $0xec] sm:$0xf]
  %v106 = vld [vmem:[%s1 + $0xf0] sm:$0xf]
  %v107 = vld [vmem:[%s1 + $0xf4] sm:$0xf]
  %v108 = vld [vmem:[%s1 + $0xf8] sm:$0xf]
  %v109 = vld [vmem:[%s1 + $0xfc] sm:$0xf]
  %v110 = vld [vmem:[%s1 + $0x100] sm:$0xf]
  %v111 = vld [vmem:[%s1 + $0x104] sm:$0xf]
  %v112 = vld [vmem:[%s1 + $0x108] sm:$0xf]
  %v113 = vld [vmem:[%s1 + $0x10c] sm:$0xf]
  %v114 = vld [vmem:[%s1 + $0x110] sm:$0xf]
  %v115 = vld [vmem:[%s1 + $0x114] sm:$0xf]
  %v116 = vld [vmem:[%s1 + $0x118] sm:$0xf]
  %v117 = vld [vmem:[%s1 + $0x11c] sm:$0xf]
  %v118 = vld [vmem:[%s1 + $0x120] sm:$0xf]
  %v119 = vld [vmem:[%s1 + $0x124] sm:$0xf]
  %v120 = vld [vmem:[%s1 + $0x128] sm:$0xf]
  %v121 = vld [vmem:[%s1 + $0x12c] sm:$0xf]
  %v122 = vld [vmem:[%s1 + $0x130] sm:$0xf]
  %v123 = vld [vmem:[%s1 + $0x134] sm:$0xf]
  %v124 = vld [vmem:[%s1 + $0x138] sm:$0xf]
  %v125 = vld [vmem:[%s1 + $0x13c] sm:$0xf]
  %v126 = vld [vmem:[%s1 + $0x140] sm:$0xf]
  %v127 = vld [vmem:[%s1 + $0x144] sm:$0xf]
  %v128 = vld [vmem:[%s1 + $0x148] sm:$0xf]
  %v129 = vld [vmem:[%s1 + $0x14c] sm:$0xf]
  %v130 = vld [vmem:[%s1 + $0x150] sm:$0xf]
  %v131 = vld [vmem:[%s1 + $0x154] sm:$0xf]
  %v132 = vld [vmem:[%s1 + $0x158] sm:$0xf]
  %v133 = vld [vmem:[%s1 + $0x15c] sm:$0xf]
  %v134 = vld [vmem:[%s1 + $0x160] sm:$0xf]
  %v135 = vld [vmem:[%s1 + $0x164] sm:$0xf]
  %v136 = vld [vmem:[%s1 + $0x168] sm:$0xf]
  %v137 = vld [vmem:[%s1 + $0x16c] sm:$0xf]
  %v138 = vld [vmem:[%s1 + $0x170] sm:$0xf]
  %v139 = vld [vmem:[%s1 + $0x174] sm:$0xf]
  %v140 = vld [vmem:[%s1 + $0x178] sm:$0xf]
  %v141 = vld [vmem:[%s1 + $0x17c] sm:$0xf]
  %v142 = vld [vmem:[%s1 + $0x180] sm:$0xf]
  %v143 = vld [vmem:[%s1 + $0x184] sm:$0xf]
  %v144 = vld [vmem:[%s1 + $0x188] sm:$0xf]
  %v145 = vld [vmem:[%s1 + $0x18c] sm:$0xf]
  %v146 = vld [vmem:[%s1 + $0x190] sm:$0xf]
  %v147 = vld [vmem:[%s1 + $0x194] sm:$0xf]
  %v148 = vld [vmem:[%s1 + $0x198] sm:$0xf]
  %v149 = vld [vmem:[%s1 + $0x19c] sm:$0xf]
  %v150 = vld [vmem:[%s1 + $0x1a0] sm:$0xf]
  %v151 = vld [vmem:[%s1 + $0x1a4] sm:$0xf]
  %v152 = vld [vmem:[%s1 + $0x1a8] sm:$0xf]
  %v153 = vld [vmem:[%s1 + $0x1ac] sm:$0xf]
  %v154 = vld [vmem:[%s1 + $0x1b0] sm:$0xf]
  %v155 = vld [vmem:[%s1 + $0x1b4] sm:$0xf]
  %v156 = vld [vmem:[%s1 + $0x1b8] sm:$0xf]
  %v157 = vld [vmem:[%s1 + $0x1bc] sm:$0xf]
  %v158 = vld [vmem:[%s1 + $0x1c0] sm:$0xf]
  %v159 = vld [vmem:[%s1 + $0x1c4] sm:$0xf]
  %v160 = vld [vmem:[%s1 + $0x1c8] sm:$0xf]
  %v161 = vld [vmem:[%s1 + $0x1cc] sm:$0xf]
  %v162 = vld [vmem:[%s1 + $0x1d0] sm:$0xf]
  %v163 = vld [vmem:[%s1 + $0x1d4] sm:$0xf]
  %v164 = vld [vmem:[%s1 + $0x1d8] sm:$0xf]
  %v165 = vld [vmem:[%s1 + $0x1dc] sm:$0xf]
  %v166 = vld [vmem:[%s1 + $0x1e0] sm:$0xf]
  %v167 = vld [vmem:[%s1 + $0x1e4] sm:$0xf]
  %v168 = vld [vmem:[%s1 + $0x1e8] sm:$0xf]
  %v169 = vld [vmem:[%s1 + $0x1ec] sm:$0xf]
  %v170 = vld [vmem:[%s1 + $0x1f0] sm:$0xf]
  %v171 = vld [vmem:[%s1 + $0x1f4] sm:$0xf]
  %v172 = vld [vmem:[%s1 + $0x1f8] sm:$0xf]
  %v173 = vld [vmem:[%s1 + $0x1fc] sm:$0xf]
  %v174 = vld [vmem:[%s1 + $0x200] sm:$0xf]
  %v175 = vld [vmem:[%s1 + $0x204] sm:$0xf]
  %v176 = vld [vmem:[%s1 + $0x208] sm:$0xf]
  %v177 = vld [vmem:[%s1 + $0x20c] sm:$0xf]
  %v178 = vld [vmem:[%s1 + $0x210] sm:$0xf]
  %v179 = vld [vmem:[%s1 + $0x214] sm:$0xf]
  %v180 = vld [vmem:[%s1 + $0x218] sm:$0xf]
  %v181 = vld [vmem:[%s1 + $0x21c] sm:$0xf]
  %v182 = vld [vmem:[%s1 + $0x220] sm:$0xf]
  %v183 = vld [vmem:[%s1 + $0x224] sm:$0xf]
  %v184 = vld [vmem:[%s1 + $0x228] sm:$0xf]
  %v185 = vld [vmem:[%s1 + $0x22c] sm:$0xf]
  %v186 = vld [vmem:[%s1 + $0x230] sm:$0xf]
  %v187 = vld [vmem:[%s1 + $0x234] sm:$0xf]
  %v188 = vld [vmem:[%s1 + $0x238] sm:$0xf]
  %v189 = vld [vmem:[%s1 + $0x23c] sm:$0xf]
  %v190 = vld [vmem:[%s1 + $0x240] sm:$0xf]
  %v191 = vld [vmem:[%s1 + $0x244] sm:$0xf]
  %v192 = vld [vmem:[%s1 + $0x248] sm:$0xf]
  %v193 = vld [vmem:[%s1 + $0x24c] sm:$0xf]
  %v194 = vld [vmem:[%s1 + $0x250] sm:$0xf]
  %v195 = vld [vmem:[%s1 + $0x254] sm:$0xf]
  %v196 = vld [vmem:[%s1 + $0x258] sm:$0xf]
  %v197 = vld [vmem:[%s1 + $0x25c] sm:$0xf]
  %v198 = vld [vmem:[%s1 + $0x260] sm:$0xf]
  %v199 = vld [vmem:[%s1 + $0x264] sm:$0xf]
  %v200 = vld [vmem:[%s1 + $0x268] sm:$0xf]
  %v201 = vld [vmem:[%s1 + $0x26c] sm:$0xf]
  %v202 = vld [vmem:[%s1 + $0x270] sm:$0xf]
  %v203 = vld [vmem:[%s1 + $0x274] sm:$0xf]
  %v204 = vld [vmem:[%s1 + $0x278] sm:$0xf]
  %v205 = vld [vmem:[%s1 + $0x27c] sm:$0xf]
  %v206 = vld [vmem:[%s1 + $0x280] sm:$0xf]
  %v207 = vld [vmem:[%s1 + $0x284] sm:$0xf]
  %v208 = vld [vmem:[%s1 + $0x288] sm:$0xf]
  %v209 = vld [vmem:[%s1 + $0x28c] sm:$0xf]
  %v210 = vld [vmem:[%s1 + $0x290] sm:$0xf]
  %v211 = vld [vmem:[%s1 + $0x294] sm:$0xf]
  %v212 = vld [vmem:[%s1 + $0x298] sm:$0xf]
  %v213 = vld [vmem:[%s1 + $0x29c] sm:$0xf]
  %v214 = vld [vmem:[%s1 + $0x2a0] sm:$0xf]
  %v215 = vld [vmem:[%s1 + $0x2a4] sm:$0xf]
  %v216 = vld [vmem:[%s1 + $0x2a8] sm:$0xf]
  %v217 = vld [vmem:[%s1 + $0x2ac] sm:$0xf]
  %v218 = vld [vmem:[%s1 + $0x2b0] sm:$0xf]
  %v219 = vld [vmem:[%s1 + $0x2b4] sm:$0xf]
  %v220 = vld [vmem:[%s1 + $0x2b8] sm:$0xf]
  %v221 = vld [vmem:[%s1 + $0x2bc] sm:$0xf]
  %v222 = vld [vmem:[%s1 + $0x2c0] sm:$0xf]
  %v223 = vld [vmem:[%s1 + $0x2c4] sm:$0xf]
  %v224 = vld [vmem:[%s1 + $0x2c8] sm:$0xf]
  %v225 = vld [vmem:[%s1 + $0x2cc] sm:$0xf]
  %v226 = vld [vmem:[%s1 + $0x2d0] sm:$0xf]
  %v227 = vld [vmem:[%s1 + $0x2d4] sm:$0xf]
  %v228 = vld [vmem:[%s1 + $0x2d8] sm:$0xf]
  %v229 = vld [vmem:[%s1 + $0x2dc] sm:$0xf]
  %v230 = vld [vmem:[%s1 + $0x2e0] sm:$0xf]
  %v231 = vld [vmem:[%s1 + $0x2e4] sm:$0xf]
  %v232 = vld [vmem:[%s1 + $0x2e8] sm:$0xf]
  %v233 = vld [vmem:[%s1 + $0x2ec] sm:$0xf]
  %v234 = vld [vmem:[%s1 + $0x2f0] sm:$0xf]
  %v235 = vld [vmem:[%s1 + $0x2f4] sm:$0xf]
  %v236 = vld [vmem:[%s1 + $0x2f8] sm:$0xf]
  %v237 = vld [vmem:[%s1 + $0x2fc] sm:$0xf]
  %v238 = vld [vmem:[%s1 + $0x300] sm:$0xf]
  %v239 = vld [vmem:[%s1 + $0x304] sm:$0xf]
  %v240 = vld [vmem:[%s1 + $0x308] sm:$0xf]
  %v241 = vld [vmem:[%s1 + $0x30c] sm:$0xf]
  %v242 = vld [vmem:[%s1 + $0x310] sm:$0xf]
  %v243 = vld [vmem:[%s1 + $0x314] sm:$0xf]
  %v244 = vld [vmem:[%s1 + $0x318] sm:$0xf]
  %v245 = vld [vmem:[%s1 + $0x31c] sm:$0xf]
  %v246 = vld [vmem:[%s1 + $0x320] sm:$0xf]
  %v247 = vld [vmem:[%s1 + $0x324] sm:$0xf]
  %v248 = vld [vmem:[%s1 + $0x328] sm:$0xf]
  %v249 = vld [vmem:[%s1 + $0x32c] sm:$0xf]
  %v250 = vld [vmem:[%s1 + $0x330] sm:$0xf]
  %v251 = vld [vmem:[%s1 + $0x334] sm:$0xf]
  %v252 = vld [vmem:[%s1 + $0x338] sm:$0xf]
  %v253 = vld [vmem:[%s1 + $0x33c] sm:$0xf]
  %v254 = vld [vmem:[%s1 + $0x340] sm:$0xf]
  %v255 = vld [vmem:[%s1 + $0x344] sm:$0xf]
  %v256 = vld [vmem:[%s1 + $0x348] sm:$0xf]
  %v257 = vld [vmem:[%s1 + $0x34c] sm:$0xf]
  %v258 = vld [vmem:[%s1 + $0x350] sm:$0xf]
  %v259 = vld [vmem:[%s1 + $0x354] sm:$0xf]
  %v260 = vld [vmem:[%s1 + $0x358] sm:$0xf]
  %v261 = vld [vmem:[%s1 + $0x35c] sm:$0xf]
  %v262 = vld [vmem:[%s1 + $0x360] sm:$0xf]
  %v263 = vld [vmem:[%s1 + $0x364] sm:$0xf]
  %v264 = vld [vmem:[%s1 + $0x368] sm:$0xf]
  %v265 = vld [vmem:[%s1 + $0x36c] sm:$0xf]
  %v266 = vld [vmem:[%s1 + $0x370] sm:$0xf]
  %v267 = vld [vmem:[%s1 + $0x374] sm:$0xf]
  %v268 = vld [vmem:[%s1 + $0x378] sm:$0xf]
  %v269 = vld [vmem:[%s1 + $0x37c] sm:$0xf]
  %v270 = vld [vmem:[%s1 + $0x380] sm:$0xf]
  %v271 = vld [vmem:[%s1 + $0x384] sm:$0xf]
  %v272 = vld [vmem:[%s1 + $0x388] sm:$0xf]
  %v273 = vld [vmem:[%s1 + $0x38c] sm:$0xf]
  %v274 = vld [vmem:[%s1 + $0x390] sm:$0xf]
  %v275 = vld [vmem:[%s1 + $0x394] sm:$0xf]
  %v276 = vld [vmem:[%s1 + $0x398] sm:$0xf]
  %v277 = vld [vmem:[%s1 + $0x39c] sm:$0xf]
  %v278 = vld [vmem:[%s1 + $0x3a0] sm:$0xf]
  %v279 = vld [vmem:[%s1 + $0x3a4] sm:$0xf]
  %v280 = vld [vmem:[%s1 + $0x3a8] sm:$0xf]
  %v281 = vld [vmem:[%s1 + $0x3ac] sm:$0xf]
  %v282 = vld [vmem:[%s1 + $0x3b0] sm:$0xf]
  %v283 = vld [vmem:[%s1 + $0x3b4] sm:$0xf]
  %v284 = vld [vmem:[%s1 + $0x3b8] sm:$0xf]
  %v285 = vld [vmem:[%s1 + $0x3bc] sm:$0xf]
  %v286 = vld [vmem:[%s1 + $0x3c0] sm:$0xf]
  %v287 = vld [vmem:[%s1 + $0x3c4] sm:$0xf]
  %v288 = vld [vmem:[%s1 + $0x3c8] sm:$0xf]
  %v289 = vld [vmem:[%s1 + $0x3cc] sm:$0xf]
  %v290 = vld [vmem:[%s1 + $0x3d0] sm:$0xf]
  %v291 = vld [vmem:[%s1 + $0x3d4] sm:$0xf]
  %v292 = vld [vmem:[%s1 + $0x3d8] sm:$0xf]
  %v293 = vld [vmem:[%s1 + $0x3dc] sm:$0xf]
  %v294 = vld [vmem:[%s1 + $0x3e0] sm:$0xf]
  %v295 = vld [vmem:[%s1 + $0x3e4] sm:$0xf]
  %v296 = vld [vmem:[%s1 + $0x3e8] sm:$0xf]
  %v297 = vld [vmem:[%s1 + $0x3ec] sm:$0xf]
  %v298 = vld [vmem:[%s1 + $0x3f0] sm:$0xf]
  %v299 = vld [vmem:[%s1 + $0x3f4] sm:$0xf]
  %v300 = vld [vmem:[%s1 + $0x3f8] sm:$0xf]
  %v301 = vld [vmem:[%s1 + $0x3fc] sm:$0xf]
  %v302 = vld [vmem:[%s2] sm:$0x1]
  %v304 = vperm.slane %v302, 0
  %v338 = vunpack.c.l.b16 %v14
  %v339 = vunpack.c.h.b16 %v14
  %v340 = vunpack.c.l.b16 %v15
  %v341 = vunpack.c.h.b16 %v15
  %v342 = vunpack.c.l.b16 %v16
  %v343 = vunpack.c.h.b16 %v16
  %v344 = vunpack.c.l.b16 %v17
  %v345 = vunpack.c.h.b16 %v17
  %v346 = vunpack.c.l.b16 %v18
  %v347 = vunpack.c.h.b16 %v18
  %v348 = vunpack.c.l.b16 %v19
  %v349 = vunpack.c.h.b16 %v19
  %v350 = vunpack.c.l.b16 %v20
  %v351 = vunpack.c.h.b16 %v20
  %v352 = vunpack.c.l.b16 %v21
  %v353 = vunpack.c.h.b16 %v21
  %v354 = vunpack.c.l.b16 %v22
  %v355 = vunpack.c.h.b16 %v22
  %v356 = vunpack.c.l.b16 %v23
  %v357 = vunpack.c.h.b16 %v23
  %v358 = vunpack.c.l.b16 %v24
  %v359 = vunpack.c.h.b16 %v24
  %v360 = vunpack.c.l.b16 %v25
  %v361 = vunpack.c.h.b16 %v25
  %v362 = vunpack.c.l.b16 %v26
  %v363 = vunpack.c.h.b16 %v26
  %v364 = vunpack.c.l.b16 %v27
  %v365 = vunpack.c.h.b16 %v27
  %v366 = vunpack.c.l.b16 %v28
  %v367 = vunpack.c.h.b16 %v28
  %v368 = vunpack.c.l.b16 %v29
  %v369 = vunpack.c.h.b16 %v29
  %v370 = vunpack.c.l.b16 %v30
  %v371 = vunpack.c.h.b16 %v30
  %v372 = vunpack.c.l.b16 %v31
  %v373 = vunpack.c.h.b16 %v31
  %v374 = vunpack.c.l.b16 %v32
  %v375 = vunpack.c.h.b16 %v32
  %v376 = vunpack.c.l.b16 %v33
  %v377 = vunpack.c.h.b16 %v33
  %v378 = vunpack.c.l.b16 %v34
  %v379 = vunpack.c.h.b16 %v34
  %v380 = vunpack.c.l.b16 %v35
  %v381 = vunpack.c.h.b16 %v35
  %v382 = vunpack.c.l.b16 %v36
  %v383 = vunpack.c.h.b16 %v36
  %v384 = vunpack.c.l.b16 %v37
  %v385 = vunpack.c.h.b16 %v37
  %v386 = vunpack.c.l.b16 %v38
  %v387 = vunpack.c.h.b16 %v38
  %v388 = vunpack.c.l.b16 %v39
  %v389 = vunpack.c.h.b16 %v39
  %v390 = vunpack.c.l.b16 %v40
  %v391 = vunpack.c.h.b16 %v40
  %v392 = vunpack.c.l.b16 %v41
  %v393 = vunpack.c.h.b16 %v41
  %v394 = vunpack.c.l.b16 %v42
  %v395 = vunpack.c.h.b16 %v42
  %v396 = vunpack.c.l.b16 %v43
  %v397 = vunpack.c.h.b16 %v43
  %v398 = vunpack.c.l.b16 %v44
  %v399 = vunpack.c.h.b16 %v44
  %v400 = vunpack.c.l.b16 %v45
  %v401 = vunpack.c.h.b16 %v45
  %v402 = vpack.c.b16 %v354, %v338
  %v403 = vpack.c.b16 %v355, %v339
  %v404 = vpack.c.b16 %v356, %v340
  %v405 = vpack.c.b16 %v357, %v341
  %v406 = vpack.c.b16 %v358, %v342
  %v407 = vpack.c.b16 %v359, %v343
  %v408 = vpack.c.b16 %v360, %v344
  %v409 = vpack.c.b16 %v361, %v345
  %v410 = vpack.c.b16 %v362, %v346
  %v411 = vpack.c.b16 %v363, %v347
  %v412 = vpack.c.b16 %v364, %v348
  %v413 = vpack.c.b16 %v365, %v349
  %v414 = vpack.c.b16 %v366, %v350
  %v415 = vpack.c.b16 %v367, %v351
  %v416 = vpack.c.b16 %v368, %v352
  %v417 = vpack.c.b16 %v369, %v353
  %v418 = vpack.c.b16 %v386, %v370
  %v419 = vpack.c.b16 %v387, %v371
  %v420 = vpack.c.b16 %v388, %v372
  %v421 = vpack.c.b16 %v389, %v373
  %v422 = vpack.c.b16 %v390, %v374
  %v423 = vpack.c.b16 %v391, %v375
  %v424 = vpack.c.b16 %v392, %v376
  %v425 = vpack.c.b16 %v393, %v377
  %v426 = vpack.c.b16 %v394, %v378
  %v427 = vpack.c.b16 %v395, %v379
  %v428 = vpack.c.b16 %v396, %v380
  %v429 = vpack.c.b16 %v397, %v381
  %v430 = vpack.c.b16 %v398, %v382
  %v431 = vpack.c.b16 %v399, %v383
  %v432 = vpack.c.b16 %v400, %v384
  %v433 = vpack.c.b16 %v401, %v385
  %v722 = vunpack.c.l.b16 %v46
  %v723 = vunpack.c.l.b16 %v47
  %v724 = vunpack.c.l.b16 %v48
  %v725 = vunpack.c.l.b16 %v49
  %v726 = vunpack.c.l.b16 %v50
  %v727 = vunpack.c.l.b16 %v51
  %v728 = vunpack.c.l.b16 %v52
  %v729 = vunpack.c.l.b16 %v53
  %v730 = vunpack.c.l.b16 %v54
  %v731 = vunpack.c.l.b16 %v55
  %v732 = vunpack.c.l.b16 %v56
  %v733 = vunpack.c.l.b16 %v57
  %v734 = vunpack.c.l.b16 %v58
  %v735 = vunpack.c.l.b16 %v59
  %v736 = vunpack.c.l.b16 %v60
  %v737 = vunpack.c.l.b16 %v61
  %v738 = vunpack.c.l.b16 %v62
  %v739 = vunpack.c.l.b16 %v63
  %v740 = vunpack.c.l.b16 %v64
  %v741 = vunpack.c.l.b16 %v65
  %v742 = vunpack.c.l.b16 %v66
  %v743 = vunpack.c.l.b16 %v67
  %v744 = vunpack.c.l.b16 %v68
  %v745 = vunpack.c.l.b16 %v69
  %v746 = vunpack.c.l.b16 %v70
  %v747 = vunpack.c.l.b16 %v71
  %v748 = vunpack.c.l.b16 %v72
  %v749 = vunpack.c.l.b16 %v73
  %v750 = vunpack.c.l.b16 %v74
  %v751 = vunpack.c.l.b16 %v75
  %v752 = vunpack.c.l.b16 %v76
  %v753 = vunpack.c.l.b16 %v77
  %v754 = vunpack.c.l.b16 %v78
  %v755 = vunpack.c.l.b16 %v79
  %v756 = vunpack.c.l.b16 %v80
  %v757 = vunpack.c.l.b16 %v81
  %v758 = vunpack.c.l.b16 %v82
  %v759 = vunpack.c.l.b16 %v83
  %v760 = vunpack.c.l.b16 %v84
  %v761 = vunpack.c.l.b16 %v85
  %v762 = vunpack.c.l.b16 %v86
  %v763 = vunpack.c.l.b16 %v87
  %v764 = vunpack.c.l.b16 %v88
  %v765 = vunpack.c.l.b16 %v89
  %v766 = vunpack.c.l.b16 %v90
  %v767 = vunpack.c.l.b16 %v91
  %v768 = vunpack.c.l.b16 %v92
  %v769 = vunpack.c.l.b16 %v93
  %v770 = vunpack.c.l.b16 %v94
  %v771 = vunpack.c.l.b16 %v95
  %v772 = vunpack.c.l.b16 %v96
  %v773 = vunpack.c.l.b16 %v97
  %v774 = vunpack.c.l.b16 %v98
  %v775 = vunpack.c.l.b16 %v99
  %v776 = vunpack.c.l.b16 %v100
  %v777 = vunpack.c.l.b16 %v101
  %v778 = vunpack.c.l.b16 %v102
  %v779 = vunpack.c.l.b16 %v103
  %v780 = vunpack.c.l.b16 %v104
  %v781 = vunpack.c.l.b16 %v105
  %v782 = vunpack.c.l.b16 %v106
  %v783 = vunpack.c.l.b16 %v107
  %v784 = vunpack.c.l.b16 %v108
  %v785 = vunpack.c.l.b16 %v109
  %v786 = vunpack.c.l.b16 %v110
  %v787 = vunpack.c.l.b16 %v111
  %v788 = vunpack.c.l.b16 %v112
  %v789 = vunpack.c.l.b16 %v113
  %v790 = vunpack.c.l.b16 %v114
  %v791 = vunpack.c.l.b16 %v115
  %v792 = vunpack.c.l.b16 %v116
  %v793 = vunpack.c.l.b16 %v117
  %v794 = vunpack.c.l.b16 %v118
  %v795 = vunpack.c.l.b16 %v119
  %v796 = vunpack.c.l.b16 %v120
  %v797 = vunpack.c.l.b16 %v121
  %v798 = vunpack.c.l.b16 %v122
  %v799 = vunpack.c.l.b16 %v123
  %v800 = vunpack.c.l.b16 %v124
  %v801 = vunpack.c.l.b16 %v125
  %v802 = vunpack.c.l.b16 %v126
  %v803 = vunpack.c.l.b16 %v127
  %v804 = vunpack.c.l.b16 %v128
  %v805 = vunpack.c.l.b16 %v129
  %v806 = vunpack.c.l.b16 %v130
  %v807 = vunpack.c.l.b16 %v131
  %v808 = vunpack.c.l.b16 %v132
  %v809 = vunpack.c.l.b16 %v133
  %v810 = vunpack.c.l.b16 %v134
  %v811 = vunpack.c.l.b16 %v135
  %v812 = vunpack.c.l.b16 %v136
  %v813 = vunpack.c.l.b16 %v137
  %v814 = vunpack.c.l.b16 %v138
  %v815 = vunpack.c.l.b16 %v139
  %v816 = vunpack.c.l.b16 %v140
  %v817 = vunpack.c.l.b16 %v141
  %v818 = vunpack.c.l.b16 %v142
  %v819 = vunpack.c.l.b16 %v143
  %v820 = vunpack.c.l.b16 %v144
  %v821 = vunpack.c.l.b16 %v145
  %v822 = vunpack.c.l.b16 %v146
  %v823 = vunpack.c.l.b16 %v147
  %v824 = vunpack.c.l.b16 %v148
  %v825 = vunpack.c.l.b16 %v149
  %v826 = vunpack.c.l.b16 %v150
  %v827 = vunpack.c.l.b16 %v151
  %v828 = vunpack.c.l.b16 %v152
  %v829 = vunpack.c.l.b16 %v153
  %v830 = vunpack.c.l.b16 %v154
  %v831 = vunpack.c.l.b16 %v155
  %v832 = vunpack.c.l.b16 %v156
  %v833 = vunpack.c.l.b16 %v157
  %v834 = vunpack.c.l.b16 %v158
  %v835 = vunpack.c.l.b16 %v159
  %v836 = vunpack.c.l.b16 %v160
  %v837 = vunpack.c.l.b16 %v161
  %v838 = vunpack.c.l.b16 %v162
  %v839 = vunpack.c.l.b16 %v163
  %v840 = vunpack.c.l.b16 %v164
  %v841 = vunpack.c.l.b16 %v165
  %v842 = vunpack.c.l.b16 %v166
  %v843 = vunpack.c.l.b16 %v167
  %v844 = vunpack.c.l.b16 %v168
  %v845 = vunpack.c.l.b16 %v169
  %v846 = vunpack.c.l.b16 %v170
  %v847 = vunpack.c.l.b16 %v171
  %v848 = vunpack.c.l.b16 %v172
  %v849 = vunpack.c.l.b16 %v173
  %v850 = vunpack.c.l.b16 %v174
  %v851 = vunpack.c.l.b16 %v175
  %v852 = vunpack.c.l.b16 %v176
  %v853 = vunpack.c.l.b16 %v177
  %v854 = vunpack.c.l.b16 %v178
  %v855 = vunpack.c.l.b16 %v179
  %v856 = vunpack.c.l.b16 %v180
  %v857 = vunpack.c.l.b16 %v181
  %v858 = vunpack.c.l.b16 %v182
  %v859 = vunpack.c.l.b16 %v183
  %v860 = vunpack.c.l.b16 %v184
  %v861 = vunpack.c.l.b16 %v185
  %v862 = vunpack.c.l.b16 %v186
  %v863 = vunpack.c.l.b16 %v187
  %v864 = vunpack.c.l.b16 %v188
  %v865 = vunpack.c.l.b16 %v189
  %v866 = vunpack.c.l.b16 %v190
  %v867 = vunpack.c.l.b16 %v191
  %v868 = vunpack.c.l.b16 %v192
  %v869 = vunpack.c.l.b16 %v193
  %v870 = vunpack.c.l.b16 %v194
  %v871 = vunpack.c.l.b16 %v195
  %v872 = vunpack.c.l.b16 %v196
  %v873 = vunpack.c.l.b16 %v197
  %v874 = vunpack.c.l.b16 %v198
  %v875 = vunpack.c.l.b16 %v199
  %v876 = vunpack.c.l.b16 %v200
  %v877 = vunpack.c.l.b16 %v201
  %v878 = vunpack.c.l.b16 %v202
  %v879 = vunpack.c.l.b16 %v203
  %v880 = vunpack.c.l.b16 %v204
  %v881 = vunpack.c.l.b16 %v205
  %v882 = vunpack.c.l.b16 %v206
  %v883 = vunpack.c.l.b16 %v207
  %v884 = vunpack.c.l.b16 %v208
  %v885 = vunpack.c.l.b16 %v209
  %v886 = vunpack.c.l.b16 %v210
  %v887 = vunpack.c.l.b16 %v211
  %v888 = vunpack.c.l.b16 %v212
  %v889 = vunpack.c.l.b16 %v213
  %v890 = vunpack.c.l.b16 %v214
  %v891 = vunpack.c.l.b16 %v215
  %v892 = vunpack.c.l.b16 %v216
  %v893 = vunpack.c.l.b16 %v217
  %v894 = vunpack.c.l.b16 %v218
  %v895 = vunpack.c.l.b16 %v219
  %v896 = vunpack.c.l.b16 %v220
  %v897 = vunpack.c.l.b16 %v221
  %v898 = vunpack.c.l.b16 %v222
  %v899 = vunpack.c.l.b16 %v223
  %v900 = vunpack.c.l.b16 %v224
  %v901 = vunpack.c.l.b16 %v225
  %v902 = vunpack.c.l.b16 %v226
  %v903 = vunpack.c.l.b16 %v227
  %v904 = vunpack.c.l.b16 %v228
  %v905 = vunpack.c.l.b16 %v229
  %v906 = vunpack.c.l.b16 %v230
  %v907 = vunpack.c.l.b16 %v231
  %v908 = vunpack.c.l.b16 %v232
  %v909 = vunpack.c.l.b16 %v233
  %v910 = vunpack.c.l.b16 %v234
  %v911 = vunpack.c.l.b16 %v235
  %v912 = vunpack.c.l.b16 %v236
  %v913 = vunpack.c.l.b16 %v237
  %v914 = vunpack.c.l.b16 %v238
  %v915 = vunpack.c.l.b16 %v239
  %v916 = vunpack.c.l.b16 %v240
  %v917 = vunpack.c.l.b16 %v241
  %v918 = vunpack.c.l.b16 %v242
  %v919 = vunpack.c.l.b16 %v243
  %v920 = vunpack.c.l.b16 %v244
  %v921 = vunpack.c.l.b16 %v245
  %v922 = vunpack.c.l.b16 %v246
  %v923 = vunpack.c.l.b16 %v247
  %v924 = vunpack.c.l.b16 %v248
  %v925 = vunpack.c.l.b16 %v249
  %v926 = vunpack.c.l.b16 %v250
  %v927 = vunpack.c.l.b16 %v251
  %v928 = vunpack.c.l.b16 %v252
  %v929 = vunpack.c.l.b16 %v253
  %v930 = vunpack.c.l.b16 %v254
  %v931 = vunpack.c.l.b16 %v255
  %v932 = vunpack.c.l.b16 %v256
  %v933 = vunpack.c.l.b16 %v257
  %v934 = vunpack.c.l.b16 %v258
  %v935 = vunpack.c.l.b16 %v259
  %v936 = vunpack.c.l.b16 %v260
  %v937 = vunpack.c.l.b16 %v261
  %v938 = vunpack.c.l.b16 %v262
  %v939 = vunpack.c.l.b16 %v263
  %v940 = vunpack.c.l.b16 %v264
  %v941 = vunpack.c.l.b16 %v265
  %v942 = vunpack.c.l.b16 %v266
  %v943 = vunpack.c.l.b16 %v267
  %v944 = vunpack.c.l.b16 %v268
  %v945 = vunpack.c.l.b16 %v269
  %v946 = vunpack.c.l.b16 %v270
  %v947 = vunpack.c.l.b16 %v271
  %v948 = vunpack.c.l.b16 %v272
  %v949 = vunpack.c.l.b16 %v273
  %v950 = vunpack.c.l.b16 %v274
  %v951 = vunpack.c.l.b16 %v275
  %v952 = vunpack.c.l.b16 %v276
  %v953 = vunpack.c.l.b16 %v277
  %v954 = vunpack.c.l.b16 %v278
  %v955 = vunpack.c.l.b16 %v279
  %v956 = vunpack.c.l.b16 %v280
  %v957 = vunpack.c.l.b16 %v281
  %v958 = vunpack.c.l.b16 %v282
  %v959 = vunpack.c.l.b16 %v283
  %v960 = vunpack.c.l.b16 %v284
  %v961 = vunpack.c.l.b16 %v285
  %v962 = vunpack.c.l.b16 %v286
  %v963 = vunpack.c.l.b16 %v287
  %v964 = vunpack.c.l.b16 %v288
  %v965 = vunpack.c.l.b16 %v289
  %v966 = vunpack.c.l.b16 %v290
  %v967 = vunpack.c.l.b16 %v291
  %v968 = vunpack.c.l.b16 %v292
  %v969 = vunpack.c.l.b16 %v293
  %v970 = vunpack.c.l.b16 %v294
  %v971 = vunpack.c.l.b16 %v295
  %v972 = vunpack.c.l.b16 %v296
  %v973 = vunpack.c.l.b16 %v297
  %v974 = vunpack.c.l.b16 %v298
  %v975 = vunpack.c.l.b16 %v299
  %v976 = vunpack.c.l.b16 %v300
  %v977 = vunpack.c.l.b16 %v301
  %v978 = vpack.c.b16 %v723, %v722
  %v979 = vpack.c.b16 %v725, %v724
  %v980 = vpack.c.b16 %v727, %v726
  %v981 = vpack.c.b16 %v729, %v728
  %v982 = vpack.c.b16 %v731, %v730
  %v983 = vpack.c.b16 %v733, %v732
  %v984 = vpack.c.b16 %v735, %v734
  %v985 = vpack.c.b16 %v737, %v736
  %v986 = vpack.c.b16 %v739, %v738
  %v987 = vpack.c.b16 %v741, %v740
  %v988 = vpack.c.b16 %v743, %v742
  %v989 = vpack.c.b16 %v745, %v744
  %v990 = vpack.c.b16 %v747, %v746
  %v991 = vpack.c.b16 %v749, %v748
  %v992 = vpack.c.b16 %v751, %v750
  %v993 = vpack.c.b16 %v753, %v752
  %v994 = vpack.c.b16 %v755, %v754
  %v995 = vpack.c.b16 %v757, %v756
  %v996 = vpack.c.b16 %v759, %v758
  %v997 = vpack.c.b16 %v761, %v760
  %v998 = vpack.c.b16 %v763, %v762
  %v999 = vpack.c.b16 %v765, %v764
  %v1000 = vpack.c.b16 %v767, %v766
  %v1001 = vpack.c.b16 %v769, %v768
  %v1002 = vpack.c.b16 %v771, %v770
  %v1003 = vpack.c.b16 %v773, %v772
  %v1004 = vpack.c.b16 %v775, %v774
  %v1005 = vpack.c.b16 %v777, %v776
  %v1006 = vpack.c.b16 %v779, %v778
  %v1007 = vpack.c.b16 %v781, %v780
  %v1008 = vpack.c.b16 %v783, %v782
  %v1009 = vpack.c.b16 %v785, %v784
  %v1010 = vpack.c.b16 %v787, %v786
  %v1011 = vpack.c.b16 %v789, %v788
  %v1012 = vpack.c.b16 %v791, %v790
  %v1013 = vpack.c.b16 %v793, %v792
  %v1014 = vpack.c.b16 %v795, %v794
  %v1015 = vpack.c.b16 %v797, %v796
  %v1016 = vpack.c.b16 %v799, %v798
  %v1017 = vpack.c.b16 %v801, %v800
  %v1018 = vpack.c.b16 %v803, %v802
  %v1019 = vpack.c.b16 %v805, %v804
  %v1020 = vpack.c.b16 %v807, %v806
  %v1021 = vpack.c.b16 %v809, %v808
  %v1022 = vpack.c.b16 %v811, %v810
  %v1023 = vpack.c.b16 %v813, %v812
  %v1024 = vpack.c.b16 %v815, %v814
  %v1025 = vpack.c.b16 %v817, %v816
  %v1026 = vpack.c.b16 %v819, %v818
  %v1027 = vpack.c.b16 %v821, %v820
  %v1028 = vpack.c.b16 %v823, %v822
  %v1029 = vpack.c.b16 %v825, %v824
  %v1030 = vpack.c.b16 %v827, %v826
  %v1031 = vpack.c.b16 %v829, %v828
  %v1032 = vpack.c.b16 %v831, %v830
  %v1033 = vpack.c.b16 %v833, %v832
  %v1034 = vpack.c.b16 %v835, %v834
  %v1035 = vpack.c.b16 %v837, %v836
  %v1036 = vpack.c.b16 %v839, %v838
  %v1037 = vpack.c.b16 %v841, %v840
  %v1038 = vpack.c.b16 %v843, %v842
  %v1039 = vpack.c.b16 %v845, %v844
  %v1040 = vpack.c.b16 %v847, %v846
  %v1041 = vpack.c.b16 %v849, %v848
  %v1042 = vpack.c.b16 %v851, %v850
  %v1043 = vpack.c.b16 %v853, %v852
  %v1044 = vpack.c.b16 %v855, %v854
  %v1045 = vpack.c.b16 %v857, %v856
  %v1046 = vpack.c.b16 %v859, %v858
  %v1047 = vpack.c.b16 %v861, %v860
  %v1048 = vpack.c.b16 %v863, %v862
  %v1049 = vpack.c.b16 %v865, %v864
  %v1050 = vpack.c.b16 %v867, %v866
  %v1051 = vpack.c.b16 %v869, %v868
  %v1052 = vpack.c.b16 %v871, %v870
  %v1053 = vpack.c.b16 %v873, %v872
  %v1054 = vpack.c.b16 %v875, %v874
  %v1055 = vpack.c.b16 %v877, %v876
  %v1056 = vpack.c.b16 %v879, %v878
  %v1057 = vpack.c.b16 %v881, %v880
  %v1058 = vpack.c.b16 %v883, %v882
  %v1059 = vpack.c.b16 %v885, %v884
  %v1060 = vpack.c.b16 %v887, %v886
  %v1061 = vpack.c.b16 %v889, %v888
  %v1062 = vpack.c.b16 %v891, %v890
  %v1063 = vpack.c.b16 %v893, %v892
  %v1064 = vpack.c.b16 %v895, %v894
  %v1065 = vpack.c.b16 %v897, %v896
  %v1066 = vpack.c.b16 %v899, %v898
  %v1067 = vpack.c.b16 %v901, %v900
  %v1068 = vpack.c.b16 %v903, %v902
  %v1069 = vpack.c.b16 %v905, %v904
  %v1070 = vpack.c.b16 %v907, %v906
  %v1071 = vpack.c.b16 %v909, %v908
  %v1072 = vpack.c.b16 %v911, %v910
  %v1073 = vpack.c.b16 %v913, %v912
  %v1074 = vpack.c.b16 %v915, %v914
  %v1075 = vpack.c.b16 %v917, %v916
  %v1076 = vpack.c.b16 %v919, %v918
  %v1077 = vpack.c.b16 %v921, %v920
  %v1078 = vpack.c.b16 %v923, %v922
  %v1079 = vpack.c.b16 %v925, %v924
  %v1080 = vpack.c.b16 %v927, %v926
  %v1081 = vpack.c.b16 %v929, %v928
  %v1082 = vpack.c.b16 %v931, %v930
  %v1083 = vpack.c.b16 %v933, %v932
  %v1084 = vpack.c.b16 %v935, %v934
  %v1085 = vpack.c.b16 %v937, %v936
  %v1086 = vpack.c.b16 %v939, %v938
  %v1087 = vpack.c.b16 %v941, %v940
  %v1088 = vpack.c.b16 %v943, %v942
  %v1089 = vpack.c.b16 %v945, %v944
  %v1090 = vpack.c.b16 %v947, %v946
  %v1091 = vpack.c.b16 %v949, %v948
  %v1092 = vpack.c.b16 %v951, %v950
  %v1093 = vpack.c.b16 %v953, %v952
  %v1094 = vpack.c.b16 %v955, %v954
  %v1095 = vpack.c.b16 %v957, %v956
  %v1096 = vpack.c.b16 %v959, %v958
  %v1097 = vpack.c.b16 %v961, %v960
  %v1098 = vpack.c.b16 %v963, %v962
  %v1099 = vpack.c.b16 %v965, %v964
  %v1100 = vpack.c.b16 %v967, %v966
  %v1101 = vpack.c.b16 %v969, %v968
  %v1102 = vpack.c.b16 %v971, %v970
  %v1103 = vpack.c.b16 %v973, %v972
  %v1104 = vpack.c.b16 %v975, %v974
  %v1105 = vpack.c.b16 %v977, %v976
  %1234 = vmatpush.bf16.msra.mxu0 %v985
  %1235 = vmatpush.bf16.msra.mxu0 %v984
  %1236 = vmatpush.bf16.msra.mxu0 %v983
  %1237 = vmatpush.bf16.msra.mxu0 %v982
  %1238 = vmatpush.bf16.msra.mxu0 %v981
  %1239 = vmatpush.bf16.msra.mxu0 %v980
  %1240 = vmatpush.bf16.msra.mxu0 %v979
  %1241 = vmatpush.bf16.msra.mxu0 %v978
  %1242 = vmatmul.bf16.gmra.mxu0 %v402
  %v1243 = vpop.f32.mrf.mxu0
  %v1244 = vadd.f32 %v304, %v1243
  %v1245 = vpop.f32.mrf.mxu0
  %v1246 = vadd.f32 %v304, %v1245
  %1247 = vmatmul.bf16.gmra.mxu0 %v418
  %v1248 = vpop.f32.mrf.mxu0
  %v1249 = vadd.f32 %v304, %v1248
  %v1250 = vpop.f32.mrf.mxu0
  %v1251 = vadd.f32 %v304, %v1250
  %1252 = vdwg.mxu0
  %1253 = vmatpush.bf16.msra.mxu0 %v993
  %1254 = vmatpush.bf16.msra.mxu0 %v992
  %1255 = vmatpush.bf16.msra.mxu0 %v991
  %1256 = vmatpush.bf16.msra.mxu0 %v990
  %1257 = vmatpush.bf16.msra.mxu0 %v989
  %1258 = vmatpush.bf16.msra.mxu0 %v988
  %1259 = vmatpush.bf16.msra.mxu0 %v987
  %1260 = vmatpush.bf16.msra.mxu0 %v986
  %1261 = vmatmul.bf16.gmra.mxu0 %v403
  %v1262 = vpop.f32.mrf.mxu0
  %v1263 = vadd.f32 %v1244, %v1262
  %v1264 = vpop.f32.mrf.mxu0
  %v1265 = vadd.f32 %v1246, %v1264
  %1266 = vmatmul.bf16.gmra.mxu0 %v419
  %v1267 = vpop.f32.mrf.mxu0
  %v1268 = vadd.f32 %v1249, %v1267
  %v1269 = vpop.f32.mrf.mxu0
  %v1270 = vadd.f32 %v1251, %v1269
  %1271 = vdwg.mxu0
  %1272 = vmatpush.bf16.msra.mxu0 %v1001
  %1273 = vmatpush.bf16.msra.mxu0 %v1000
  %1274 = vmatpush.bf16.msra.mxu0 %v999
  %1275 = vmatpush.bf16.msra.mxu0 %v998
  %1276 = vmatpush.bf16.msra.mxu0 %v997
  %1277 = vmatpush.bf16.msra.mxu0 %v996
  %1278 = vmatpush.bf16.msra.mxu0 %v995
  %1279 = vmatpush.bf16.msra.mxu0 %v994
  %1280 = vmatmul.bf16.gmra.mxu0 %v404
  %v1281 = vpop.f32.mrf.mxu0
  %v1282 = vadd.f32 %v1263, %v1281
  %v1283 = vpop.f32.mrf.mxu0
  %v1284 = vadd.f32 %v1265, %v1283
  %1285 = vmatmul.bf16.gmra.mxu0 %v420
  %v1286 = vpop.f32.mrf.mxu0
  %v1287 = vadd.f32 %v1268, %v1286
  %v1288 = vpop.f32.mrf.mxu0
  %v1289 = vadd.f32 %v1270, %v1288
  %1290 = vdwg.mxu0
  %1291 = vmatpush.bf16.msra.mxu0 %v1009
  %1292 = vmatpush.bf16.msra.mxu0 %v1008
  %1293 = vmatpush.bf16.msra.mxu0 %v1007
  %1294 = vmatpush.bf16.msra.mxu0 %v1006
  %1295 = vmatpush.bf16.msra.mxu0 %v1005
  %1296 = vmatpush.bf16.msra.mxu0 %v1004
  %1297 = vmatpush.bf16.msra.mxu0 %v1003
  %1298 = vmatpush.bf16.msra.mxu0 %v1002
  %1299 = vmatmul.bf16.gmra.mxu0 %v405
  %v1300 = vpop.f32.mrf.mxu0
  %v1301 = vadd.f32 %v1282, %v1300
  %v1302 = vpop.f32.mrf.mxu0
  %v1303 = vadd.f32 %v1284, %v1302
  %1304 = vmatmul.bf16.gmra.mxu0 %v421
  %v1305 = vpop.f32.mrf.mxu0
  %v1306 = vadd.f32 %v1287, %v1305
  %v1307 = vpop.f32.mrf.mxu0
  %v1308 = vadd.f32 %v1289, %v1307
  %1309 = vdwg.mxu0
  %1310 = vmatpush.bf16.msra.mxu0 %v1017
  %1311 = vmatpush.bf16.msra.mxu0 %v1016
  %1312 = vmatpush.bf16.msra.mxu0 %v1015
  %1313 = vmatpush.bf16.msra.mxu0 %v1014
  %1314 = vmatpush.bf16.msra.mxu0 %v1013
  %1315 = vmatpush.bf16.msra.mxu0 %v1012
  %1316 = vmatpush.bf16.msra.mxu0 %v1011
  %1317 = vmatpush.bf16.msra.mxu0 %v1010
  %1318 = vmatmul.bf16.gmra.mxu0 %v406
  %v1319 = vpop.f32.mrf.mxu0
  %v1320 = vadd.f32 %v1301, %v1319
  %v1321 = vpop.f32.mrf.mxu0
  %v1322 = vadd.f32 %v1303, %v1321
  %1323 = vmatmul.bf16.gmra.mxu0 %v422
  %v1324 = vpop.f32.mrf.mxu0
  %v1325 = vadd.f32 %v1306, %v1324
  %v1326 = vpop.f32.mrf.mxu0
  %v1327 = vadd.f32 %v1308, %v1326
  %1328 = vdwg.mxu0
  %1329 = vmatpush.bf16.msra.mxu0 %v1025
  %1330 = vmatpush.bf16.msra.mxu0 %v1024
  %1331 = vmatpush.bf16.msra.mxu0 %v1023
  %1332 = vmatpush.bf16.msra.mxu0 %v1022
  %1333 = vmatpush.bf16.msra.mxu0 %v1021
  %1334 = vmatpush.bf16.msra.mxu0 %v1020
  %1335 = vmatpush.bf16.msra.mxu0 %v1019
  %1336 = vmatpush.bf16.msra.mxu0 %v1018
  %1337 = vmatmul.bf16.gmra.mxu0 %v407
  %v1338 = vpop.f32.mrf.mxu0
  %v1339 = vadd.f32 %v1320, %v1338
  %v1340 = vpop.f32.mrf.mxu0
  %v1341 = vadd.f32 %v1322, %v1340
  %1342 = vmatmul.bf16.gmra.mxu0 %v423
  %v1343 = vpop.f32.mrf.mxu0
  %v1344 = vadd.f32 %v1325, %v1343
  %v1345 = vpop.f32.mrf.mxu0
  %v1346 = vadd.f32 %v1327, %v1345
  %1347 = vdwg.mxu0
  %1348 = vmatpush.bf16.msra.mxu0 %v1033
  %1349 = vmatpush.bf16.msra.mxu0 %v1032
  %1350 = vmatpush.bf16.msra.mxu0 %v1031
  %1351 = vmatpush.bf16.msra.mxu0 %v1030
  %1352 = vmatpush.bf16.msra.mxu0 %v1029
  %1353 = vmatpush.bf16.msra.mxu0 %v1028
  %1354 = vmatpush.bf16.msra.mxu0 %v1027
  %1355 = vmatpush.bf16.msra.mxu0 %v1026
  %1356 = vmatmul.bf16.gmra.mxu0 %v408
  %v1357 = vpop.f32.mrf.mxu0
  %v1358 = vadd.f32 %v1339, %v1357
  %v1359 = vpop.f32.mrf.mxu0
  %v1360 = vadd.f32 %v1341, %v1359
  %1361 = vmatmul.bf16.gmra.mxu0 %v424
  %v1362 = vpop.f32.mrf.mxu0
  %v1363 = vadd.f32 %v1344, %v1362
  %v1364 = vpop.f32.mrf.mxu0
  %v1365 = vadd.f32 %v1346, %v1364
  %1366 = vdwg.mxu0
  %1367 = vmatpush.bf16.msra.mxu0 %v1041
  %1368 = vmatpush.bf16.msra.mxu0 %v1040
  %1369 = vmatpush.bf16.msra.mxu0 %v1039
  %1370 = vmatpush.bf16.msra.mxu0 %v1038
  %1371 = vmatpush.bf16.msra.mxu0 %v1037
  %1372 = vmatpush.bf16.msra.mxu0 %v1036
  %1373 = vmatpush.bf16.msra.mxu0 %v1035
  %1374 = vmatpush.bf16.msra.mxu0 %v1034
  %1375 = vmatmul.bf16.gmra.mxu0 %v409
  %v1376 = vpop.f32.mrf.mxu0
  %v1377 = vadd.f32 %v1358, %v1376
  %v1378 = vpop.f32.mrf.mxu0
  %v1379 = vadd.f32 %v1360, %v1378
  %1380 = vmatmul.bf16.gmra.mxu0 %v425
  %v1381 = vpop.f32.mrf.mxu0
  %v1382 = vadd.f32 %v1363, %v1381
  %v1383 = vpop.f32.mrf.mxu0
  %v1384 = vadd.f32 %v1365, %v1383
  %1385 = vdwg.mxu0
  %1386 = vmatpush.bf16.msra.mxu0 %v1049
  %1387 = vmatpush.bf16.msra.mxu0 %v1048
  %1388 = vmatpush.bf16.msra.mxu0 %v1047
  %1389 = vmatpush.bf16.msra.mxu0 %v1046
  %1390 = vmatpush.bf16.msra.mxu0 %v1045
  %1391 = vmatpush.bf16.msra.mxu0 %v1044
  %1392 = vmatpush.bf16.msra.mxu0 %v1043
  %1393 = vmatpush.bf16.msra.mxu0 %v1042
  %1394 = vmatmul.bf16.gmra.mxu0 %v410
  %v1395 = vpop.f32.mrf.mxu0
  %v1396 = vadd.f32 %v1377, %v1395
  %v1397 = vpop.f32.mrf.mxu0
  %v1398 = vadd.f32 %v1379, %v1397
  %1399 = vmatmul.bf16.gmra.mxu0 %v426
  %v1400 = vpop.f32.mrf.mxu0
  %v1401 = vadd.f32 %v1382, %v1400
  %v1402 = vpop.f32.mrf.mxu0
  %v1403 = vadd.f32 %v1384, %v1402
  %1404 = vdwg.mxu0
  %1405 = vmatpush.bf16.msra.mxu0 %v1057
  %1406 = vmatpush.bf16.msra.mxu0 %v1056
  %1407 = vmatpush.bf16.msra.mxu0 %v1055
  %1408 = vmatpush.bf16.msra.mxu0 %v1054
  %1409 = vmatpush.bf16.msra.mxu0 %v1053
  %1410 = vmatpush.bf16.msra.mxu0 %v1052
  %1411 = vmatpush.bf16.msra.mxu0 %v1051
  %1412 = vmatpush.bf16.msra.mxu0 %v1050
  %1413 = vmatmul.bf16.gmra.mxu0 %v411
  %v1414 = vpop.f32.mrf.mxu0
  %v1415 = vadd.f32 %v1396, %v1414
  %v1416 = vpop.f32.mrf.mxu0
  %v1417 = vadd.f32 %v1398, %v1416
  %1418 = vmatmul.bf16.gmra.mxu0 %v427
  %v1419 = vpop.f32.mrf.mxu0
  %v1420 = vadd.f32 %v1401, %v1419
  %v1421 = vpop.f32.mrf.mxu0
  %v1422 = vadd.f32 %v1403, %v1421
  %1423 = vdwg.mxu0
  %1424 = vmatpush.bf16.msra.mxu0 %v1065
  %1425 = vmatpush.bf16.msra.mxu0 %v1064
  %1426 = vmatpush.bf16.msra.mxu0 %v1063
  %1427 = vmatpush.bf16.msra.mxu0 %v1062
  %1428 = vmatpush.bf16.msra.mxu0 %v1061
  %1429 = vmatpush.bf16.msra.mxu0 %v1060
  %1430 = vmatpush.bf16.msra.mxu0 %v1059
  %1431 = vmatpush.bf16.msra.mxu0 %v1058
  %1432 = vmatmul.bf16.gmra.mxu0 %v412
  %v1433 = vpop.f32.mrf.mxu0
  %v1434 = vadd.f32 %v1415, %v1433
  %v1435 = vpop.f32.mrf.mxu0
  %v1436 = vadd.f32 %v1417, %v1435
  %1437 = vmatmul.bf16.gmra.mxu0 %v428
  %v1438 = vpop.f32.mrf.mxu0
  %v1439 = vadd.f32 %v1420, %v1438
  %v1440 = vpop.f32.mrf.mxu0
  %v1441 = vadd.f32 %v1422, %v1440
  %1442 = vdwg.mxu0
  %1443 = vmatpush.bf16.msra.mxu0 %v1073
  %1444 = vmatpush.bf16.msra.mxu0 %v1072
  %1445 = vmatpush.bf16.msra.mxu0 %v1071
  %1446 = vmatpush.bf16.msra.mxu0 %v1070
  %1447 = vmatpush.bf16.msra.mxu0 %v1069
  %1448 = vmatpush.bf16.msra.mxu0 %v1068
  %1449 = vmatpush.bf16.msra.mxu0 %v1067
  %1450 = vmatpush.bf16.msra.mxu0 %v1066
  %1451 = vmatmul.bf16.gmra.mxu0 %v413
  %v1452 = vpop.f32.mrf.mxu0
  %v1453 = vadd.f32 %v1434, %v1452
  %v1454 = vpop.f32.mrf.mxu0
  %v1455 = vadd.f32 %v1436, %v1454
  %1456 = vmatmul.bf16.gmra.mxu0 %v429
  %v1457 = vpop.f32.mrf.mxu0
  %v1458 = vadd.f32 %v1439, %v1457
  %v1459 = vpop.f32.mrf.mxu0
  %v1460 = vadd.f32 %v1441, %v1459
  %1461 = vdwg.mxu0
  %1462 = vmatpush.bf16.msra.mxu0 %v1081
  %1463 = vmatpush.bf16.msra.mxu0 %v1080
  %1464 = vmatpush.bf16.msra.mxu0 %v1079
  %1465 = vmatpush.bf16.msra.mxu0 %v1078
  %1466 = vmatpush.bf16.msra.mxu0 %v1077
  %1467 = vmatpush.bf16.msra.mxu0 %v1076
  %1468 = vmatpush.bf16.msra.mxu0 %v1075
  %1469 = vmatpush.bf16.msra.mxu0 %v1074
  %1470 = vmatmul.bf16.gmra.mxu0 %v414
  %v1471 = vpop.f32.mrf.mxu0
  %v1472 = vadd.f32 %v1453, %v1471
  %v1473 = vpop.f32.mrf.mxu0
  %v1474 = vadd.f32 %v1455, %v1473
  %1475 = vmatmul.bf16.gmra.mxu0 %v430
  %v1476 = vpop.f32.mrf.mxu0
  %v1477 = vadd.f32 %v1458, %v1476
  %v1478 = vpop.f32.mrf.mxu0
  %v1479 = vadd.f32 %v1460, %v1478
  %1480 = vdwg.mxu0
  %1481 = vmatpush.bf16.msra.mxu0 %v1089
  %1482 = vmatpush.bf16.msra.mxu0 %v1088
  %1483 = vmatpush.bf16.msra.mxu0 %v1087
  %1484 = vmatpush.bf16.msra.mxu0 %v1086
  %1485 = vmatpush.bf16.msra.mxu0 %v1085
  %1486 = vmatpush.bf16.msra.mxu0 %v1084
  %1487 = vmatpush.bf16.msra.mxu0 %v1083
  %1488 = vmatpush.bf16.msra.mxu0 %v1082
  %1489 = vmatmul.bf16.gmra.mxu0 %v415
  %v1490 = vpop.f32.mrf.mxu0
  %v1491 = vadd.f32 %v1472, %v1490
  %v1492 = vpop.f32.mrf.mxu0
  %v1493 = vadd.f32 %v1474, %v1492
  %1494 = vmatmul.bf16.gmra.mxu0 %v431
  %v1495 = vpop.f32.mrf.mxu0
  %v1496 = vadd.f32 %v1477, %v1495
  %v1497 = vpop.f32.mrf.mxu0
  %v1498 = vadd.f32 %v1479, %v1497
  %1499 = vdwg.mxu0
  %1500 = vmatpush.bf16.msra.mxu0 %v1097
  %1501 = vmatpush.bf16.msra.mxu0 %v1096
  %1502 = vmatpush.bf16.msra.mxu0 %v1095
  %1503 = vmatpush.bf16.msra.mxu0 %v1094
  %1504 = vmatpush.bf16.msra.mxu0 %v1093
  %1505 = vmatpush.bf16.msra.mxu0 %v1092
  %1506 = vmatpush.bf16.msra.mxu0 %v1091
  %1507 = vmatpush.bf16.msra.mxu0 %v1090
  %1508 = vmatmul.bf16.gmra.mxu0 %v416
  %v1509 = vpop.f32.mrf.mxu0
  %v1510 = vadd.f32 %v1491, %v1509
  %v1511 = vpop.f32.mrf.mxu0
  %v1512 = vadd.f32 %v1493, %v1511
  %1513 = vmatmul.bf16.gmra.mxu0 %v432
  %v1514 = vpop.f32.mrf.mxu0
  %v1515 = vadd.f32 %v1496, %v1514
  %v1516 = vpop.f32.mrf.mxu0
  %v1517 = vadd.f32 %v1498, %v1516
  %1518 = vdwg.mxu0
  %1519 = vmatpush.bf16.msra.mxu0 %v1105
  %1520 = vmatpush.bf16.msra.mxu0 %v1104
  %1521 = vmatpush.bf16.msra.mxu0 %v1103
  %1522 = vmatpush.bf16.msra.mxu0 %v1102
  %1523 = vmatpush.bf16.msra.mxu0 %v1101
  %1524 = vmatpush.bf16.msra.mxu0 %v1100
  %1525 = vmatpush.bf16.msra.mxu0 %v1099
  %1526 = vmatpush.bf16.msra.mxu0 %v1098
  %1527 = vmatmul.bf16.gmra.mxu0 %v417
  %v1528 = vpop.f32.mrf.mxu0
  %v1529 = vadd.f32 %v1510, %v1528
  %v1530 = vpop.f32.mrf.mxu0
  %v1531 = vadd.f32 %v1512, %v1530
  %1532 = vmatmul.bf16.gmra.mxu0 %v433
  %v1533 = vpop.f32.mrf.mxu0
  %v1534 = vadd.f32 %v1515, %v1533
  %v1535 = vpop.f32.mrf.mxu0
  %v1536 = vadd.f32 %v1517, %v1535
  %1537 = vdwg.mxu0
  %v1538 = vmax.f32 %v1529, 0.0
  %v1539 = vmax.f32 %v1531, 0.0
  %v1540 = vmax.f32 %v1534, 0.0
  %v1541 = vmax.f32 %v1536, 0.0
  %v1542 = vpack.c.bf16 %v1538, %v1538
  %v1543 = vpack.c.bf16 %v1539, %v1539
  %v1544 = vpack.c.bf16 %v1540, %v1540
  %v1545 = vpack.c.bf16 %v1541, %v1541
  %1546 = vst [vmem:[%s3] sm:$0xf] %v1542
  %1547 = vst [vmem:[%s3 + $0x4] sm:$0xf] %v1543
  %1548 = vst [vmem:[%s3 + $0x8] sm:$0xf] %v1544
  %1549 = vst [vmem:[%s3 + $0xc] sm:$0xf] %v1545
  // Predicated region
  $region14: #{dueling_dqn_forward.5} parent=0 // pred_check
    _
  $region15: #{dueling_dqn_forward.5} parent=0 // pred_check_branch
    %1551 = sbr.rel (0) target = $region17
  $region16: #{dueling_dqn_forward.5} parent=0 // pred_region
    _
  $region17: #{dueling_dqn_forward.5} parent=0 // pred_fallthru
    _
  // Predicated region
  $region18: #{dueling_dqn_forward.5} parent=0 // pred_check
    _
  $region19: #{dueling_dqn_forward.5} parent=0 // pred_check_branch
    %1553 = sbr.rel (0) target = $region21
  $region20: #{dueling_dqn_forward.5} parent=0 // pred_region
    _
  $region21: #{dueling_dqn_forward.5} parent=0 // pred_fallthru
    _

// kernel: dueling_dqn_forward.6
$region0: #{dueling_dqn_forward.6}
  #allocation0 [shape = 'u32[]', space=smem, size = 0x4, offset = 0x4, fixed_abs, tag = 'smem constant byte address 0x4 - core index']
  #allocation1 [shape = 'u32[72,128]{1,0:T(1,128)}', space=vmem, size = 0x9000, scoped, tag = 'internal scratch']
  %s0 = inlined_call_operand.vmem [shape: bf16[16,1152], index: 0, kind: input, shape index: {}]
  %s1 = inlined_call_operand.vmem [shape: bf16[1152,128], index: 1, kind: input, shape index: {}]
  %s2 = inlined_call_operand.vmem [shape: f32[1,128], index: 2, kind: input, shape index: {}]
  %s3 = inlined_call_operand.vmem [shape: bf16[16,128], index: 3, kind: output, shape index: {}]
  %s4 = sld [smem:[#allocation0]]
  $region22: #{dueling_dqn_forward.6} parent=0
    _
  %s6 = ssub.s32 1, %s4
  %s7 = scalar_select 0, %s6, %s4
  // Predicated region
  $region2: #{dueling_dqn_forward.6} parent=0 // pred_check
    _
  $region3: #{dueling_dqn_forward.6} parent=0 // pred_check_branch
    %9 = sbr.rel (0) target = $region5
  $region4: #{dueling_dqn_forward.6} parent=0 // pred_region
    _
  $region5: #{dueling_dqn_forward.6} parent=0 // pred_fallthru
    _
  // Predicated region
  $region6: #{dueling_dqn_forward.6} parent=0 // pred_check
    _
  $region7: #{dueling_dqn_forward.6} parent=0 // pred_check_branch
    %11 = sbr.rel (0) target = $region9
  $region8: #{dueling_dqn_forward.6} parent=0 // pred_region
    _
  $region9: #{dueling_dqn_forward.6} parent=0 // pred_fallthru
    _
  // Predicated region
  $region10: #{dueling_dqn_forward.6} parent=0 // pred_check
    _
  $region11: #{dueling_dqn_forward.6} parent=0 // pred_check_branch
    %13 = sbr.rel (0) target = $region13
  $region12: #{dueling_dqn_forward.6} parent=0 // pred_region
    _
  $region13: #{dueling_dqn_forward.6} parent=0 // pred_fallthru
    _
  %v14 = vld [vmem:[%s0] sm:$0xff]
  %v15 = vld [vmem:[%s0 + $0x8] sm:$0xff]
  %v16 = vld [vmem:[%s0 + $0x10] sm:$0xff]
  %v17 = vld [vmem:[%s0 + $0x18] sm:$0xff]
  %v18 = vld [vmem:[%s0 + $0x20] sm:$0xf]
  %v19 = vld [vmem:[%s0 + $0x24] sm:$0xff]
  %v20 = vld [vmem:[%s0 + $0x2c] sm:$0xff]
  %v21 = vld [vmem:[%s0 + $0x34] sm:$0xff]
  %v22 = vld [vmem:[%s0 + $0x3c] sm:$0xff]
  %v23 = vld [vmem:[%s0 + $0x44] sm:$0xf]
  %v24 = vld [vmem:[%s1] sm:$0xf]
  %v25 = vld [vmem:[%s1 + $0x4] sm:$0xf]
  %v26 = vld [vmem:[%s1 + $0x8] sm:$0xf]
  %v27 = vld [vmem:[%s1 + $0xc] sm:$0xf]
  %v28 = vld [vmem:[%s1 + $0x10] sm:$0xf]
  %v29 = vld [vmem:[%s1 + $0x14] sm:$0xf]
  %v30 = vld [vmem:[%s1 + $0x18] sm:$0xf]
  %v31 = vld [vmem:[%s1 + $0x1c] sm:$0xf]
  %v32 = vld [vmem:[%s1 + $0x20] sm:$0xf]
  %v33 = vld [vmem:[%s1 + $0x24] sm:$0xf]
  %v34 = vld [vmem:[%s1 + $0x28] sm:$0xf]
  %v35 = vld [vmem:[%s1 + $0x2c] sm:$0xf]
  %v36 = vld [vmem:[%s1 + $0x30] sm:$0xf]
  %v37 = vld [vmem:[%s1 + $0x34] sm:$0xf]
  %v38 = vld [vmem:[%s1 + $0x38] sm:$0xf]
  %v39 = vld [vmem:[%s1 + $0x3c] sm:$0xf]
  %v40 = vld [vmem:[%s1 + $0x40] sm:$0xf]
  %v41 = vld [vmem:[%s1 + $0x44] sm:$0xf]
  %v42 = vld [vmem:[%s1 + $0x48] sm:$0xf]
  %v43 = vld [vmem:[%s1 + $0x4c] sm:$0xf]
  %v44 = vld [vmem:[%s1 + $0x50] sm:$0xf]
  %v45 = vld [vmem:[%s1 + $0x54] sm:$0xf]
  %v46 = vld [vmem:[%s1 + $0x58] sm:$0xf]
  %v47 = vld [vmem:[%s1 + $0x5c] sm:$0xf]
  %v48 = vld [vmem:[%s1 + $0x60] sm:$0xf]
  %v49 = vld [vmem:[%s1 + $0x64] sm:$0xf]
  %v50 = vld [vmem:[%s1 + $0x68] sm:$0xf]
  %v51 = vld [vmem:[%s1 + $0x6c] sm:$0xf]
  %v52 = vld [vmem:[%s1 + $0x70] sm:$0xf]
  %v53 = vld [vmem:[%s1 + $0x74] sm:$0xf]
  %v54 = vld [vmem:[%s1 + $0x78] sm:$0xf]
  %v55 = vld [vmem:[%s1 + $0x7c] sm:$0xf]
  %v56 = vld [vmem:[%s1 + $0x80] sm:$0xf]
  %v57 = vld [vmem:[%s1 + $0x84] sm:$0xf]
  %v58 = vld [vmem:[%s1 + $0x88] sm:$0xf]
  %v59 = vld [vmem:[%s1 + $0x8c] sm:$0xf]
  %v60 = vld [vmem:[%s1 + $0x90] sm:$0xf]
  %v61 = vld [vmem:[%s1 + $0x94] sm:$0xf]
  %v62 = vld [vmem:[%s1 + $0x98] sm:$0xf]
  %v63 = vld [vmem:[%s1 + $0x9c] sm:$0xf]
  %v64 = vld [vmem:[%s1 + $0xa0] sm:$0xf]
  %v65 = vld [vmem:[%s1 + $0xa4] sm:$0xf]
  %v66 = vld [vmem:[%s1 + $0xa8] sm:$0xf]
  %v67 = vld [vmem:[%s1 + $0xac] sm:$0xf]
  %v68 = vld [vmem:[%s1 + $0xb0] sm:$0xf]
  %v69 = vld [vmem:[%s1 + $0xb4] sm:$0xf]
  %v70 = vld [vmem:[%s1 + $0xb8] sm:$0xf]
  %v71 = vld [vmem:[%s1 + $0xbc] sm:$0xf]
  %v72 = vld [vmem:[%s1 + $0xc0] sm:$0xf]
  %v73 = vld [vmem:[%s1 + $0xc4] sm:$0xf]
  %v74 = vld [vmem:[%s1 + $0xc8] sm:$0xf]
  %v75 = vld [vmem:[%s1 + $0xcc] sm:$0xf]
  %v76 = vld [vmem:[%s1 + $0xd0] sm:$0xf]
  %v77 = vld [vmem:[%s1 + $0xd4] sm:$0xf]
  %v78 = vld [vmem:[%s1 + $0xd8] sm:$0xf]
  %v79 = vld [vmem:[%s1 + $0xdc] sm:$0xf]
  %v80 = vld [vmem:[%s1 + $0xe0] sm:$0xf]
  %v81 = vld [vmem:[%s1 + $0xe4] sm:$0xf]
  %v82 = vld [vmem:[%s1 + $0xe8] sm:$0xf]
  %v83 = vld [vmem:[%s1 + $0xec] sm:$0xf]
  %v84 = vld [vmem:[%s1 + $0xf0] sm:$0xf]
  %v85 = vld [vmem:[%s1 + $0xf4] sm:$0xf]
  %v86 = vld [vmem:[%s1 + $0xf8] sm:$0xf]
  %v87 = vld [vmem:[%s1 + $0xfc] sm:$0xf]
  %v88 = vld [vmem:[%s1 + $0x100] sm:$0xf]
  %v89 = vld [vmem:[%s1 + $0x104] sm:$0xf]
  %v90 = vld [vmem:[%s1 + $0x108] sm:$0xf]
  %v91 = vld [vmem:[%s1 + $0x10c] sm:$0xf]
  %v92 = vld [vmem:[%s1 + $0x110] sm:$0xf]
  %v93 = vld [vmem:[%s1 + $0x114] sm:$0xf]
  %v94 = vld [vmem:[%s1 + $0x118] sm:$0xf]
  %v95 = vld [vmem:[%s1 + $0x11c] sm:$0xf]
  %v96 = vld [vmem:[%s1 + $0x120] sm:$0xf]
  %v97 = vld [vmem:[%s1 + $0x124] sm:$0xf]
  %v98 = vld [vmem:[%s1 + $0x128] sm:$0xf]
  %v99 = vld [vmem:[%s1 + $0x12c] sm:$0xf]
  %v100 = vld [vmem:[%s1 + $0x130] sm:$0xf]
  %v101 = vld [vmem:[%s1 + $0x134] sm:$0xf]
  %v102 = vld [vmem:[%s1 + $0x138] sm:$0xf]
  %v103 = vld [vmem:[%s1 + $0x13c] sm:$0xf]
  %v104 = vld [vmem:[%s1 + $0x140] sm:$0xf]
  %v105 = vld [vmem:[%s1 + $0x144] sm:$0xf]
  %v106 = vld [vmem:[%s1 + $0x148] sm:$0xf]
  %v107 = vld [vmem:[%s1 + $0x14c] sm:$0xf]
  %v108 = vld [vmem:[%s1 + $0x150] sm:$0xf]
  %v109 = vld [vmem:[%s1 + $0x154] sm:$0xf]
  %v110 = vld [vmem:[%s1 + $0x158] sm:$0xf]
  %v111 = vld [vmem:[%s1 + $0x15c] sm:$0xf]
  %v112 = vld [vmem:[%s1 + $0x160] sm:$0xf]
  %v113 = vld [vmem:[%s1 + $0x164] sm:$0xf]
  %v114 = vld [vmem:[%s1 + $0x168] sm:$0xf]
  %v115 = vld [vmem:[%s1 + $0x16c] sm:$0xf]
  %v116 = vld [vmem:[%s1 + $0x170] sm:$0xf]
  %v117 = vld [vmem:[%s1 + $0x174] sm:$0xf]
  %v118 = vld [vmem:[%s1 + $0x178] sm:$0xf]
  %v119 = vld [vmem:[%s1 + $0x17c] sm:$0xf]
  %v120 = vld [vmem:[%s1 + $0x180] sm:$0xf]
  %v121 = vld [vmem:[%s1 + $0x184] sm:$0xf]
  %v122 = vld [vmem:[%s1 + $0x188] sm:$0xf]
  %v123 = vld [vmem:[%s1 + $0x18c] sm:$0xf]
  %v124 = vld [vmem:[%s1 + $0x190] sm:$0xf]
  %v125 = vld [vmem:[%s1 + $0x194] sm:$0xf]
  %v126 = vld [vmem:[%s1 + $0x198] sm:$0xf]
  %v127 = vld [vmem:[%s1 + $0x19c] sm:$0xf]
  %v128 = vld [vmem:[%s1 + $0x1a0] sm:$0xf]
  %v129 = vld [vmem:[%s1 + $0x1a4] sm:$0xf]
  %v130 = vld [vmem:[%s1 + $0x1a8] sm:$0xf]
  %v131 = vld [vmem:[%s1 + $0x1ac] sm:$0xf]
  %v132 = vld [vmem:[%s1 + $0x1b0] sm:$0xf]
  %v133 = vld [vmem:[%s1 + $0x1b4] sm:$0xf]
  %v134 = vld [vmem:[%s1 + $0x1b8] sm:$0xf]
  %v135 = vld [vmem:[%s1 + $0x1bc] sm:$0xf]
  %v136 = vld [vmem:[%s1 + $0x1c0] sm:$0xf]
  %v137 = vld [vmem:[%s1 + $0x1c4] sm:$0xf]
  %v138 = vld [vmem:[%s1 + $0x1c8] sm:$0xf]
  %v139 = vld [vmem:[%s1 + $0x1cc] sm:$0xf]
  %v140 = vld [vmem:[%s1 + $0x1d0] sm:$0xf]
  %v141 = vld [vmem:[%s1 + $0x1d4] sm:$0xf]
  %v142 = vld [vmem:[%s1 + $0x1d8] sm:$0xf]
  %v143 = vld [vmem:[%s1 + $0x1dc] sm:$0xf]
  %v144 = vld [vmem:[%s1 + $0x1e0] sm:$0xf]
  %v145 = vld [vmem:[%s1 + $0x1e4] sm:$0xf]
  %v146 = vld [vmem:[%s1 + $0x1e8] sm:$0xf]
  %v147 = vld [vmem:[%s1 + $0x1ec] sm:$0xf]
  %v148 = vld [vmem:[%s1 + $0x1f0] sm:$0xf]
  %v149 = vld [vmem:[%s1 + $0x1f4] sm:$0xf]
  %v150 = vld [vmem:[%s1 + $0x1f8] sm:$0xf]
  %v151 = vld [vmem:[%s1 + $0x1fc] sm:$0xf]
  %v152 = vld [vmem:[%s1 + $0x200] sm:$0xf]
  %v153 = vld [vmem:[%s1 + $0x204] sm:$0xf]
  %v154 = vld [vmem:[%s1 + $0x208] sm:$0xf]
  %v155 = vld [vmem:[%s1 + $0x20c] sm:$0xf]
  %v156 = vld [vmem:[%s1 + $0x210] sm:$0xf]
  %v157 = vld [vmem:[%s1 + $0x214] sm:$0xf]
  %v158 = vld [vmem:[%s1 + $0x218] sm:$0xf]
  %v159 = vld [vmem:[%s1 + $0x21c] sm:$0xf]
  %v160 = vld [vmem:[%s1 + $0x220] sm:$0xf]
  %v161 = vld [vmem:[%s1 + $0x224] sm:$0xf]
  %v162 = vld [vmem:[%s1 + $0x228] sm:$0xf]
  %v163 = vld [vmem:[%s1 + $0x22c] sm:$0xf]
  %v164 = vld [vmem:[%s1 + $0x230] sm:$0xf]
  %v165 = vld [vmem:[%s1 + $0x234] sm:$0xf]
  %v166 = vld [vmem:[%s1 + $0x238] sm:$0xf]
  %v167 = vld [vmem:[%s1 + $0x23c] sm:$0xf]
  %v168 = vld [vmem:[%s2] sm:$0x1]
  %v170 = vperm.slane %v168, 0
  %v182 = vunpack.c.l.b16 %v14
  %v183 = vunpack.c.h.b16 %v14
  %v184 = vunpack.c.l.b16 %v15
  %v185 = vunpack.c.h.b16 %v15
  %v186 = vunpack.c.l.b16 %v16
  %v187 = vunpack.c.h.b16 %v16
  %v188 = vunpack.c.l.b16 %v17
  %v189 = vunpack.c.h.b16 %v17
  %v190 = vunpack.c.l.b16 %v18
  %v191 = vunpack.c.l.b16 %v19
  %v192 = vunpack.c.h.b16 %v19
  %v193 = vunpack.c.l.b16 %v20
  %v194 = vunpack.c.h.b16 %v20
  %v195 = vunpack.c.l.b16 %v21
  %v196 = vunpack.c.h.b16 %v21
  %v197 = vunpack.c.l.b16 %v22
  %v198 = vunpack.c.h.b16 %v22
  %v199 = vunpack.c.l.b16 %v23
  %v200 = vpack.c.b16 %v191, %v182
  %v201 = vpack.c.b16 %v192, %v183
  %v202 = vpack.c.b16 %v193, %v184
  %v203 = vpack.c.b16 %v194, %v185
  %v204 = vpack.c.b16 %v195, %v186
  %v205 = vpack.c.b16 %v196, %v187
  %v206 = vpack.c.b16 %v197, %v188
  %v207 = vpack.c.b16 %v198, %v189
  %v208 = vpack.c.b16 %v199, %v190
  %v362 = vunpack.c.l.b16 %v24
  %v363 = vunpack.c.l.b16 %v25
  %v364 = vunpack.c.l.b16 %v26
  %v365 = vunpack.c.l.b16 %v27
  %v366 = vunpack.c.l.b16 %v28
  %v367 = vunpack.c.l.b16 %v29
  %v368 = vunpack.c.l.b16 %v30
  %v369 = vunpack.c.l.b16 %v31
  %v370 = vunpack.c.l.b16 %v32
  %v371 = vunpack.c.l.b16 %v33
  %v372 = vunpack.c.l.b16 %v34
  %v373 = vunpack.c.l.b16 %v35
  %v374 = vunpack.c.l.b16 %v36
  %v375 = vunpack.c.l.b16 %v37
  %v376 = vunpack.c.l.b16 %v38
  %v377 = vunpack.c.l.b16 %v39
  %v378 = vunpack.c.l.b16 %v40
  %v379 = vunpack.c.l.b16 %v41
  %v380 = vunpack.c.l.b16 %v42
  %v381 = vunpack.c.l.b16 %v43
  %v382 = vunpack.c.l.b16 %v44
  %v383 = vunpack.c.l.b16 %v45
  %v384 = vunpack.c.l.b16 %v46
  %v385 = vunpack.c.l.b16 %v47
  %v386 = vunpack.c.l.b16 %v48
  %v387 = vunpack.c.l.b16 %v49
  %v388 = vunpack.c.l.b16 %v50
  %v389 = vunpack.c.l.b16 %v51
  %v390 = vunpack.c.l.b16 %v52
  %v391 = vunpack.c.l.b16 %v53
  %v392 = vunpack.c.l.b16 %v54
  %v393 = vunpack.c.l.b16 %v55
  %v394 = vunpack.c.l.b16 %v56
  %v395 = vunpack.c.l.b16 %v57
  %v396 = vunpack.c.l.b16 %v58
  %v397 = vunpack.c.l.b16 %v59
  %v398 = vunpack.c.l.b16 %v60
  %v399 = vunpack.c.l.b16 %v61
  %v400 = vunpack.c.l.b16 %v62
  %v401 = vunpack.c.l.b16 %v63
  %v402 = vunpack.c.l.b16 %v64
  %v403 = vunpack.c.l.b16 %v65
  %v404 = vunpack.c.l.b16 %v66
  %v405 = vunpack.c.l.b16 %v67
  %v406 = vunpack.c.l.b16 %v68
  %v407 = vunpack.c.l.b16 %v69
  %v408 = vunpack.c.l.b16 %v70
  %v409 = vunpack.c.l.b16 %v71
  %v410 = vunpack.c.l.b16 %v72
  %v411 = vunpack.c.l.b16 %v73
  %v412 = vunpack.c.l.b16 %v74
  %v413 = vunpack.c.l.b16 %v75
  %v414 = vunpack.c.l.b16 %v76
  %v415 = vunpack.c.l.b16 %v77
  %v416 = vunpack.c.l.b16 %v78
  %v417 = vunpack.c.l.b16 %v79
  %v418 = vunpack.c.l.b16 %v80
  %v419 = vunpack.c.l.b16 %v81
  %v420 = vunpack.c.l.b16 %v82
  %v421 = vunpack.c.l.b16 %v83
  %v422 = vunpack.c.l.b16 %v84
  %v423 = vunpack.c.l.b16 %v85
  %v424 = vunpack.c.l.b16 %v86
  %v425 = vunpack.c.l.b16 %v87
  %v426 = vunpack.c.l.b16 %v88
  %v427 = vunpack.c.l.b16 %v89
  %v428 = vunpack.c.l.b16 %v90
  %v429 = vunpack.c.l.b16 %v91
  %v430 = vunpack.c.l.b16 %v92
  %v431 = vunpack.c.l.b16 %v93
  %v432 = vunpack.c.l.b16 %v94
  %v433 = vunpack.c.l.b16 %v95
  %v434 = vunpack.c.l.b16 %v96
  %v435 = vunpack.c.l.b16 %v97
  %v436 = vunpack.c.l.b16 %v98
  %v437 = vunpack.c.l.b16 %v99
  %v438 = vunpack.c.l.b16 %v100
  %v439 = vunpack.c.l.b16 %v101
  %v440 = vunpack.c.l.b16 %v102
  %v441 = vunpack.c.l.b16 %v103
  %v442 = vunpack.c.l.b16 %v104
  %v443 = vunpack.c.l.b16 %v105
  %v444 = vunpack.c.l.b16 %v106
  %v445 = vunpack.c.l.b16 %v107
  %v446 = vunpack.c.l.b16 %v108
  %v447 = vunpack.c.l.b16 %v109
  %v448 = vunpack.c.l.b16 %v110
  %v449 = vunpack.c.l.b16 %v111
  %v450 = vunpack.c.l.b16 %v112
  %v451 = vunpack.c.l.b16 %v113
  %v452 = vunpack.c.l.b16 %v114
  %v453 = vunpack.c.l.b16 %v115
  %v454 = vunpack.c.l.b16 %v116
  %v455 = vunpack.c.l.b16 %v117
  %v456 = vunpack.c.l.b16 %v118
  %v457 = vunpack.c.l.b16 %v119
  %v458 = vunpack.c.l.b16 %v120
  %v459 = vunpack.c.l.b16 %v121
  %v460 = vunpack.c.l.b16 %v122
  %v461 = vunpack.c.l.b16 %v123
  %v462 = vunpack.c.l.b16 %v124
  %v463 = vunpack.c.l.b16 %v125
  %v464 = vunpack.c.l.b16 %v126
  %v465 = vunpack.c.l.b16 %v127
  %v466 = vunpack.c.l.b16 %v128
  %v467 = vunpack.c.l.b16 %v129
  %v468 = vunpack.c.l.b16 %v130
  %v469 = vunpack.c.l.b16 %v131
  %v470 = vunpack.c.l.b16 %v132
  %v471 = vunpack.c.l.b16 %v133
  %v472 = vunpack.c.l.b16 %v134
  %v473 = vunpack.c.l.b16 %v135
  %v474 = vunpack.c.l.b16 %v136
  %v475 = vunpack.c.l.b16 %v137
  %v476 = vunpack.c.l.b16 %v138
  %v477 = vunpack.c.l.b16 %v139
  %v478 = vunpack.c.l.b16 %v140
  %v479 = vunpack.c.l.b16 %v141
  %v480 = vunpack.c.l.b16 %v142
  %v481 = vunpack.c.l.b16 %v143
  %v482 = vunpack.c.l.b16 %v144
  %v483 = vunpack.c.l.b16 %v145
  %v484 = vunpack.c.l.b16 %v146
  %v485 = vunpack.c.l.b16 %v147
  %v486 = vunpack.c.l.b16 %v148
  %v487 = vunpack.c.l.b16 %v149
  %v488 = vunpack.c.l.b16 %v150
  %v489 = vunpack.c.l.b16 %v151
  %v490 = vunpack.c.l.b16 %v152
  %v491 = vunpack.c.l.b16 %v153
  %v492 = vunpack.c.l.b16 %v154
  %v493 = vunpack.c.l.b16 %v155
  %v494 = vunpack.c.l.b16 %v156
  %v495 = vunpack.c.l.b16 %v157
  %v496 = vunpack.c.l.b16 %v158
  %v497 = vunpack.c.l.b16 %v159
  %v498 = vunpack.c.l.b16 %v160
  %v499 = vunpack.c.l.b16 %v161
  %v500 = vunpack.c.l.b16 %v162
  %v501 = vunpack.c.l.b16 %v163
  %v502 = vunpack.c.l.b16 %v164
  %v503 = vunpack.c.l.b16 %v165
  %v504 = vunpack.c.l.b16 %v166
  %v505 = vunpack.c.l.b16 %v167
  %v506 = vpack.c.b16 %v363, %v362
  %v507 = vpack.c.b16 %v365, %v364
  %v508 = vpack.c.b16 %v367, %v366
  %v509 = vpack.c.b16 %v369, %v368
  %v510 = vpack.c.b16 %v371, %v370
  %v511 = vpack.c.b16 %v373, %v372
  %v512 = vpack.c.b16 %v375, %v374
  %v513 = vpack.c.b16 %v377, %v376
  %v514 = vpack.c.b16 %v379, %v378
  %v515 = vpack.c.b16 %v381, %v380
  %v516 = vpack.c.b16 %v383, %v382
  %v517 = vpack.c.b16 %v385, %v384
  %v518 = vpack.c.b16 %v387, %v386
  %v519 = vpack.c.b16 %v389, %v388
  %v520 = vpack.c.b16 %v391, %v390
  %v521 = vpack.c.b16 %v393, %v392
  %v522 = vpack.c.b16 %v395, %v394
  %v523 = vpack.c.b16 %v397, %v396
  %v524 = vpack.c.b16 %v399, %v398
  %v525 = vpack.c.b16 %v401, %v400
  %v526 = vpack.c.b16 %v403, %v402
  %v527 = vpack.c.b16 %v405, %v404
  %v528 = vpack.c.b16 %v407, %v406
  %v529 = vpack.c.b16 %v409, %v408
  %v530 = vpack.c.b16 %v411, %v410
  %v531 = vpack.c.b16 %v413, %v412
  %v532 = vpack.c.b16 %v415, %v414
  %v533 = vpack.c.b16 %v417, %v416
  %v534 = vpack.c.b16 %v419, %v418
  %v535 = vpack.c.b16 %v421, %v420
  %v536 = vpack.c.b16 %v423, %v422
  %v537 = vpack.c.b16 %v425, %v424
  %v538 = vpack.c.b16 %v427, %v426
  %v539 = vpack.c.b16 %v429, %v428
  %v540 = vpack.c.b16 %v431, %v430
  %v541 = vpack.c.b16 %v433, %v432
  %v542 = vpack.c.b16 %v435, %v434
  %v543 = vpack.c.b16 %v437, %v436
  %v544 = vpack.c.b16 %v439, %v438
  %v545 = vpack.c.b16 %v441, %v440
  %v546 = vpack.c.b16 %v443, %v442
  %v547 = vpack.c.b16 %v445, %v444
  %v548 = vpack.c.b16 %v447, %v446
  %v549 = vpack.c.b16 %v449, %v448
  %v550 = vpack.c.b16 %v451, %v450
  %v551 = vpack.c.b16 %v453, %v452
  %v552 = vpack.c.b16 %v455, %v454
  %v553 = vpack.c.b16 %v457, %v456
  %v554 = vpack.c.b16 %v459, %v458
  %v555 = vpack.c.b16 %v461, %v460
  %v556 = vpack.c.b16 %v463, %v462
  %v557 = vpack.c.b16 %v465, %v464
  %v558 = vpack.c.b16 %v467, %v466
  %v559 = vpack.c.b16 %v469, %v468
  %v560 = vpack.c.b16 %v471, %v470
  %v561 = vpack.c.b16 %v473, %v472
  %v562 = vpack.c.b16 %v475, %v474
  %v563 = vpack.c.b16 %v477, %v476
  %v564 = vpack.c.b16 %v479, %v478
  %v565 = vpack.c.b16 %v481, %v480
  %v566 = vpack.c.b16 %v483, %v482
  %v567 = vpack.c.b16 %v485, %v484
  %v568 = vpack.c.b16 %v487, %v486
  %v569 = vpack.c.b16 %v489, %v488
  %v570 = vpack.c.b16 %v491, %v490
  %v571 = vpack.c.b16 %v493, %v492
  %v572 = vpack.c.b16 %v495, %v494
  %v573 = vpack.c.b16 %v497, %v496
  %v574 = vpack.c.b16 %v499, %v498
  %v575 = vpack.c.b16 %v501, %v500
  %v576 = vpack.c.b16 %v503, %v502
  %v577 = vpack.c.b16 %v505, %v504
  %650 = vmatpush.bf16.msra.mxu0 %v513
  %651 = vmatpush.bf16.msra.mxu0 %v512
  %652 = vmatpush.bf16.msra.mxu0 %v511
  %653 = vmatpush.bf16.msra.mxu0 %v510
  %654 = vmatpush.bf16.msra.mxu0 %v509
  %655 = vmatpush.bf16.msra.mxu0 %v508
  %656 = vmatpush.bf16.msra.mxu0 %v507
  %657 = vmatpush.bf16.msra.mxu0 %v506
  %658 = vmatmul.bf16.gmra.mxu0 %v200
  %v659 = vpop.f32.mrf.mxu0
  %v660 = vadd.f32 %v170, %v659
  %v661 = vpop.f32.mrf.mxu0
  %v662 = vadd.f32 %v170, %v661
  %663 = vdwg.mxu0
  %664 = vmatpush.bf16.msra.mxu0 %v521
  %665 = vmatpush.bf16.msra.mxu0 %v520
  %666 = vmatpush.bf16.msra.mxu0 %v519
  %667 = vmatpush.bf16.msra.mxu0 %v518
  %668 = vmatpush.bf16.msra.mxu0 %v517
  %669 = vmatpush.bf16.msra.mxu0 %v516
  %670 = vmatpush.bf16.msra.mxu0 %v515
  %671 = vmatpush.bf16.msra.mxu0 %v514
  %672 = vmatmul.bf16.gmra.mxu0 %v201
  %v673 = vpop.f32.mrf.mxu0
  %v674 = vadd.f32 %v660, %v673
  %v675 = vpop.f32.mrf.mxu0
  %v676 = vadd.f32 %v662, %v675
  %677 = vdwg.mxu0
  %678 = vmatpush.bf16.msra.mxu0 %v529
  %679 = vmatpush.bf16.msra.mxu0 %v528
  %680 = vmatpush.bf16.msra.mxu0 %v527
  %681 = vmatpush.bf16.msra.mxu0 %v526
  %682 = vmatpush.bf16.msra.mxu0 %v525
  %683 = vmatpush.bf16.msra.mxu0 %v524
  %684 = vmatpush.bf16.msra.mxu0 %v523
  %685 = vmatpush.bf16.msra.mxu0 %v522
  %686 = vmatmul.bf16.gmra.mxu0 %v202
  %v687 = vpop.f32.mrf.mxu0
  %v688 = vadd.f32 %v674, %v687
  %v689 = vpop.f32.mrf.mxu0
  %v690 = vadd.f32 %v676, %v689
  %691 = vdwg.mxu0
  %692 = vmatpush.bf16.msra.mxu0 %v537
  %693 = vmatpush.bf16.msra.mxu0 %v536
  %694 = vmatpush.bf16.msra.mxu0 %v535
  %695 = vmatpush.bf16.msra.mxu0 %v534
  %696 = vmatpush.bf16.msra.mxu0 %v533
  %697 = vmatpush.bf16.msra.mxu0 %v532
  %698 = vmatpush.bf16.msra.mxu0 %v531
  %699 = vmatpush.bf16.msra.mxu0 %v530
  %700 = vmatmul.bf16.gmra.mxu0 %v203
  %v701 = vpop.f32.mrf.mxu0
  %v702 = vadd.f32 %v688, %v701
  %v703 = vpop.f32.mrf.mxu0
  %v704 = vadd.f32 %v690, %v703
  %705 = vdwg.mxu0
  %706 = vmatpush.bf16.msra.mxu0 %v545
  %707 = vmatpush.bf16.msra.mxu0 %v544
  %708 = vmatpush.bf16.msra.mxu0 %v543
  %709 = vmatpush.bf16.msra.mxu0 %v542
  %710 = vmatpush.bf16.msra.mxu0 %v541
  %711 = vmatpush.bf16.msra.mxu0 %v540
  %712 = vmatpush.bf16.msra.mxu0 %v539
  %713 = vmatpush.bf16.msra.mxu0 %v538
  %714 = vmatmul.bf16.gmra.mxu0 %v204
  %v715 = vpop.f32.mrf.mxu0
  %v716 = vadd.f32 %v702, %v715
  %v717 = vpop.f32.mrf.mxu0
  %v718 = vadd.f32 %v704, %v717
  %719 = vdwg.mxu0
  %720 = vmatpush.bf16.msra.mxu0 %v553
  %721 = vmatpush.bf16.msra.mxu0 %v552
  %722 = vmatpush.bf16.msra.mxu0 %v551
  %723 = vmatpush.bf16.msra.mxu0 %v550
  %724 = vmatpush.bf16.msra.mxu0 %v549
  %725 = vmatpush.bf16.msra.mxu0 %v548
  %726 = vmatpush.bf16.msra.mxu0 %v547
  %727 = vmatpush.bf16.msra.mxu0 %v546
  %728 = vmatmul.bf16.gmra.mxu0 %v205
  %v729 = vpop.f32.mrf.mxu0
  %v730 = vadd.f32 %v716, %v729
  %v731 = vpop.f32.mrf.mxu0
  %v732 = vadd.f32 %v718, %v731
  %733 = vdwg.mxu0
  %734 = vmatpush.bf16.msra.mxu0 %v561
  %735 = vmatpush.bf16.msra.mxu0 %v560
  %736 = vmatpush.bf16.msra.mxu0 %v559
  %737 = vmatpush.bf16.msra.mxu0 %v558
  %738 = vmatpush.bf16.msra.mxu0 %v557
  %739 = vmatpush.bf16.msra.mxu0 %v556
  %740 = vmatpush.bf16.msra.mxu0 %v555
  %741 = vmatpush.bf16.msra.mxu0 %v554
  %742 = vmatmul.bf16.gmra.mxu0 %v206
  %v743 = vpop.f32.mrf.mxu0
  %v744 = vadd.f32 %v730, %v743
  %v745 = vpop.f32.mrf.mxu0
  %v746 = vadd.f32 %v732, %v745
  %747 = vdwg.mxu0
  %748 = vmatpush.bf16.msra.mxu0 %v569
  %749 = vmatpush.bf16.msra.mxu0 %v568
  %750 = vmatpush.bf16.msra.mxu0 %v567
  %751 = vmatpush.bf16.msra.mxu0 %v566
  %752 = vmatpush.bf16.msra.mxu0 %v565
  %753 = vmatpush.bf16.msra.mxu0 %v564
  %754 = vmatpush.bf16.msra.mxu0 %v563
  %755 = vmatpush.bf16.msra.mxu0 %v562
  %756 = vmatmul.bf16.gmra.mxu0 %v207
  %v757 = vpop.f32.mrf.mxu0
  %v758 = vadd.f32 %v744, %v757
  %v759 = vpop.f32.mrf.mxu0
  %v760 = vadd.f32 %v746, %v759
  %761 = vdwg.mxu0
  %762 = vmatpush.bf16.msra.mxu0 %v577
  %763 = vmatpush.bf16.msra.mxu0 %v576
  %764 = vmatpush.bf16.msra.mxu0 %v575
  %765 = vmatpush.bf16.msra.mxu0 %v574
  %766 = vmatpush.bf16.msra.mxu0 %v573
  %767 = vmatpush.bf16.msra.mxu0 %v572
  %768 = vmatpush.bf16.msra.mxu0 %v571
  %769 = vmatpush.bf16.msra.mxu0 %v570
  %770 = vmatmul.bf16.gmra.mxu0 %v208
  %v771 = vpop.f32.mrf.mxu0
  %v772 = vadd.f32 %v758, %v771
  %v773 = vpop.f32.mrf.mxu0
  %v774 = vadd.f32 %v760, %v773
  %775 = vdwg.mxu0
  %v776 = vmax.f32 %v772, 0.0
  %v777 = vmax.f32 %v774, 0.0
  %v778 = vpack.c.bf16 %v776, %v776
  %v779 = vpack.c.bf16 %v777, %v777
  %780 = vst [vmem:[%s3] sm:$0xf] %v778
  %781 = vst [vmem:[%s3 + $0x4] sm:$0xf] %v779
  // Predicated region
  $region14: #{dueling_dqn_forward.6} parent=0 // pred_check
    _
  $region15: #{dueling_dqn_forward.6} parent=0 // pred_check_branch
    %783 = sbr.rel (0) target = $region17
  $region16: #{dueling_dqn_forward.6} parent=0 // pred_region
    _
  $region17: #{dueling_dqn_forward.6} parent=0 // pred_fallthru
    _
  // Predicated region
  $region18: #{dueling_dqn_forward.6} parent=0 // pred_check
    _
  $region19: #{dueling_dqn_forward.6} parent=0 // pred_check_branch
    %785 = sbr.rel (0) target = $region21
  $region20: #{dueling_dqn_forward.6} parent=0 // pred_region
    _
  $region21: #{dueling_dqn_forward.6} parent=0 // pred_fallthru
    _

// kernel: dueling_dqn_forward.7
$region0: #{dueling_dqn_forward.7}
  #allocation0 [shape = 'u32[]', space=smem, size = 0x4, offset = 0x4, fixed_abs, tag = 'smem constant byte address 0x4 - core index']
  #allocation1 [shape = 'u32[72,128]{1,0:T(1,128)}', space=vmem, size = 0x9000, scoped, tag = 'internal scratch']
  %s0 = inlined_call_operand.vmem [shape: bf16[16,128], index: 0, kind: input, shape index: {}]
  %s1 = inlined_call_operand.vmem [shape: bf16[128,1024], index: 1, kind: input, shape index: {}]
  %s2 = inlined_call_operand.vmem [shape: f32[1,1024], index: 2, kind: input, shape index: {}]
  %s3 = inlined_call_operand.vmem [shape: bf16[1024,128], index: 3, kind: input, shape index: {}]
  %s4 = inlined_call_operand.vmem [shape: f32[1,128], index: 4, kind: input, shape index: {}]
  %s5 = inlined_call_operand.vmem [shape: f32[16,128], index: 5, kind: output, shape index: {}]
  %s6 = sld [smem:[#allocation0]]
  $region30: #{dueling_dqn_forward.7} parent=0
    _
  %s8 = ssub.s32 1, %s6
  %s9 = scalar_select 0, %s8, %s6
  // Predicated region
  $region2: #{dueling_dqn_forward.7} parent=0 // pred_check
    _
  $region3: #{dueling_dqn_forward.7} parent=0 // pred_check_branch
    %11 = sbr.rel (0) target = $region5
  $region4: #{dueling_dqn_forward.7} parent=0 // pred_region
    _
  $region5: #{dueling_dqn_forward.7} parent=0 // pred_fallthru
    _
  // Predicated region
  $region6: #{dueling_dqn_forward.7} parent=0 // pred_check
    _
  $region7: #{dueling_dqn_forward.7} parent=0 // pred_check_branch
    %13 = sbr.rel (0) target = $region9
  $region8: #{dueling_dqn_forward.7} parent=0 // pred_region
    _
  $region9: #{dueling_dqn_forward.7} parent=0 // pred_fallthru
    _
  // Predicated region
  $region10: #{dueling_dqn_forward.7} parent=0 // pred_check
    _
  $region11: #{dueling_dqn_forward.7} parent=0 // pred_check_branch
    %15 = sbr.rel (0) target = $region13
  $region12: #{dueling_dqn_forward.7} parent=0 // pred_region
    _
  $region13: #{dueling_dqn_forward.7} parent=0 // pred_fallthru
    _
  // Predicated region
  $region14: #{dueling_dqn_forward.7} parent=0 // pred_check
    _
  $region15: #{dueling_dqn_forward.7} parent=0 // pred_check_branch
    %17 = sbr.rel (0) target = $region17
  $region16: #{dueling_dqn_forward.7} parent=0 // pred_region
    _
  $region17: #{dueling_dqn_forward.7} parent=0 // pred_fallthru
    _
  // Predicated region
  $region18: #{dueling_dqn_forward.7} parent=0 // pred_check
    _
  $region19: #{dueling_dqn_forward.7} parent=0 // pred_check_branch
    %19 = sbr.rel (0) target = $region21
  $region20: #{dueling_dqn_forward.7} parent=0 // pred_region
    _
  $region21: #{dueling_dqn_forward.7} parent=0 // pred_fallthru
    _
  %v20 = vld [vmem:[%s0] sm:$0xf]
  %v21 = vld [vmem:[%s0 + $0x4] sm:$0xf]
  %v22 = vld [vmem:[%s1] sm:$0xff]
  %v23 = vld [vmem:[%s1 + $0x8] sm:$0xff]
  %v24 = vld [vmem:[%s1 + $0x10] sm:$0xff]
  %v25 = vld [vmem:[%s1 + $0x18] sm:$0xff]
  %v26 = vld [vmem:[%s1 + $0x20] sm:$0xff]
  %v27 = vld [vmem:[%s1 + $0x28] sm:$0xff]
  %v28 = vld [vmem:[%s1 + $0x30] sm:$0xff]
  %v29 = vld [vmem:[%s1 + $0x38] sm:$0xff]
  %v30 = vld [vmem:[%s1 + $0x40] sm:$0xff]
  %v31 = vld [vmem:[%s1 + $0x48] sm:$0xff]
  %v32 = vld [vmem:[%s1 + $0x50] sm:$0xff]
  %v33 = vld [vmem:[%s1 + $0x58] sm:$0xff]
  %v34 = vld [vmem:[%s1 + $0x60] sm:$0xff]
  %v35 = vld [vmem:[%s1 + $0x68] sm:$0xff]
  %v36 = vld [vmem:[%s1 + $0x70] sm:$0xff]
  %v37 = vld [vmem:[%s1 + $0x78] sm:$0xff]
  %v38 = vld [vmem:[%s1 + $0x80] sm:$0xff]
  %v39 = vld [vmem:[%s1 + $0x88] sm:$0xff]
  %v40 = vld [vmem:[%s1 + $0x90] sm:$0xff]
  %v41 = vld [vmem:[%s1 + $0x98] sm:$0xff]
  %v42 = vld [vmem:[%s1 + $0xa0] sm:$0xff]
  %v43 = vld [vmem:[%s1 + $0xa8] sm:$0xff]
  %v44 = vld [vmem:[%s1 + $0xb0] sm:$0xff]
  %v45 = vld [vmem:[%s1 + $0xb8] sm:$0xff]
  %v46 = vld [vmem:[%s1 + $0xc0] sm:$0xff]
  %v47 = vld [vmem:[%s1 + $0xc8] sm:$0xff]
  %v48 = vld [vmem:[%s1 + $0xd0] sm:$0xff]
  %v49 = vld [vmem:[%s1 + $0xd8] sm:$0xff]
  %v50 = vld [vmem:[%s1 + $0xe0] sm:$0xff]
  %v51 = vld [vmem:[%s1 + $0xe8] sm:$0xff]
  %v52 = vld [vmem:[%s1 + $0xf0] sm:$0xff]
  %v53 = vld [vmem:[%s1 + $0xf8] sm:$0xff]
  %v54 = vld [vmem:[%s1 + $0x100] sm:$0xff]
  %v55 = vld [vmem:[%s1 + $0x108] sm:$0xff]
  %v56 = vld [vmem:[%s1 + $0x110] sm:$0xff]
  %v57 = vld [vmem:[%s1 + $0x118] sm:$0xff]
  %v58 = vld [vmem:[%s1 + $0x120] sm:$0xff]
  %v59 = vld [vmem:[%s1 + $0x128] sm:$0xff]
  %v60 = vld [vmem:[%s1 + $0x130] sm:$0xff]
  %v61 = vld [vmem:[%s1 + $0x138] sm:$0xff]
  %v62 = vld [vmem:[%s1 + $0x140] sm:$0xff]
  %v63 = vld [vmem:[%s1 + $0x148] sm:$0xff]
  %v64 = vld [vmem:[%s1 + $0x150] sm:$0xff]
  %v65 = vld [vmem:[%s1 + $0x158] sm:$0xff]
  %v66 = vld [vmem:[%s1 + $0x160] sm:$0xff]
  %v67 = vld [vmem:[%s1 + $0x168] sm:$0xff]
  %v68 = vld [vmem:[%s1 + $0x170] sm:$0xff]
  %v69 = vld [vmem:[%s1 + $0x178] sm:$0xff]
  %v70 = vld [vmem:[%s1 + $0x180] sm:$0xff]
  %v71 = vld [vmem:[%s1 + $0x188] sm:$0xff]
  %v72 = vld [vmem:[%s1 + $0x190] sm:$0xff]
  %v73 = vld [vmem:[%s1 + $0x198] sm:$0xff]
  %v74 = vld [vmem:[%s1 + $0x1a0] sm:$0xff]
  %v75 = vld [vmem:[%s1 + $0x1a8] sm:$0xff]
  %v76 = vld [vmem:[%s1 + $0x1b0] sm:$0xff]
  %v77 = vld [vmem:[%s1 + $0x1b8] sm:$0xff]
  %v78 = vld [vmem:[%s1 + $0x1c0] sm:$0xff]
  %v79 = vld [vmem:[%s1 + $0x1c8] sm:$0xff]
  %v80 = vld [vmem:[%s1 + $0x1d0] sm:$0xff]
  %v81 = vld [vmem:[%s1 + $0x1d8] sm:$0xff]
  %v82 = vld [vmem:[%s1 + $0x1e0] sm:$0xff]
  %v83 = vld [vmem:[%s1 + $0x1e8] sm:$0xff]
  %v84 = vld [vmem:[%s1 + $0x1f0] sm:$0xff]
  %v85 = vld [vmem:[%s1 + $0x1f8] sm:$0xff]
  %v86 = vld [vmem:[%s2] sm:$0xff]
  %v88 = vperm.slane %v86, 0
  %v89 = vperm.slane %v86, 1
  %v90 = vperm.slane %v86, 2
  %v91 = vperm.slane %v86, 3
  %v92 = vperm.slane %v86, 4
  %v93 = vperm.slane %v86, 5
  %v94 = vperm.slane %v86, 6
  %v95 = vperm.slane %v86, 7
  %v106 = vunpack.c.l.b16 %v20
  %v107 = vunpack.c.l.b16 %v21
  %v108 = vpack.c.b16 %v107, %v106
  %v174 = vunpack.c.l.b16 %v22
  %v175 = vunpack.c.h.b16 %v22
  %v176 = vunpack.c.l.b16 %v23
  %v177 = vunpack.c.h.b16 %v23
  %v178 = vunpack.c.l.b16 %v24
  %v179 = vunpack.c.h.b16 %v24
  %v180 = vunpack.c.l.b16 %v25
  %v181 = vunpack.c.h.b16 %v25
  %v182 = vunpack.c.l.b16 %v26
  %v183 = vunpack.c.h.b16 %v26
  %v184 = vunpack.c.l.b16 %v27
  %v185 = vunpack.c.h.b16 %v27
  %v186 = vunpack.c.l.b16 %v28
  %v187 = vunpack.c.h.b16 %v28
  %v188 = vunpack.c.l.b16 %v29
  %v189 = vunpack.c.h.b16 %v29
  %v190 = vunpack.c.l.b16 %v30
  %v191 = vunpack.c.h.b16 %v30
  %v192 = vunpack.c.l.b16 %v31
  %v193 = vunpack.c.h.b16 %v31
  %v194 = vunpack.c.l.b16 %v32
  %v195 = vunpack.c.h.b16 %v32
  %v196 = vunpack.c.l.b16 %v33
  %v197 = vunpack.c.h.b16 %v33
  %v198 = vunpack.c.l.b16 %v34
  %v199 = vunpack.c.h.b16 %v34
  %v200 = vunpack.c.l.b16 %v35
  %v201 = vunpack.c.h.b16 %v35
  %v202 = vunpack.c.l.b16 %v36
  %v203 = vunpack.c.h.b16 %v36
  %v204 = vunpack.c.l.b16 %v37
  %v205 = vunpack.c.h.b16 %v37
  %v206 = vunpack.c.l.b16 %v38
  %v207 = vunpack.c.h.b16 %v38
  %v208 = vunpack.c.l.b16 %v39
  %v209 = vunpack.c.h.b16 %v39
  %v210 = vunpack.c.l.b16 %v40
  %v211 = vunpack.c.h.b16 %v40
  %v212 = vunpack.c.l.b16 %v41
  %v213 = vunpack.c.h.b16 %v41
  %v214 = vunpack.c.l.b16 %v42
  %v215 = vunpack.c.h.b16 %v42
  %v216 = vunpack.c.l.b16 %v43
  %v217 = vunpack.c.h.b16 %v43
  %v218 = vunpack.c.l.b16 %v44
  %v219 = vunpack.c.h.b16 %v44
  %v220 = vunpack.c.l.b16 %v45
  %v221 = vunpack.c.h.b16 %v45
  %v222 = vunpack.c.l.b16 %v46
  %v223 = vunpack.c.h.b16 %v46
  %v224 = vunpack.c.l.b16 %v47
  %v225 = vunpack.c.h.b16 %v47
  %v226 = vunpack.c.l.b16 %v48
  %v227 = vunpack.c.h.b16 %v48
  %v228 = vunpack.c.l.b16 %v49
  %v229 = vunpack.c.h.b16 %v49
  %v230 = vunpack.c.l.b16 %v50
  %v231 = vunpack.c.h.b16 %v50
  %v232 = vunpack.c.l.b16 %v51
  %v233 = vunpack.c.h.b16 %v51
  %v234 = vunpack.c.l.b16 %v52
  %v235 = vunpack.c.h.b16 %v52
  %v236 = vunpack.c.l.b16 %v53
  %v237 = vunpack.c.h.b16 %v53
  %v238 = vunpack.c.l.b16 %v54
  %v239 = vunpack.c.h.b16 %v54
  %v240 = vunpack.c.l.b16 %v55
  %v241 = vunpack.c.h.b16 %v55
  %v242 = vunpack.c.l.b16 %v56
  %v243 = vunpack.c.h.b16 %v56
  %v244 = vunpack.c.l.b16 %v57
  %v245 = vunpack.c.h.b16 %v57
  %v246 = vunpack.c.l.b16 %v58
  %v247 = vunpack.c.h.b16 %v58
  %v248 = vunpack.c.l.b16 %v59
  %v249 = vunpack.c.h.b16 %v59
  %v250 = vunpack.c.l.b16 %v60
  %v251 = vunpack.c.h.b16 %v60
  %v252 = vunpack.c.l.b16 %v61
  %v253 = vunpack.c.h.b16 %v61
  %v254 = vunpack.c.l.b16 %v62
  %v255 = vunpack.c.h.b16 %v62
  %v256 = vunpack.c.l.b16 %v63
  %v257 = vunpack.c.h.b16 %v63
  %v258 = vunpack.c.l.b16 %v64
  %v259 = vunpack.c.h.b16 %v64
  %v260 = vunpack.c.l.b16 %v65
  %v261 = vunpack.c.h.b16 %v65
  %v262 = vunpack.c.l.b16 %v66
  %v263 = vunpack.c.h.b16 %v66
  %v264 = vunpack.c.l.b16 %v67
  %v265 = vunpack.c.h.b16 %v67
  %v266 = vunpack.c.l.b16 %v68
  %v267 = vunpack.c.h.b16 %v68
  %v268 = vunpack.c.l.b16 %v69
  %v269 = vunpack.c.h.b16 %v69
  %v270 = vunpack.c.l.b16 %v70
  %v271 = vunpack.c.h.b16 %v70
  %v272 = vunpack.c.l.b16 %v71
  %v273 = vunpack.c.h.b16 %v71
  %v274 = vunpack.c.l.b16 %v72
  %v275 = vunpack.c.h.b16 %v72
  %v276 = vunpack.c.l.b16 %v73
  %v277 = vunpack.c.h.b16 %v73
  %v278 = vunpack.c.l.b16 %v74
  %v279 = vunpack.c.h.b16 %v74
  %v280 = vunpack.c.l.b16 %v75
  %v281 = vunpack.c.h.b16 %v75
  %v282 = vunpack.c.l.b16 %v76
  %v283 = vunpack.c.h.b16 %v76
  %v284 = vunpack.c.l.b16 %v77
  %v285 = vunpack.c.h.b16 %v77
  %v286 = vunpack.c.l.b16 %v78
  %v287 = vunpack.c.h.b16 %v78
  %v288 = vunpack.c.l.b16 %v79
  %v289 = vunpack.c.h.b16 %v79
  %v290 = vunpack.c.l.b16 %v80
  %v291 = vunpack.c.h.b16 %v80
  %v292 = vunpack.c.l.b16 %v81
  %v293 = vunpack.c.h.b16 %v81
  %v294 = vunpack.c.l.b16 %v82
  %v295 = vunpack.c.h.b16 %v82
  %v296 = vunpack.c.l.b16 %v83
  %v297 = vunpack.c.h.b16 %v83
  %v298 = vunpack.c.l.b16 %v84
  %v299 = vunpack.c.h.b16 %v84
  %v300 = vunpack.c.l.b16 %v85
  %v301 = vunpack.c.h.b16 %v85
  %v302 = vpack.c.b16 %v182, %v174
  %v303 = vpack.c.b16 %v183, %v175
  %v304 = vpack.c.b16 %v184, %v176
  %v305 = vpack.c.b16 %v185, %v177
  %v306 = vpack.c.b16 %v186, %v178
  %v307 = vpack.c.b16 %v187, %v179
  %v308 = vpack.c.b16 %v188, %v180
  %v309 = vpack.c.b16 %v189, %v181
  %v310 = vpack.c.b16 %v198, %v190
  %v311 = vpack.c.b16 %v199, %v191
  %v312 = vpack.c.b16 %v200, %v192
  %v313 = vpack.c.b16 %v201, %v193
  %v314 = vpack.c.b16 %v202, %v194
  %v315 = vpack.c.b16 %v203, %v195
  %v316 = vpack.c.b16 %v204, %v196
  %v317 = vpack.c.b16 %v205, %v197
  %v318 = vpack.c.b16 %v214, %v206
  %v319 = vpack.c.b16 %v215, %v207
  %v320 = vpack.c.b16 %v216, %v208
  %v321 = vpack.c.b16 %v217, %v209
  %v322 = vpack.c.b16 %v218, %v210
  %v323 = vpack.c.b16 %v219, %v211
  %v324 = vpack.c.b16 %v220, %v212
  %v325 = vpack.c.b16 %v221, %v213
  %v326 = vpack.c.b16 %v230, %v222
  %v327 = vpack.c.b16 %v231, %v223
  %v328 = vpack.c.b16 %v232, %v224
  %v329 = vpack.c.b16 %v233, %v225
  %v330 = vpack.c.b16 %v234, %v226
  %v331 = vpack.c.b16 %v235, %v227
  %v332 = vpack.c.b16 %v236, %v228
  %v333 = vpack.c.b16 %v237, %v229
  %v334 = vpack.c.b16 %v246, %v238
  %v335 = vpack.c.b16 %v247, %v239
  %v336 = vpack.c.b16 %v248, %v240
  %v337 = vpack.c.b16 %v249, %v241
  %v338 = vpack.c.b16 %v250, %v242
  %v339 = vpack.c.b16 %v251, %v243
  %v340 = vpack.c.b16 %v252, %v244
  %v341 = vpack.c.b16 %v253, %v245
  %v342 = vpack.c.b16 %v262, %v254
  %v343 = vpack.c.b16 %v263, %v255
  %v344 = vpack.c.b16 %v264, %v256
  %v345 = vpack.c.b16 %v265, %v257
  %v346 = vpack.c.b16 %v266, %v258
  %v347 = vpack.c.b16 %v267, %v259
  %v348 = vpack.c.b16 %v268, %v260
  %v349 = vpack.c.b16 %v269, %v261
  %v350 = vpack.c.b16 %v278, %v270
  %v351 = vpack.c.b16 %v279, %v271
  %v352 = vpack.c.b16 %v280, %v272
  %v353 = vpack.c.b16 %v281, %v273
  %v354 = vpack.c.b16 %v282, %v274
  %v355 = vpack.c.b16 %v283, %v275
  %v356 = vpack.c.b16 %v284, %v276
  %v357 = vpack.c.b16 %v285, %v277
  %v358 = vpack.c.b16 %v294, %v286
  %v359 = vpack.c.b16 %v295, %v287
  %v360 = vpack.c.b16 %v296, %v288
  %v361 = vpack.c.b16 %v297, %v289
  %v362 = vpack.c.b16 %v298, %v290
  %v363 = vpack.c.b16 %v299, %v291
  %v364 = vpack.c.b16 %v300, %v292
  %v365 = vpack.c.b16 %v301, %v293
  %430 = vmatpush.bf16.msra.mxu0 %v358
  %431 = vmatpush.bf16.msra.mxu0 %v350
  %432 = vmatpush.bf16.msra.mxu0 %v342
  %433 = vmatpush.bf16.msra.mxu0 %v334
  %434 = vmatpush.bf16.msra.mxu0 %v326
  %435 = vmatpush.bf16.msra.mxu0 %v318
  %436 = vmatpush.bf16.msra.mxu0 %v310
  %437 = vmatpush.bf16.msra.mxu0 %v302
  %438 = vmatmul.bf16.gmra.mxu0 %v108
  %v439 = vpop.f32.mrf.mxu0
  %v440 = vadd.f32 %v88, %v439
  %v441 = vpop.f32.mrf.mxu0
  %v442 = vadd.f32 %v88, %v441
  %443 = vdwg.mxu0
  %444 = vmatpush.bf16.msra.mxu0 %v359
  %445 = vmatpush.bf16.msra.mxu0 %v351
  %446 = vmatpush.bf16.msra.mxu0 %v343
  %447 = vmatpush.bf16.msra.mxu0 %v335
  %448 = vmatpush.bf16.msra.mxu0 %v327
  %449 = vmatpush.bf16.msra.mxu0 %v319
  %450 = vmatpush.bf16.msra.mxu0 %v311
  %451 = vmatpush.bf16.msra.mxu0 %v303
  %452 = vmatmul.bf16.gmra.mxu0 %v108
  %v453 = vpop.f32.mrf.mxu0
  %v454 = vadd.f32 %v89, %v453
  %v455 = vpop.f32.mrf.mxu0
  %v456 = vadd.f32 %v89, %v455
  %457 = vdwg.mxu0
  %458 = vmatpush.bf16.msra.mxu0 %v360
  %459 = vmatpush.bf16.msra.mxu0 %v352
  %460 = vmatpush.bf16.msra.mxu0 %v344
  %461 = vmatpush.bf16.msra.mxu0 %v336
  %462 = vmatpush.bf16.msra.mxu0 %v328
  %463 = vmatpush.bf16.msra.mxu0 %v320
  %464 = vmatpush.bf16.msra.mxu0 %v312
  %465 = vmatpush.bf16.msra.mxu0 %v304
  %466 = vmatmul.bf16.gmra.mxu0 %v108
  %v467 = vpop.f32.mrf.mxu0
  %v468 = vadd.f32 %v90, %v467
  %v469 = vpop.f32.mrf.mxu0
  %v470 = vadd.f32 %v90, %v469
  %471 = vdwg.mxu0
  %472 = vmatpush.bf16.msra.mxu0 %v361
  %473 = vmatpush.bf16.msra.mxu0 %v353
  %474 = vmatpush.bf16.msra.mxu0 %v345
  %475 = vmatpush.bf16.msra.mxu0 %v337
  %476 = vmatpush.bf16.msra.mxu0 %v329
  %477 = vmatpush.bf16.msra.mxu0 %v321
  %478 = vmatpush.bf16.msra.mxu0 %v313
  %479 = vmatpush.bf16.msra.mxu0 %v305
  %480 = vmatmul.bf16.gmra.mxu0 %v108
  %v481 = vpop.f32.mrf.mxu0
  %v482 = vadd.f32 %v91, %v481
  %v483 = vpop.f32.mrf.mxu0
  %v484 = vadd.f32 %v91, %v483
  %485 = vdwg.mxu0
  %486 = vmatpush.bf16.msra.mxu0 %v362
  %487 = vmatpush.bf16.msra.mxu0 %v354
  %488 = vmatpush.bf16.msra.mxu0 %v346
  %489 = vmatpush.bf16.msra.mxu0 %v338
  %490 = vmatpush.bf16.msra.mxu0 %v330
  %491 = vmatpush.bf16.msra.mxu0 %v322
  %492 = vmatpush.bf16.msra.mxu0 %v314
  %493 = vmatpush.bf16.msra.mxu0 %v306
  %494 = vmatmul.bf16.gmra.mxu0 %v108
  %v495 = vpop.f32.mrf.mxu0
  %v496 = vadd.f32 %v92, %v495
  %v497 = vpop.f32.mrf.mxu0
  %v498 = vadd.f32 %v92, %v497
  %499 = vdwg.mxu0
  %500 = vmatpush.bf16.msra.mxu0 %v363
  %501 = vmatpush.bf16.msra.mxu0 %v355
  %502 = vmatpush.bf16.msra.mxu0 %v347
  %503 = vmatpush.bf16.msra.mxu0 %v339
  %504 = vmatpush.bf16.msra.mxu0 %v331
  %505 = vmatpush.bf16.msra.mxu0 %v323
  %506 = vmatpush.bf16.msra.mxu0 %v315
  %507 = vmatpush.bf16.msra.mxu0 %v307
  %508 = vmatmul.bf16.gmra.mxu0 %v108
  %v509 = vpop.f32.mrf.mxu0
  %v510 = vadd.f32 %v93, %v509
  %v511 = vpop.f32.mrf.mxu0
  %v512 = vadd.f32 %v93, %v511
  %513 = vdwg.mxu0
  %514 = vmatpush.bf16.msra.mxu0 %v364
  %515 = vmatpush.bf16.msra.mxu0 %v356
  %516 = vmatpush.bf16.msra.mxu0 %v348
  %517 = vmatpush.bf16.msra.mxu0 %v340
  %518 = vmatpush.bf16.msra.mxu0 %v332
  %519 = vmatpush.bf16.msra.mxu0 %v324
  %520 = vmatpush.bf16.msra.mxu0 %v316
  %521 = vmatpush.bf16.msra.mxu0 %v308
  %522 = vmatmul.bf16.gmra.mxu0 %v108
  %v523 = vpop.f32.mrf.mxu0
  %v524 = vadd.f32 %v94, %v523
  %v525 = vpop.f32.mrf.mxu0
  %v526 = vadd.f32 %v94, %v525
  %527 = vdwg.mxu0
  %528 = vmatpush.bf16.msra.mxu0 %v365
  %529 = vmatpush.bf16.msra.mxu0 %v357
  %530 = vmatpush.bf16.msra.mxu0 %v349
  %531 = vmatpush.bf16.msra.mxu0 %v341
  %532 = vmatpush.bf16.msra.mxu0 %v333
  %533 = vmatpush.bf16.msra.mxu0 %v325
  %534 = vmatpush.bf16.msra.mxu0 %v317
  %535 = vmatpush.bf16.msra.mxu0 %v309
  %536 = vmatmul.bf16.gmra.mxu0 %v108
  %v537 = vpop.f32.mrf.mxu0
  %v538 = vadd.f32 %v95, %v537
  %v539 = vpop.f32.mrf.mxu0
  %v540 = vadd.f32 %v95, %v539
  %541 = vdwg.mxu0
  %v542 = vmax.f32 %v440, 0.0
  %v543 = vmax.f32 %v454, 0.0
  %v544 = vmax.f32 %v468, 0.0
  %v545 = vmax.f32 %v482, 0.0
  %v546 = vmax.f32 %v496, 0.0
  %v547 = vmax.f32 %v510, 0.0
  %v548 = vmax.f32 %v524, 0.0
  %v549 = vmax.f32 %v538, 0.0
  %v550 = vmax.f32 %v442, 0.0
  %v551 = vmax.f32 %v456, 0.0
  %v552 = vmax.f32 %v470, 0.0
  %v553 = vmax.f32 %v484, 0.0
  %v554 = vmax.f32 %v498, 0.0
  %v555 = vmax.f32 %v512, 0.0
  %v556 = vmax.f32 %v526, 0.0
  %v557 = vmax.f32 %v540, 0.0
  %v558 = vpack.c.bf16 %v550, %v542
  %v559 = vpack.c.bf16 %v551, %v543
  %v560 = vpack.c.bf16 %v552, %v544
  %v561 = vpack.c.bf16 %v553, %v545
  %v562 = vpack.c.bf16 %v554, %v546
  %v563 = vpack.c.bf16 %v555, %v547
  %v564 = vpack.c.bf16 %v556, %v548
  %v565 = vpack.c.bf16 %v557, %v549
  %v566 = vld [vmem:[%s3] sm:$0xf]
  %v567 = vld [vmem:[%s3 + $0x4] sm:$0xf]
  %v568 = vld [vmem:[%s3 + $0x8] sm:$0xf]
  %v569 = vld [vmem:[%s3 + $0xc] sm:$0xf]
  %v570 = vld [vmem:[%s3 + $0x10] sm:$0xf]
  %v571 = vld [vmem:[%s3 + $0x14] sm:$0xf]
  %v572 = vld [vmem:[%s3 + $0x18] sm:$0xf]
  %v573 = vld [vmem:[%s3 + $0x1c] sm:$0xf]
  %v574 = vld [vmem:[%s3 + $0x20] sm:$0xf]
  %v575 = vld [vmem:[%s3 + $0x24] sm:$0xf]
  %v576 = vld [vmem:[%s3 + $0x28] sm:$0xf]
  %v577 = vld [vmem:[%s3 + $0x2c] sm:$0xf]
  %v578 = vld [vmem:[%s3 + $0x30] sm:$0xf]
  %v579 = vld [vmem:[%s3 + $0x34] sm:$0xf]
  %v580 = vld [vmem:[%s3 + $0x38] sm:$0xf]
  %v581 = vld [vmem:[%s3 + $0x3c] sm:$0xf]
  %v582 = vld [vmem:[%s3 + $0x40] sm:$0xf]
  %v583 = vld [vmem:[%s3 + $0x44] sm:$0xf]
  %v584 = vld [vmem:[%s3 + $0x48] sm:$0xf]
  %v585 = vld [vmem:[%s3 + $0x4c] sm:$0xf]
  %v586 = vld [vmem:[%s3 + $0x50] sm:$0xf]
  %v587 = vld [vmem:[%s3 + $0x54] sm:$0xf]
  %v588 = vld [vmem:[%s3 + $0x58] sm:$0xf]
  %v589 = vld [vmem:[%s3 + $0x5c] sm:$0xf]
  %v590 = vld [vmem:[%s3 + $0x60] sm:$0xf]
  %v591 = vld [vmem:[%s3 + $0x64] sm:$0xf]
  %v592 = vld [vmem:[%s3 + $0x68] sm:$0xf]
  %v593 = vld [vmem:[%s3 + $0x6c] sm:$0xf]
  %v594 = vld [vmem:[%s3 + $0x70] sm:$0xf]
  %v595 = vld [vmem:[%s3 + $0x74] sm:$0xf]
  %v596 = vld [vmem:[%s3 + $0x78] sm:$0xf]
  %v597 = vld [vmem:[%s3 + $0x7c] sm:$0xf]
  %v598 = vld [vmem:[%s3 + $0x80] sm:$0xf]
  %v599 = vld [vmem:[%s3 + $0x84] sm:$0xf]
  %v600 = vld [vmem:[%s3 + $0x88] sm:$0xf]
  %v601 = vld [vmem:[%s3 + $0x8c] sm:$0xf]
  %v602 = vld [vmem:[%s3 + $0x90] sm:$0xf]
  %v603 = vld [vmem:[%s3 + $0x94] sm:$0xf]
  %v604 = vld [vmem:[%s3 + $0x98] sm:$0xf]
  %v605 = vld [vmem:[%s3 + $0x9c] sm:$0xf]
  %v606 = vld [vmem:[%s3 + $0xa0] sm:$0xf]
  %v607 = vld [vmem:[%s3 + $0xa4] sm:$0xf]
  %v608 = vld [vmem:[%s3 + $0xa8] sm:$0xf]
  %v609 = vld [vmem:[%s3 + $0xac] sm:$0xf]
  %v610 = vld [vmem:[%s3 + $0xb0] sm:$0xf]
  %v611 = vld [vmem:[%s3 + $0xb4] sm:$0xf]
  %v612 = vld [vmem:[%s3 + $0xb8] sm:$0xf]
  %v613 = vld [vmem:[%s3 + $0xbc] sm:$0xf]
  %v614 = vld [vmem:[%s3 + $0xc0] sm:$0xf]
  %v615 = vld [vmem:[%s3 + $0xc4] sm:$0xf]
  %v616 = vld [vmem:[%s3 + $0xc8] sm:$0xf]
  %v617 = vld [vmem:[%s3 + $0xcc] sm:$0xf]
  %v618 = vld [vmem:[%s3 + $0xd0] sm:$0xf]
  %v619 = vld [vmem:[%s3 + $0xd4] sm:$0xf]
  %v620 = vld [vmem:[%s3 + $0xd8] sm:$0xf]
  %v621 = vld [vmem:[%s3 + $0xdc] sm:$0xf]
  %v622 = vld [vmem:[%s3 + $0xe0] sm:$0xf]
  %v623 = vld [vmem:[%s3 + $0xe4] sm:$0xf]
  %v624 = vld [vmem:[%s3 + $0xe8] sm:$0xf]
  %v625 = vld [vmem:[%s3 + $0xec] sm:$0xf]
  %v626 = vld [vmem:[%s3 + $0xf0] sm:$0xf]
  %v627 = vld [vmem:[%s3 + $0xf4] sm:$0xf]
  %v628 = vld [vmem:[%s3 + $0xf8] sm:$0xf]
  %v629 = vld [vmem:[%s3 + $0xfc] sm:$0xf]
  %v630 = vld [vmem:[%s3 + $0x100] sm:$0xf]
  %v631 = vld [vmem:[%s3 + $0x104] sm:$0xf]
  %v632 = vld [vmem:[%s3 + $0x108] sm:$0xf]
  %v633 = vld [vmem:[%s3 + $0x10c] sm:$0xf]
  %v634 = vld [vmem:[%s3 + $0x110] sm:$0xf]
  %v635 = vld [vmem:[%s3 + $0x114] sm:$0xf]
  %v636 = vld [vmem:[%s3 + $0x118] sm:$0xf]
  %v637 = vld [vmem:[%s3 + $0x11c] sm:$0xf]
  %v638 = vld [vmem:[%s3 + $0x120] sm:$0xf]
  %v639 = vld [vmem:[%s3 + $0x124] sm:$0xf]
  %v640 = vld [vmem:[%s3 + $0x128] sm:$0xf]
  %v641 = vld [vmem:[%s3 + $0x12c] sm:$0xf]
  %v642 = vld [vmem:[%s3 + $0x130] sm:$0xf]
  %v643 = vld [vmem:[%s3 + $0x134] sm:$0xf]
  %v644 = vld [vmem:[%s3 + $0x138] sm:$0xf]
  %v645 = vld [vmem:[%s3 + $0x13c] sm:$0xf]
  %v646 = vld [vmem:[%s3 + $0x140] sm:$0xf]
  %v647 = vld [vmem:[%s3 + $0x144] sm:$0xf]
  %v648 = vld [vmem:[%s3 + $0x148] sm:$0xf]
  %v649 = vld [vmem:[%s3 + $0x14c] sm:$0xf]
  %v650 = vld [vmem:[%s3 + $0x150] sm:$0xf]
  %v651 = vld [vmem:[%s3 + $0x154] sm:$0xf]
  %v652 = vld [vmem:[%s3 + $0x158] sm:$0xf]
  %v653 = vld [vmem:[%s3 + $0x15c] sm:$0xf]
  %v654 = vld [vmem:[%s3 + $0x160] sm:$0xf]
  %v655 = vld [vmem:[%s3 + $0x164] sm:$0xf]
  %v656 = vld [vmem:[%s3 + $0x168] sm:$0xf]
  %v657 = vld [vmem:[%s3 + $0x16c] sm:$0xf]
  %v658 = vld [vmem:[%s3 + $0x170] sm:$0xf]
  %v659 = vld [vmem:[%s3 + $0x174] sm:$0xf]
  %v660 = vld [vmem:[%s3 + $0x178] sm:$0xf]
  %v661 = vld [vmem:[%s3 + $0x17c] sm:$0xf]
  %v662 = vld [vmem:[%s3 + $0x180] sm:$0xf]
  %v663 = vld [vmem:[%s3 + $0x184] sm:$0xf]
  %v664 = vld [vmem:[%s3 + $0x188] sm:$0xf]
  %v665 = vld [vmem:[%s3 + $0x18c] sm:$0xf]
  %v666 = vld [vmem:[%s3 + $0x190] sm:$0xf]
  %v667 = vld [vmem:[%s3 + $0x194] sm:$0xf]
  %v668 = vld [vmem:[%s3 + $0x198] sm:$0xf]
  %v669 = vld [vmem:[%s3 + $0x19c] sm:$0xf]
  %v670 = vld [vmem:[%s3 + $0x1a0] sm:$0xf]
  %v671 = vld [vmem:[%s3 + $0x1a4] sm:$0xf]
  %v672 = vld [vmem:[%s3 + $0x1a8] sm:$0xf]
  %v673 = vld [vmem:[%s3 + $0x1ac] sm:$0xf]
  %v674 = vld [vmem:[%s3 + $0x1b0] sm:$0xf]
  %v675 = vld [vmem:[%s3 + $0x1b4] sm:$0xf]
  %v676 = vld [vmem:[%s3 + $0x1b8] sm:$0xf]
  %v677 = vld [vmem:[%s3 + $0x1bc] sm:$0xf]
  %v678 = vld [vmem:[%s3 + $0x1c0] sm:$0xf]
  %v679 = vld [vmem:[%s3 + $0x1c4] sm:$0xf]
  %v680 = vld [vmem:[%s3 + $0x1c8] sm:$0xf]
  %v681 = vld [vmem:[%s3 + $0x1cc] sm:$0xf]
  %v682 = vld [vmem:[%s3 + $0x1d0] sm:$0xf]
  %v683 = vld [vmem:[%s3 + $0x1d4] sm:$0xf]
  %v684 = vld [vmem:[%s3 + $0x1d8] sm:$0xf]
  %v685 = vld [vmem:[%s3 + $0x1dc] sm:$0xf]
  %v686 = vld [vmem:[%s3 + $0x1e0] sm:$0xf]
  %v687 = vld [vmem:[%s3 + $0x1e4] sm:$0xf]
  %v688 = vld [vmem:[%s3 + $0x1e8] sm:$0xf]
  %v689 = vld [vmem:[%s3 + $0x1ec] sm:$0xf]
  %v690 = vld [vmem:[%s3 + $0x1f0] sm:$0xf]
  %v691 = vld [vmem:[%s3 + $0x1f4] sm:$0xf]
  %v692 = vld [vmem:[%s3 + $0x1f8] sm:$0xf]
  %v693 = vld [vmem:[%s3 + $0x1fc] sm:$0xf]
  %v694 = vld [vmem:[%s4] sm:$0x1]
  %v696 = vperm.slane %v694, 0
  %v826 = vunpack.c.l.b16 %v566
  %v827 = vunpack.c.l.b16 %v567
  %v828 = vunpack.c.l.b16 %v568
  %v829 = vunpack.c.l.b16 %v569
  %v830 = vunpack.c.l.b16 %v570
  %v831 = vunpack.c.l.b16 %v571
  %v832 = vunpack.c.l.b16 %v572
  %v833 = vunpack.c.l.b16 %v573
  %v834 = vunpack.c.l.b16 %v574
  %v835 = vunpack.c.l.b16 %v575
  %v836 = vunpack.c.l.b16 %v576
  %v837 = vunpack.c.l.b16 %v577
  %v838 = vunpack.c.l.b16 %v578
  %v839 = vunpack.c.l.b16 %v579
  %v840 = vunpack.c.l.b16 %v580
  %v841 = vunpack.c.l.b16 %v581
  %v842 = vunpack.c.l.b16 %v582
  %v843 = vunpack.c.l.b16 %v583
  %v844 = vunpack.c.l.b16 %v584
  %v845 = vunpack.c.l.b16 %v585
  %v846 = vunpack.c.l.b16 %v586
  %v847 = vunpack.c.l.b16 %v587
  %v848 = vunpack.c.l.b16 %v588
  %v849 = vunpack.c.l.b16 %v589
  %v850 = vunpack.c.l.b16 %v590
  %v851 = vunpack.c.l.b16 %v591
  %v852 = vunpack.c.l.b16 %v592
  %v853 = vunpack.c.l.b16 %v593
  %v854 = vunpack.c.l.b16 %v594
  %v855 = vunpack.c.l.b16 %v595
  %v856 = vunpack.c.l.b16 %v596
  %v857 = vunpack.c.l.b16 %v597
  %v858 = vunpack.c.l.b16 %v598
  %v859 = vunpack.c.l.b16 %v599
  %v860 = vunpack.c.l.b16 %v600
  %v861 = vunpack.c.l.b16 %v601
  %v862 = vunpack.c.l.b16 %v602
  %v863 = vunpack.c.l.b16 %v603
  %v864 = vunpack.c.l.b16 %v604
  %v865 = vunpack.c.l.b16 %v605
  %v866 = vunpack.c.l.b16 %v606
  %v867 = vunpack.c.l.b16 %v607
  %v868 = vunpack.c.l.b16 %v608
  %v869 = vunpack.c.l.b16 %v609
  %v870 = vunpack.c.l.b16 %v610
  %v871 = vunpack.c.l.b16 %v611
  %v872 = vunpack.c.l.b16 %v612
  %v873 = vunpack.c.l.b16 %v613
  %v874 = vunpack.c.l.b16 %v614
  %v875 = vunpack.c.l.b16 %v615
  %v876 = vunpack.c.l.b16 %v616
  %v877 = vunpack.c.l.b16 %v617
  %v878 = vunpack.c.l.b16 %v618
  %v879 = vunpack.c.l.b16 %v619
  %v880 = vunpack.c.l.b16 %v620
  %v881 = vunpack.c.l.b16 %v621
  %v882 = vunpack.c.l.b16 %v622
  %v883 = vunpack.c.l.b16 %v623
  %v884 = vunpack.c.l.b16 %v624
  %v885 = vunpack.c.l.b16 %v625
  %v886 = vunpack.c.l.b16 %v626
  %v887 = vunpack.c.l.b16 %v627
  %v888 = vunpack.c.l.b16 %v628
  %v889 = vunpack.c.l.b16 %v629
  %v890 = vunpack.c.l.b16 %v630
  %v891 = vunpack.c.l.b16 %v631
  %v892 = vunpack.c.l.b16 %v632
  %v893 = vunpack.c.l.b16 %v633
  %v894 = vunpack.c.l.b16 %v634
  %v895 = vunpack.c.l.b16 %v635
  %v896 = vunpack.c.l.b16 %v636
  %v897 = vunpack.c.l.b16 %v637
  %v898 = vunpack.c.l.b16 %v638
  %v899 = vunpack.c.l.b16 %v639
  %v900 = vunpack.c.l.b16 %v640
  %v901 = vunpack.c.l.b16 %v641
  %v902 = vunpack.c.l.b16 %v642
  %v903 = vunpack.c.l.b16 %v643
  %v904 = vunpack.c.l.b16 %v644
  %v905 = vunpack.c.l.b16 %v645
  %v906 = vunpack.c.l.b16 %v646
  %v907 = vunpack.c.l.b16 %v647
  %v908 = vunpack.c.l.b16 %v648
  %v909 = vunpack.c.l.b16 %v649
  %v910 = vunpack.c.l.b16 %v650
  %v911 = vunpack.c.l.b16 %v651
  %v912 = vunpack.c.l.b16 %v652
  %v913 = vunpack.c.l.b16 %v653
  %v914 = vunpack.c.l.b16 %v654
  %v915 = vunpack.c.l.b16 %v655
  %v916 = vunpack.c.l.b16 %v656
  %v917 = vunpack.c.l.b16 %v657
  %v918 = vunpack.c.l.b16 %v658
  %v919 = vunpack.c.l.b16 %v659
  %v920 = vunpack.c.l.b16 %v660
  %v921 = vunpack.c.l.b16 %v661
  %v922 = vunpack.c.l.b16 %v662
  %v923 = vunpack.c.l.b16 %v663
  %v924 = vunpack.c.l.b16 %v664
  %v925 = vunpack.c.l.b16 %v665
  %v926 = vunpack.c.l.b16 %v666
  %v927 = vunpack.c.l.b16 %v667
  %v928 = vunpack.c.l.b16 %v668
  %v929 = vunpack.c.l.b16 %v669
  %v930 = vunpack.c.l.b16 %v670
  %v931 = vunpack.c.l.b16 %v671
  %v932 = vunpack.c.l.b16 %v672
  %v933 = vunpack.c.l.b16 %v673
  %v934 = vunpack.c.l.b16 %v674
  %v935 = vunpack.c.l.b16 %v675
  %v936 = vunpack.c.l.b16 %v676
  %v937 = vunpack.c.l.b16 %v677
  %v938 = vunpack.c.l.b16 %v678
  %v939 = vunpack.c.l.b16 %v679
  %v940 = vunpack.c.l.b16 %v680
  %v941 = vunpack.c.l.b16 %v681
  %v942 = vunpack.c.l.b16 %v682
  %v943 = vunpack.c.l.b16 %v683
  %v944 = vunpack.c.l.b16 %v684
  %v945 = vunpack.c.l.b16 %v685
  %v946 = vunpack.c.l.b16 %v686
  %v947 = vunpack.c.l.b16 %v687
  %v948 = vunpack.c.l.b16 %v688
  %v949 = vunpack.c.l.b16 %v689
  %v950 = vunpack.c.l.b16 %v690
  %v951 = vunpack.c.l.b16 %v691
  %v952 = vunpack.c.l.b16 %v692
  %v953 = vunpack.c.l.b16 %v693
  %v954 = vpack.c.b16 %v827, %v826
  %v955 = vpack.c.b16 %v829, %v828
  %v956 = vpack.c.b16 %v831, %v830
  %v957 = vpack.c.b16 %v833, %v832
  %v958 = vpack.c.b16 %v835, %v834
  %v959 = vpack.c.b16 %v837, %v836
  %v960 = vpack.c.b16 %v839, %v838
  %v961 = vpack.c.b16 %v841, %v840
  %v962 = vpack.c.b16 %v843, %v842
  %v963 = vpack.c.b16 %v845, %v844
  %v964 = vpack.c.b16 %v847, %v846
  %v965 = vpack.c.b16 %v849, %v848
  %v966 = vpack.c.b16 %v851, %v850
  %v967 = vpack.c.b16 %v853, %v852
  %v968 = vpack.c.b16 %v855, %v854
  %v969 = vpack.c.b16 %v857, %v856
  %v970 = vpack.c.b16 %v859, %v858
  %v971 = vpack.c.b16 %v861, %v860
  %v972 = vpack.c.b16 %v863, %v862
  %v973 = vpack.c.b16 %v865, %v864
  %v974 = vpack.c.b16 %v867, %v866
  %v975 = vpack.c.b16 %v869, %v868
  %v976 = vpack.c.b16 %v871, %v870
  %v977 = vpack.c.b16 %v873, %v872
  %v978 = vpack.c.b16 %v875, %v874
  %v979 = vpack.c.b16 %v877, %v876
  %v980 = vpack.c.b16 %v879, %v878
  %v981 = vpack.c.b16 %v881, %v880
  %v982 = vpack.c.b16 %v883, %v882
  %v983 = vpack.c.b16 %v885, %v884
  %v984 = vpack.c.b16 %v887, %v886
  %v985 = vpack.c.b16 %v889, %v888
  %v986 = vpack.c.b16 %v891, %v890
  %v987 = vpack.c.b16 %v893, %v892
  %v988 = vpack.c.b16 %v895, %v894
  %v989 = vpack.c.b16 %v897, %v896
  %v990 = vpack.c.b16 %v899, %v898
  %v991 = vpack.c.b16 %v901, %v900
  %v992 = vpack.c.b16 %v903, %v902
  %v993 = vpack.c.b16 %v905, %v904
  %v994 = vpack.c.b16 %v907, %v906
  %v995 = vpack.c.b16 %v909, %v908
  %v996 = vpack.c.b16 %v911, %v910
  %v997 = vpack.c.b16 %v913, %v912
  %v998 = vpack.c.b16 %v915, %v914
  %v999 = vpack.c.b16 %v917, %v916
  %v1000 = vpack.c.b16 %v919, %v918
  %v1001 = vpack.c.b16 %v921, %v920
  %v1002 = vpack.c.b16 %v923, %v922
  %v1003 = vpack.c.b16 %v925, %v924
  %v1004 = vpack.c.b16 %v927, %v926
  %v1005 = vpack.c.b16 %v929, %v928
  %v1006 = vpack.c.b16 %v931, %v930
  %v1007 = vpack.c.b16 %v933, %v932
  %v1008 = vpack.c.b16 %v935, %v934
  %v1009 = vpack.c.b16 %v937, %v936
  %v1010 = vpack.c.b16 %v939, %v938
  %v1011 = vpack.c.b16 %v941, %v940
  %v1012 = vpack.c.b16 %v943, %v942
  %v1013 = vpack.c.b16 %v945, %v944
  %v1014 = vpack.c.b16 %v947, %v946
  %v1015 = vpack.c.b16 %v949, %v948
  %v1016 = vpack.c.b16 %v951, %v950
  %v1017 = vpack.c.b16 %v953, %v952
  %1082 = vmatpush.bf16.msra.mxu0 %v961
  %1083 = vmatpush.bf16.msra.mxu0 %v960
  %1084 = vmatpush.bf16.msra.mxu0 %v959
  %1085 = vmatpush.bf16.msra.mxu0 %v958
  %1086 = vmatpush.bf16.msra.mxu0 %v957
  %1087 = vmatpush.bf16.msra.mxu0 %v956
  %1088 = vmatpush.bf16.msra.mxu0 %v955
  %1089 = vmatpush.bf16.msra.mxu0 %v954
  %1090 = vmatmul.bf16.gmra.mxu0 %v558
  %v1091 = vpop.f32.mrf.mxu0
  %v1092 = vadd.f32 %v696, %v1091
  %v1093 = vpop.f32.mrf.mxu0
  %v1094 = vadd.f32 %v696, %v1093
  %1095 = vdwg.mxu0
  %1096 = vmatpush.bf16.msra.mxu0 %v969
  %1097 = vmatpush.bf16.msra.mxu0 %v968
  %1098 = vmatpush.bf16.msra.mxu0 %v967
  %1099 = vmatpush.bf16.msra.mxu0 %v966
  %1100 = vmatpush.bf16.msra.mxu0 %v965
  %1101 = vmatpush.bf16.msra.mxu0 %v964
  %1102 = vmatpush.bf16.msra.mxu0 %v963
  %1103 = vmatpush.bf16.msra.mxu0 %v962
  %1104 = vmatmul.bf16.gmra.mxu0 %v559
  %v1105 = vpop.f32.mrf.mxu0
  %v1106 = vadd.f32 %v1092, %v1105
  %v1107 = vpop.f32.mrf.mxu0
  %v1108 = vadd.f32 %v1094, %v1107
  %1109 = vdwg.mxu0
  %1110 = vmatpush.bf16.msra.mxu0 %v977
  %1111 = vmatpush.bf16.msra.mxu0 %v976
  %1112 = vmatpush.bf16.msra.mxu0 %v975
  %1113 = vmatpush.bf16.msra.mxu0 %v974
  %1114 = vmatpush.bf16.msra.mxu0 %v973
  %1115 = vmatpush.bf16.msra.mxu0 %v972
  %1116 = vmatpush.bf16.msra.mxu0 %v971
  %1117 = vmatpush.bf16.msra.mxu0 %v970
  %1118 = vmatmul.bf16.gmra.mxu0 %v560
  %v1119 = vpop.f32.mrf.mxu0
  %v1120 = vadd.f32 %v1106, %v1119
  %v1121 = vpop.f32.mrf.mxu0
  %v1122 = vadd.f32 %v1108, %v1121
  %1123 = vdwg.mxu0
  %1124 = vmatpush.bf16.msra.mxu0 %v985
  %1125 = vmatpush.bf16.msra.mxu0 %v984
  %1126 = vmatpush.bf16.msra.mxu0 %v983
  %1127 = vmatpush.bf16.msra.mxu0 %v982
  %1128 = vmatpush.bf16.msra.mxu0 %v981
  %1129 = vmatpush.bf16.msra.mxu0 %v980
  %1130 = vmatpush.bf16.msra.mxu0 %v979
  %1131 = vmatpush.bf16.msra.mxu0 %v978
  %1132 = vmatmul.bf16.gmra.mxu0 %v561
  %v1133 = vpop.f32.mrf.mxu0
  %v1134 = vadd.f32 %v1120, %v1133
  %v1135 = vpop.f32.mrf.mxu0
  %v1136 = vadd.f32 %v1122, %v1135
  %1137 = vdwg.mxu0
  %1138 = vmatpush.bf16.msra.mxu0 %v993
  %1139 = vmatpush.bf16.msra.mxu0 %v992
  %1140 = vmatpush.bf16.msra.mxu0 %v991
  %1141 = vmatpush.bf16.msra.mxu0 %v990
  %1142 = vmatpush.bf16.msra.mxu0 %v989
  %1143 = vmatpush.bf16.msra.mxu0 %v988
  %1144 = vmatpush.bf16.msra.mxu0 %v987
  %1145 = vmatpush.bf16.msra.mxu0 %v986
  %1146 = vmatmul.bf16.gmra.mxu0 %v562
  %v1147 = vpop.f32.mrf.mxu0
  %v1148 = vadd.f32 %v1134, %v1147
  %v1149 = vpop.f32.mrf.mxu0
  %v1150 = vadd.f32 %v1136, %v1149
  %1151 = vdwg.mxu0
  %1152 = vmatpush.bf16.msra.mxu0 %v1001
  %1153 = vmatpush.bf16.msra.mxu0 %v1000
  %1154 = vmatpush.bf16.msra.mxu0 %v999
  %1155 = vmatpush.bf16.msra.mxu0 %v998
  %1156 = vmatpush.bf16.msra.mxu0 %v997
  %1157 = vmatpush.bf16.msra.mxu0 %v996
  %1158 = vmatpush.bf16.msra.mxu0 %v995
  %1159 = vmatpush.bf16.msra.mxu0 %v994
  %1160 = vmatmul.bf16.gmra.mxu0 %v563
  %v1161 = vpop.f32.mrf.mxu0
  %v1162 = vadd.f32 %v1148, %v1161
  %v1163 = vpop.f32.mrf.mxu0
  %v1164 = vadd.f32 %v1150, %v1163
  %1165 = vdwg.mxu0
  %1166 = vmatpush.bf16.msra.mxu0 %v1009
  %1167 = vmatpush.bf16.msra.mxu0 %v1008
  %1168 = vmatpush.bf16.msra.mxu0 %v1007
  %1169 = vmatpush.bf16.msra.mxu0 %v1006
  %1170 = vmatpush.bf16.msra.mxu0 %v1005
  %1171 = vmatpush.bf16.msra.mxu0 %v1004
  %1172 = vmatpush.bf16.msra.mxu0 %v1003
  %1173 = vmatpush.bf16.msra.mxu0 %v1002
  %1174 = vmatmul.bf16.gmra.mxu0 %v564
  %v1175 = vpop.f32.mrf.mxu0
  %v1176 = vadd.f32 %v1162, %v1175
  %v1177 = vpop.f32.mrf.mxu0
  %v1178 = vadd.f32 %v1164, %v1177
  %1179 = vdwg.mxu0
  %1180 = vmatpush.bf16.msra.mxu0 %v1017
  %1181 = vmatpush.bf16.msra.mxu0 %v1016
  %1182 = vmatpush.bf16.msra.mxu0 %v1015
  %1183 = vmatpush.bf16.msra.mxu0 %v1014
  %1184 = vmatpush.bf16.msra.mxu0 %v1013
  %1185 = vmatpush.bf16.msra.mxu0 %v1012
  %1186 = vmatpush.bf16.msra.mxu0 %v1011
  %1187 = vmatpush.bf16.msra.mxu0 %v1010
  %1188 = vmatmul.bf16.gmra.mxu0 %v565
  %v1189 = vpop.f32.mrf.mxu0
  %v1190 = vadd.f32 %v1176, %v1189
  %v1191 = vpop.f32.mrf.mxu0
  %v1192 = vadd.f32 %v1178, %v1191
  %1193 = vdwg.mxu0
  %v1194 = vlaneseq
  %v1195 = vand.u32 %v1194, 127
  %vm1196 = vcmp.ge.s32.totalorder %v1195, 1
  %vm1197 = vcmp.le.s32.totalorder %v1195, 6
  %vm1198 = vmand %vm1196, %vm1197
  %v1199 = vsel %vm1198, %v1190, 0.0
  %v1200 = vsel %vm1198, %v1192, 0.0
  %1201 = vadd.xlane.f32.xlu0 %v1199
  %v1202 = vpop.xlane.xlu0 %1201
  %1203 = vadd.xlane.f32.xlu0 %v1200
  %v1204 = vpop.xlane.xlu0 %1203
  %v1205 = vmul.f32 %v1202, 0.16666667
  %v1206 = vmul.f32 %v1204, 0.16666667
  %v1207 = vsub.f32 %v1190, %v1205
  %v1208 = vsub.f32 %v1192, %v1206
  %1210 = vset.pattern.permute.xlu0 0
  %1211 = vperm.xlu0 %1210, %v1190
  %v1212 = vpop.permute.xlu0 %1211
  %1215 = vset.pattern.permute.xlu0 0
  %1216 = vperm.xlu0 %1215, %v1192
  %v1217 = vpop.permute.xlu0 %1216
  %v1219 = vadd.f32 %v1212, %v1207
  %v1220 = vadd.f32 %v1217, %v1208
  %1221 = vst [vmem:[%s5] sm:$0xff] %v1219
  %1222 = vst [vmem:[%s5 + $0x8] sm:$0xff] %v1220
  // Predicated region
  $region22: #{dueling_dqn_forward.7} parent=0 // pred_check
    _
  $region23: #{dueling_dqn_forward.7} parent=0 // pred_check_branch
    %1224 = sbr.rel (0) target = $region25
  $region24: #{dueling_dqn_forward.7} parent=0 // pred_region
    _
  $region25: #{dueling_dqn_forward.7} parent=0 // pred_fallthru
    _
  // Predicated region
  $region26: #{dueling_dqn_forward.7} parent=0 // pred_check
    _
  $region27: #{dueling_dqn_forward.7} parent=0 // pred_check_branch
    %1226 = sbr.rel (0) target = $region29
  $region28: #{dueling_dqn_forward.7} parent=0 // pred_region
    _
  $region29: #{dueling_dqn_forward.7} parent=0 // pred_fallthru
    _

</llo_original>
